<compile_context>
chip_gen: v7x
topology: tpu7x:2x2x1
jax: 0.10.0
libtpu: 0.0.40
codegen_flags: <defaults>
</compile_context>

<pallas_src>
import functools

import numpy as np
import jax
import jax.numpy as jnp
from jax import lax
from jax.experimental import pallas as pl
from jax.experimental.pallas import tpu as pltpu

N_CHANNELS = 1
IMG_H = 16
IMG_W = 16
N_LATENT = 64            # latent_dims in the PyTorch script
BN_EPS = 1e-5

_VMEM = pl.BlockSpec(memory_space=pltpu.MemorySpace.VMEM)


# ----------------------------- Pallas kernels ------------------------------

def _bn_rows(x, gamma, beta, eps=BN_EPS):
    """BatchNorm (training mode, biased var) over the rows of a [rows, C] slab."""
    m = x.shape[0]
    mean = jnp.sum(x, axis=0, keepdims=True) * (1.0 / m)
    xc = x - mean
    var = jnp.sum(xc * xc, axis=0, keepdims=True) * (1.0 / m)
    return xc * lax.rsqrt(var + eps) * gamma + beta


def _encoder_trunk_kernel(p1_ref, w1_ref, b1_ref, g2_ref, be2_ref,
                          sel_ref, w2_ref, b2_ref, g3_ref, be3_ref, a2_ref):
    # conv1 (im2col matmul) + bias + BatchNorm2 + ReLU -- all VMEM resident.
    h1 = jnp.dot(p1_ref[...], w1_ref[...], preferred_element_type=jnp.float32)
    h1 = _bn_rows(h1 + b1_ref[...], g2_ref[...], be2_ref[...])
    a1 = jnp.maximum(h1, 0.0).astype(jnp.bfloat16)            # (N*8*8, 32)

    # conv2: the im2col gather is expressed as per-tap constant 0/1 selection
    # matmuls (zero rows encode the spatial zero-padding), so the gather and
    # the conv stay fused in one kernel with no HBM patch buffer.
    acc = jnp.zeros((sel_ref.shape[1], w2_ref.shape[2]), jnp.float32)
    for t in range(sel_ref.shape[0]):                         # static unroll (16 taps)
        g = jnp.dot(sel_ref[t], a1, preferred_element_type=jnp.float32)
        acc = acc + jnp.dot(g.astype(jnp.bfloat16), w2_ref[t],
                            preferred_element_type=jnp.float32)
    h2 = _bn_rows(acc + b2_ref[...], g3_ref[...], be3_ref[...])
    a2_ref[...] = jnp.maximum(h2, 0.0).astype(a2_ref.dtype)    # (N*4*4, 64)


def _latent_head_kernel(feat_ref, wmv_ref, bmv_ref, eps_ref, wzd_ref, bzd_ref,
                        ml_ref, dev_ref, *, n_latent):
    # [z_mean | z_var] as ONE lane-dense (feat, 2*n_latent = 128) matmul,
    # reparameterisation, and the z_develop linear, fused in one call.
    ml = jnp.dot(feat_ref[...], wmv_ref[...],
                 preferred_element_type=jnp.float32) + bmv_ref[...]
    mean = ml[:, :n_latent]
    logvar = ml[:, n_latent:]
    z = mean + eps_ref[...] * jnp.exp(0.5 * logvar)            # exp -> EUP
    dev = jnp.dot(z.astype(jnp.bfloat16), wzd_ref[...],
                  preferred_element_type=jnp.float32) + bzd_ref[...]
    ml_ref[...] = ml
    dev_ref[...] = dev.astype(dev_ref.dtype)


def _decoder_trunk_kernel(pd_ref, wd1_ref, bd1_ref, g4_ref, be4_ref, wd2_ref,
                          cols_ref):
    # upconv1 (as conv on the zero-dilated input) + BN4 + ReLU, then the
    # upconv2 direct column matmul (Ci -> Co*kh*kw); overlap-add in XLA glue.
    h = jnp.dot(pd_ref[...], wd1_ref[...],
                preferred_element_type=jnp.float32) + bd1_ref[...]
    a = jnp.maximum(_bn_rows(h, g4_ref[...], be4_ref[...]), 0.0)
    cols_ref[...] = jnp.dot(a.astype(jnp.bfloat16), wd2_ref[...],
                            preferred_element_type=jnp.float32)


def encoder_trunk(patches1, w1, b1, g2, be2, sel, w2t, b2, g3, be3):
    rows_out, co = sel.shape[1], w2t.shape[2]
    return pl.pallas_call(
        _encoder_trunk_kernel,
        out_shape=jax.ShapeDtypeStruct((rows_out, co), jnp.bfloat16),
        in_specs=[_VMEM] * 10,
        out_specs=_VMEM,
    )(patches1, w1, b1, g2, be2, sel, w2t, b2, g3, be3)


def latent_head(feat, wmv, bmv, eps, wzd, bzd):
    n = feat.shape[0]
    return pl.pallas_call(
        functools.partial(_latent_head_kernel, n_latent=eps.shape[1]),
        out_shape=(jax.ShapeDtypeStruct((n, wmv.shape[1]), jnp.float32),
                   jax.ShapeDtypeStruct((n, wzd.shape[1]), jnp.bfloat16)),
        in_specs=[_VMEM] * 6,
        out_specs=(_VMEM, _VMEM),
    )(feat, wmv, bmv, eps, wzd, bzd)


def decoder_trunk(patches, wd1, bd1, g4, be4, wd2):
    return pl.pallas_call(
        _decoder_trunk_kernel,
        out_shape=jax.ShapeDtypeStruct((patches.shape[0], wd2.shape[1]),
                                       jnp.float32),
        in_specs=[_VMEM] * 6,
        out_specs=_VMEM,
    )(patches, wd1, bd1, g4, be4, wd2)


# ------------------------------- XLA glue -----------------------------------
# TODO(synk): the remaining spatial plumbing (im2col for conv1/up1, zero
# dilation, col2im overlap-add, CenterCrop) stays as cheap XLA ops on sub-MiB
# tensors; expressing it inside these grid-less kernels would need strided
# value slices / minor-dim reshapes that do not lower cleanly in Mosaic.

def _im2col_nhwc(x, kh, kw, stride, pad):
    if pad:
        x = jnp.pad(x, ((0, 0), (pad, pad), (pad, pad), (0, 0)))
    n, h, w, c = x.shape
    ho = (h - kh) // stride + 1
    wo = (w - kw) // stride + 1
    cols = []
    for i in range(kh):
        for j in range(kw):
            cols.append(x[:, i:i + (ho - 1) * stride + 1:stride,
                           j:j + (wo - 1) * stride + 1:stride, :])
    patches = jnp.stack(cols, axis=3)                      # (n, ho, wo, kh*kw, c)
    return patches.reshape(n * ho * wo, kh * kw * c), (n, ho, wo)


def _dilate2d(x, stride):
    if stride == 1:
        return x
    n, h, w, c = x.shape
    xd = jnp.zeros((n, (h - 1) * stride + 1, (w - 1) * stride + 1, c), x.dtype)
    return xd.at[:, ::stride, ::stride, :].set(x)


def _col2im_convT(cols, n, h_in, w_in, co, kh, kw, stride, pad):
    """Overlap-add for ConvTranspose2d from its (rows, co*kh*kw) column matmul."""
    h_out = (h_in - 1) * stride - 2 * pad + kh
    w_out = (w_in - 1) * stride - 2 * pad + kw
    hc = (h_in - 1) * stride + kh
    wc = (w_in - 1) * stride + kw
    c6 = cols.reshape(n, h_in, w_in, co, kh, kw)
    canvas = jnp.zeros((n, hc, wc, co), cols.dtype)
    for i in range(kh):
        for j in range(kw):
            canvas = canvas.at[:, i:i + (h_in - 1) * stride + 1:stride,
                                  j:j + (w_in - 1) * stride + 1:stride, :].add(
                                      c6[:, :, :, :, i, j])
    return canvas[:, pad:pad + h_out, pad:pad + w_out, :]


@functools.lru_cache(maxsize=None)
def _conv_selection_np(n, h_in, w_in, kh, kw, stride, pad):
    """Per-tap 0/1 row-selection matrices for the in-kernel im2col gather."""
    h_out = (h_in + 2 * pad - kh) // stride + 1
    w_out = (w_in + 2 * pad - kw) // stride + 1
    sel = np.zeros((kh * kw, n * h_out * w_out, n * h_in * w_in), np.float32)
    for b in range(n):
        for ho in range(h_out):
            for wo in range(w_out):
                r_out = (b * h_out + ho) * w_out + wo
                for i in range(kh):
                    for j in range(kw):
                        hi = ho * stride - pad + i
                        wi = wo * stride - pad + j
                        if 0 <= hi < h_in and 0 <= wi < w_in:
                            sel[i * kw + j, r_out, (b * h_in + hi) * w_in + wi] = 1.0
    return sel


def _conv_selection(n, h_in, w_in, kh, kw, stride, pad):
    return jnp.asarray(_conv_selection_np(n, h_in, w_in, kh, kw, stride, pad),
                       dtype=jnp.bfloat16)


# ------------------------------ parameters ----------------------------------

def init_params(key):
    z_dim = IMG_H // 4
    feat = 64 * z_dim * z_dim
    ks = jax.random.split(key, 8)

    def w(k, shape, scale=0.05):
        return (scale * jax.random.normal(k, shape)).astype(jnp.float32)

    # PyTorch-layout weights (what the reference module would hold) ...
    conv1_w = w(ks[0], (32, N_CHANNELS, 4, 4))     # Conv2d (out, in, kh, kw)
    conv2_w = w(ks[1], (64, 32, 4, 4))
    zm_w = w(ks[2], (N_LATENT, feat))              # Linear (out, in)
    zv_w = w(ks[3], (N_LATENT, feat))
    zd_w = w(ks[4], (feat, N_LATENT))
    up1_w = w(ks[5], (64, 32, 3, 3))               # ConvTranspose2d (in, out, kh, kw)
    up2_w = w(ks[6], (32, 1, 3, 3))

    # ... pre-transposed ONCE into the layouts the kernels consume
    # (no per-forward transposes); matmul operands stored in bf16.
    def conv_mat(w_oihw):                          # -> (kh*kw*ci, co), tap-major rows
        co, ci, kh, kw = w_oihw.shape
        return jnp.transpose(w_oihw, (2, 3, 1, 0)).reshape(kh * kw * ci, co)

    def convT_mat(w_iohw):                         # ConvTranspose as conv on dilated input
        ci, co, kh, kw = w_iohw.shape
        w_conv = jnp.transpose(jnp.flip(w_iohw, axis=(2, 3)), (1, 0, 2, 3))
        return jnp.transpose(w_conv, (2, 3, 1, 0)).reshape(kh * kw * ci, co)

    bf = lambda a: a.astype(jnp.bfloat16)
    zrow = lambda c: jnp.zeros((1, c), jnp.float32)
    orow = lambda c: jnp.ones((1, c), jnp.float32)

    return {
        "bc1_g": jnp.ones((N_CHANNELS,), jnp.float32),
        "bc1_b": jnp.zeros((N_CHANNELS,), jnp.float32),
        "w1": bf(conv_mat(conv1_w)),                        # (16, 32)
        "b1": zrow(32),
        "g2": orow(32), "be2": zrow(32),
        "w2t": bf(conv_mat(conv2_w).reshape(16, 32, 64)),   # per-tap (taps, ci, co)
        "b2": zrow(64),
        "g3": orow(64), "be3": zrow(64),
        "wmv": bf(jnp.concatenate([zm_w, zv_w], axis=0).T),  # (feat, 128), lane-dense
        "bmv": zrow(2 * N_LATENT),
        "wzd": bf(zd_w.T),                                  # (n_latent, feat)
        "bzd": zrow(feat),
        "wd1": bf(convT_mat(up1_w)),                        # (576, 32)
        "bd1": zrow(32),
        "g4": orow(32), "be4": zrow(32),
        "wd2": bf(up2_w[:, 0, :, :].reshape(32, 9)),        # direct convT cols (ci, kh*kw)
        "bd2": jnp.zeros((1,), jnp.float32),
    }


# ------------------------------ VAE forward ----------------------------------

def vae_forward(params, x_nchw, eps_uniform):
    n, c, h, w = x_nchw.shape
    z_dim = h // 4
    x = jnp.transpose(x_nchw, (0, 2, 3, 1)).astype(jnp.float32)    # NCHW -> NHWC

    # bc1: BatchNorm2d(c) on the raw input.  With c == 1 this is a scalar
    # affine over the whole batch; a dedicated pallas_call would waste 127/128
    # lanes, so it stays in plain jnp (perf review).
    mu = jnp.mean(x, axis=(0, 1, 2), keepdims=True)
    var = jnp.mean(jnp.square(x - mu), axis=(0, 1, 2), keepdims=True)
    x = (x - mu) * lax.rsqrt(var + BN_EPS) * params["bc1_g"] + params["bc1_b"]

    # ---- encoder trunk: conv1+BN2+ReLU+conv2+BN3+ReLU in ONE pallas_call ----
    patches1, (_, h1, w1) = _im2col_nhwc(x.astype(jnp.bfloat16), 4, 4, 2, 1)
    sel = _conv_selection(n, h1, w1, 4, 4, 2, 1)
    a2 = encoder_trunk(patches1, params["w1"], params["b1"],
                       params["g2"], params["be2"], sel, params["w2t"],
                       params["b2"], params["g3"], params["be3"])
    h2 = (h1 + 2 - 4) // 2 + 1
    w2 = (w1 + 2 - 4) // 2 + 1

    # TODO(synk): the reference `nn.Linear(64, self.z_dim ** 2, n_latent)` for
    # z_mean / z_var is not runnable as written (in_features=64 hits the width
    # axis and the later .view() size-mismatches); implemented the intended
    # flatten + Linear(64 * z_dim**2, n_latent).
    feat = jnp.transpose(a2.reshape(n, h2 * w2, 64), (0, 2, 1)).reshape(
        n, 64 * h2 * w2)                               # PyTorch (C,H,W) flatten order
    mlv, dev = latent_head(feat, params["wmv"], params["bmv"],
                           eps_uniform.astype(jnp.float32),
                           params["wzd"], params["bzd"])
    n_lat = eps_uniform.shape[1]
    mean, logvar = mlv[:, :n_lat], mlv[:, n_lat:]

    # ---- decoder trunk: upconv1+BN4+ReLU + upconv2 col-matmul in ONE call ----
    d = jnp.transpose(dev.reshape(n, 64, z_dim, z_dim), (0, 2, 3, 1))  # .view -> NHWC
    d = _dilate2d(d, 2)                      # ConvTranspose(s=2, p=0) == conv on dilated input
    patches_d, (_, hu, wu) = _im2col_nhwc(d, 3, 3, 1, 2)               # pad = k-1-p = 2
    cols2 = decoder_trunk(patches_d, params["wd1"], params["bd1"],
                          params["g4"], params["be4"], params["wd2"])

    # upconv2 as direct matmul + col2im overlap-add (fewer MXU FLOPs than the
    # zero-dilation form), then bias, sigmoid, CenterCrop((h, w)).
    out = _col2im_convT(cols2, n, hu, wu, 1, 3, 3, 2, 1)               # (n, 17, 17, 1)
    out = jax.nn.sigmoid(out + params["bd2"])
    hd, wd = out.shape[1], out.shape[2]
    top = int(round((hd - h) / 2.0))
    left = int(round((wd - w) / 2.0))
    out = out[:, top:top + h, left:left + w, :]
    return jnp.transpose(out, (0, 3, 1, 2)), mean, logvar


if __name__ == "__main__":
    key = jax.random.PRNGKey(0)
    kp, kx, ke = jax.random.split(key, 3)
    params = init_params(kp)
    x = jax.random.normal(kx, (2, N_CHANNELS, IMG_H, IMG_W), jnp.float32)
    # torch.rand_like -> uniform [0, 1) reparameterisation noise (as in the reference)
    eps = jax.random.uniform(ke, (2, N_LATENT), jnp.float32)

    fwd = jax.jit(vae_forward)
    recon, mean, logvar = fwd(params, x, eps)
    jax.block_until_ready((recon, mean, logvar))

    assert recon.shape == (2, N_CHANNELS, IMG_H, IMG_W)
    assert mean.shape == (2, N_LATENT) and logvar.shape == (2, N_LATENT)
    assert bool(jnp.all(jnp.isfinite(recon)))
    print("KERNEL_OK")
</pallas_src>

<mosaic_0001>
module attributes {stable_mosaic.version = 11 : i64} {
  func.func @_encoder_trunk_kernel(%arg0: memref<128x16xbf16, #tpu.memory_space<vmem>>, %arg1: memref<16x32xbf16, #tpu.memory_space<vmem>>, %arg2: memref<1x32xf32, #tpu.memory_space<vmem>>, %arg3: memref<1x32xf32, #tpu.memory_space<vmem>>, %arg4: memref<1x32xf32, #tpu.memory_space<vmem>>, %arg5: memref<16x32x128xbf16, #tpu.memory_space<vmem>>, %arg6: memref<16x32x64xbf16, #tpu.memory_space<vmem>>, %arg7: memref<1x64xf32, #tpu.memory_space<vmem>>, %arg8: memref<1x64xf32, #tpu.memory_space<vmem>>, %arg9: memref<1x64xf32, #tpu.memory_space<vmem>>, %arg10: memref<32x64xbf16, #tpu.memory_space<vmem>>) attributes {dimension_semantics = [], scalar_prefetch = 0 : i64, scratch_operands = 0 : i64, tpu.core_type = #tpu.core_type<tc>} {
    %c0 = arith.constant 0 : index
    %c0_0 = arith.constant 0 : index
    %0 = vector.load %arg0[%c0, %c0_0] : memref<128x16xbf16, #tpu.memory_space<vmem>>, vector<128x16xbf16>
    %c0_1 = arith.constant 0 : index
    %c0_2 = arith.constant 0 : index
    %1 = vector.load %arg1[%c0_1, %c0_2] : memref<16x32xbf16, #tpu.memory_space<vmem>>, vector<16x32xbf16>
    %cst = arith.constant dense<0.000000e+00> : vector<128x32xf32>
    %2 = tpu.matmul %0, %1, %cst {dimension_numbers = #tpu.dot_dimension_numbers<[1], [0], [0], [1], [0, 0, 1, 1], [], []>} : vector<128x16xbf16>, vector<16x32xbf16>, vector<128x32xf32> -> vector<128x32xf32>
    %c0_3 = arith.constant 0 : index
    %c0_4 = arith.constant 0 : index
    %3 = vector.load %arg2[%c0_3, %c0_4] : memref<1x32xf32, #tpu.memory_space<vmem>>, vector<1x32xf32>
    %4 = vector.broadcast %3 : vector<1x32xf32> to vector<128x32xf32>
    %5 = arith.addf %2, %4 : vector<128x32xf32>
    %c0_5 = arith.constant 0 : index
    %c0_6 = arith.constant 0 : index
    %6 = vector.load %arg3[%c0_5, %c0_6] : memref<1x32xf32, #tpu.memory_space<vmem>>, vector<1x32xf32>
    %c0_7 = arith.constant 0 : index
    %c0_8 = arith.constant 0 : index
    %7 = vector.load %arg4[%c0_7, %c0_8] : memref<1x32xf32, #tpu.memory_space<vmem>>, vector<1x32xf32>
    %cst_9 = arith.constant dense<0.000000e+00> : vector<32xf32>
    %8 = vector.multi_reduction <add>, %5, %cst_9 [0] : vector<128x32xf32> to vector<32xf32>
    %9 = vector.shape_cast %8 : vector<32xf32> to vector<1x32xf32>
    %cst_10 = arith.constant 7.812500e-03 : f32
    %10 = vector.broadcast %cst_10 : f32 to vector<1x32xf32>
    %11 = arith.mulf %9, %10 : vector<1x32xf32>
    %12 = vector.broadcast %11 : vector<1x32xf32> to vector<128x32xf32>
    %13 = arith.subf %5, %12 : vector<128x32xf32>
    %14 = arith.mulf %13, %13 : vector<128x32xf32>
    %cst_11 = arith.constant dense<0.000000e+00> : vector<32xf32>
    %15 = vector.multi_reduction <add>, %14, %cst_11 [0] : vector<128x32xf32> to vector<32xf32>
    %16 = vector.shape_cast %15 : vector<32xf32> to vector<1x32xf32>
    %cst_12 = arith.constant 7.812500e-03 : f32
    %17 = vector.broadcast %cst_12 : f32 to vector<1x32xf32>
    %18 = arith.mulf %16, %17 : vector<1x32xf32>
    %cst_13 = arith.constant 9.99999974E-6 : f32
    %19 = vector.broadcast %cst_13 : f32 to vector<1x32xf32>
    %20 = arith.addf %18, %19 : vector<1x32xf32>
    %21 = math.rsqrt %20 : vector<1x32xf32>
    %22 = vector.broadcast %21 : vector<1x32xf32> to vector<128x32xf32>
    %23 = arith.mulf %13, %22 : vector<128x32xf32>
    %24 = vector.broadcast %6 : vector<1x32xf32> to vector<128x32xf32>
    %25 = arith.mulf %23, %24 : vector<128x32xf32>
    %26 = vector.broadcast %7 : vector<1x32xf32> to vector<128x32xf32>
    %27 = arith.addf %25, %26 : vector<128x32xf32>
    %cst_14 = arith.constant 0.000000e+00 : f32
    %28 = vector.broadcast %cst_14 : f32 to vector<128x32xf32>
    %29 = arith.maximumf %27, %28 : vector<128x32xf32>
    %30 = arith.truncf %29 : vector<128x32xf32> to vector<128x32xbf16>
    %cst_15 = arith.constant 0.000000e+00 : f32
    %31 = vector.broadcast %cst_15 : f32 to vector<32x64xf32>
    %c0_16 = arith.constant 0 : index
    %c0_17 = arith.constant 0 : index
    %c0_18 = arith.constant 0 : index
    %32 = vector.load %arg5[%c0_16, %c0_17, %c0_18] : memref<16x32x128xbf16, #tpu.memory_space<vmem>>, vector<1x32x128xbf16>
    %33 = vector.shape_cast %32 : vector<1x32x128xbf16> to vector<32x128xbf16>
    %cst_19 = arith.constant dense<0.000000e+00> : vector<32x32xf32>
    %34 = tpu.matmul %33, %30, %cst_19 {dimension_numbers = #tpu.dot_dimension_numbers<[1], [0], [0], [1], [0, 0, 1, 1], [], []>} : vector<32x128xbf16>, vector<128x32xbf16>, vector<32x32xf32> -> vector<32x32xf32>
    %35 = arith.truncf %34 : vector<32x32xf32> to vector<32x32xbf16>
    %c0_20 = arith.constant 0 : index
    %c0_21 = arith.constant 0 : index
    %c0_22 = arith.constant 0 : index
    %36 = vector.load %arg6[%c0_20, %c0_21, %c0_22] : memref<16x32x64xbf16, #tpu.memory_space<vmem>>, vector<1x32x64xbf16>
    %37 = vector.shape_cast %36 : vector<1x32x64xbf16> to vector<32x64xbf16>
    %cst_23 = arith.constant dense<0.000000e+00> : vector<32x64xf32>
    %38 = tpu.matmul %35, %37, %cst_23 {dimension_numbers = #tpu.dot_dimension_numbers<[1], [0], [0], [1], [0, 0, 1, 1], [], []>} : vector<32x32xbf16>, vector<32x64xbf16>, vector<32x64xf32> -> vector<32x64xf32>
    %39 = arith.addf %31, %38 : vector<32x64xf32>
    %c1 = arith.constant 1 : index
    %c0_24 = arith.constant 0 : index
    %c0_25 = arith.constant 0 : index
    %40 = vector.load %arg5[%c1, %c0_24, %c0_25] : memref<16x32x128xbf16, #tpu.memory_space<vmem>>, vector<1x32x128xbf16>
    %41 = vector.shape_cast %40 : vector<1x32x128xbf16> to vector<32x128xbf16>
    %cst_26 = arith.constant dense<0.000000e+00> : vector<32x32xf32>
    %42 = tpu.matmul %41, %30, %cst_26 {dimension_numbers = #tpu.dot_dimension_numbers<[1], [0], [0], [1], [0, 0, 1, 1], [], []>} : vector<32x128xbf16>, vector<128x32xbf16>, vector<32x32xf32> -> vector<32x32xf32>
    %43 = arith.truncf %42 : vector<32x32xf32> to vector<32x32xbf16>
    %c1_27 = arith.constant 1 : index
    %c0_28 = arith.constant 0 : index
    %c0_29 = arith.constant 0 : index
    %44 = vector.load %arg6[%c1_27, %c0_28, %c0_29] : memref<16x32x64xbf16, #tpu.memory_space<vmem>>, vector<1x32x64xbf16>
    %45 = vector.shape_cast %44 : vector<1x32x64xbf16> to vector<32x64xbf16>
    %cst_30 = arith.constant dense<0.000000e+00> : vector<32x64xf32>
    %46 = tpu.matmul %43, %45, %cst_30 {dimension_numbers = #tpu.dot_dimension_numbers<[1], [0], [0], [1], [0, 0, 1, 1], [], []>} : vector<32x32xbf16>, vector<32x64xbf16>, vector<32x64xf32> -> vector<32x64xf32>
    %47 = arith.addf %39, %46 : vector<32x64xf32>
    %c2 = arith.constant 2 : index
    %c0_31 = arith.constant 0 : index
    %c0_32 = arith.constant 0 : index
    %48 = vector.load %arg5[%c2, %c0_31, %c0_32] : memref<16x32x128xbf16, #tpu.memory_space<vmem>>, vector<1x32x128xbf16>
    %49 = vector.shape_cast %48 : vector<1x32x128xbf16> to vector<32x128xbf16>
    %cst_33 = arith.constant dense<0.000000e+00> : vector<32x32xf32>
    %50 = tpu.matmul %49, %30, %cst_33 {dimension_numbers = #tpu.dot_dimension_numbers<[1], [0], [0], [1], [0, 0, 1, 1], [], []>} : vector<32x128xbf16>, vector<128x32xbf16>, vector<32x32xf32> -> vector<32x32xf32>
    %51 = arith.truncf %50 : vector<32x32xf32> to vector<32x32xbf16>
    %c2_34 = arith.constant 2 : index
    %c0_35 = arith.constant 0 : index
    %c0_36 = arith.constant 0 : index
    %52 = vector.load %arg6[%c2_34, %c0_35, %c0_36] : memref<16x32x64xbf16, #tpu.memory_space<vmem>>, vector<1x32x64xbf16>
    %53 = vector.shape_cast %52 : vector<1x32x64xbf16> to vector<32x64xbf16>
    %cst_37 = arith.constant dense<0.000000e+00> : vector<32x64xf32>
    %54 = tpu.matmul %51, %53, %cst_37 {dimension_numbers = #tpu.dot_dimension_numbers<[1], [0], [0], [1], [0, 0, 1, 1], [], []>} : vector<32x32xbf16>, vector<32x64xbf16>, vector<32x64xf32> -> vector<32x64xf32>
    %55 = arith.addf %47, %54 : vector<32x64xf32>
    %c3 = arith.constant 3 : index
    %c0_38 = arith.constant 0 : index
    %c0_39 = arith.constant 0 : index
    %56 = vector.load %arg5[%c3, %c0_38, %c0_39] : memref<16x32x128xbf16, #tpu.memory_space<vmem>>, vector<1x32x128xbf16>
    %57 = vector.shape_cast %56 : vector<1x32x128xbf16> to vector<32x128xbf16>
    %cst_40 = arith.constant dense<0.000000e+00> : vector<32x32xf32>
    %58 = tpu.matmul %57, %30, %cst_40 {dimension_numbers = #tpu.dot_dimension_numbers<[1], [0], [0], [1], [0, 0, 1, 1], [], []>} : vector<32x128xbf16>, vector<128x32xbf16>, vector<32x32xf32> -> vector<32x32xf32>
    %59 = arith.truncf %58 : vector<32x32xf32> to vector<32x32xbf16>
    %c3_41 = arith.constant 3 : index
    %c0_42 = arith.constant 0 : index
    %c0_43 = arith.constant 0 : index
    %60 = vector.load %arg6[%c3_41, %c0_42, %c0_43] : memref<16x32x64xbf16, #tpu.memory_space<vmem>>, vector<1x32x64xbf16>
    %61 = vector.shape_cast %60 : vector<1x32x64xbf16> to vector<32x64xbf16>
    %cst_44 = arith.constant dense<0.000000e+00> : vector<32x64xf32>
    %62 = tpu.matmul %59, %61, %cst_44 {dimension_numbers = #tpu.dot_dimension_numbers<[1], [0], [0], [1], [0, 0, 1, 1], [], []>} : vector<32x32xbf16>, vector<32x64xbf16>, vector<32x64xf32> -> vector<32x64xf32>
    %63 = arith.addf %55, %62 : vector<32x64xf32>
    %c4 = arith.constant 4 : index
    %c0_45 = arith.constant 0 : index
    %c0_46 = arith.constant 0 : index
    %64 = vector.load %arg5[%c4, %c0_45, %c0_46] : memref<16x32x128xbf16, #tpu.memory_space<vmem>>, vector<1x32x128xbf16>
    %65 = vector.shape_cast %64 : vector<1x32x128xbf16> to vector<32x128xbf16>
    %cst_47 = arith.constant dense<0.000000e+00> : vector<32x32xf32>
    %66 = tpu.matmul %65, %30, %cst_47 {dimension_numbers = #tpu.dot_dimension_numbers<[1], [0], [0], [1], [0, 0, 1, 1], [], []>} : vector<32x128xbf16>, vector<128x32xbf16>, vector<32x32xf32> -> vector<32x32xf32>
    %67 = arith.truncf %66 : vector<32x32xf32> to vector<32x32xbf16>
    %c4_48 = arith.constant 4 : index
    %c0_49 = arith.constant 0 : index
    %c0_50 = arith.constant 0 : index
    %68 = vector.load %arg6[%c4_48, %c0_49, %c0_50] : memref<16x32x64xbf16, #tpu.memory_space<vmem>>, vector<1x32x64xbf16>
    %69 = vector.shape_cast %68 : vector<1x32x64xbf16> to vector<32x64xbf16>
    %cst_51 = arith.constant dense<0.000000e+00> : vector<32x64xf32>
    %70 = tpu.matmul %67, %69, %cst_51 {dimension_numbers = #tpu.dot_dimension_numbers<[1], [0], [0], [1], [0, 0, 1, 1], [], []>} : vector<32x32xbf16>, vector<32x64xbf16>, vector<32x64xf32> -> vector<32x64xf32>
    %71 = arith.addf %63, %70 : vector<32x64xf32>
    %c5 = arith.constant 5 : index
    %c0_52 = arith.constant 0 : index
    %c0_53 = arith.constant 0 : index
    %72 = vector.load %arg5[%c5, %c0_52, %c0_53] : memref<16x32x128xbf16, #tpu.memory_space<vmem>>, vector<1x32x128xbf16>
    %73 = vector.shape_cast %72 : vector<1x32x128xbf16> to vector<32x128xbf16>
    %cst_54 = arith.constant dense<0.000000e+00> : vector<32x32xf32>
    %74 = tpu.matmul %73, %30, %cst_54 {dimension_numbers = #tpu.dot_dimension_numbers<[1], [0], [0], [1], [0, 0, 1, 1], [], []>} : vector<32x128xbf16>, vector<128x32xbf16>, vector<32x32xf32> -> vector<32x32xf32>
    %75 = arith.truncf %74 : vector<32x32xf32> to vector<32x32xbf16>
    %c5_55 = arith.constant 5 : index
    %c0_56 = arith.constant 0 : index
    %c0_57 = arith.constant 0 : index
    %76 = vector.load %arg6[%c5_55, %c0_56, %c0_57] : memref<16x32x64xbf16, #tpu.memory_space<vmem>>, vector<1x32x64xbf16>
    %77 = vector.shape_cast %76 : vector<1x32x64xbf16> to vector<32x64xbf16>
    %cst_58 = arith.constant dense<0.000000e+00> : vector<32x64xf32>
    %78 = tpu.matmul %75, %77, %cst_58 {dimension_numbers = #tpu.dot_dimension_numbers<[1], [0], [0], [1], [0, 0, 1, 1], [], []>} : vector<32x32xbf16>, vector<32x64xbf16>, vector<32x64xf32> -> vector<32x64xf32>
    %79 = arith.addf %71, %78 : vector<32x64xf32>
    %c6 = arith.constant 6 : index
    %c0_59 = arith.constant 0 : index
    %c0_60 = arith.constant 0 : index
    %80 = vector.load %arg5[%c6, %c0_59, %c0_60] : memref<16x32x128xbf16, #tpu.memory_space<vmem>>, vector<1x32x128xbf16>
    %81 = vector.shape_cast %80 : vector<1x32x128xbf16> to vector<32x128xbf16>
    %cst_61 = arith.constant dense<0.000000e+00> : vector<32x32xf32>
    %82 = tpu.matmul %81, %30, %cst_61 {dimension_numbers = #tpu.dot_dimension_numbers<[1], [0], [0], [1], [0, 0, 1, 1], [], []>} : vector<32x128xbf16>, vector<128x32xbf16>, vector<32x32xf32> -> vector<32x32xf32>
    %83 = arith.truncf %82 : vector<32x32xf32> to vector<32x32xbf16>
    %c6_62 = arith.constant 6 : index
    %c0_63 = arith.constant 0 : index
    %c0_64 = arith.constant 0 : index
    %84 = vector.load %arg6[%c6_62, %c0_63, %c0_64] : memref<16x32x64xbf16, #tpu.memory_space<vmem>>, vector<1x32x64xbf16>
    %85 = vector.shape_cast %84 : vector<1x32x64xbf16> to vector<32x64xbf16>
    %cst_65 = arith.constant dense<0.000000e+00> : vector<32x64xf32>
    %86 = tpu.matmul %83, %85, %cst_65 {dimension_numbers = #tpu.dot_dimension_numbers<[1], [0], [0], [1], [0, 0, 1, 1], [], []>} : vector<32x32xbf16>, vector<32x64xbf16>, vector<32x64xf32> -> vector<32x64xf32>
    %87 = arith.addf %79, %86 : vector<32x64xf32>
    %c7 = arith.constant 7 : index
    %c0_66 = arith.constant 0 : index
    %c0_67 = arith.constant 0 : index
    %88 = vector.load %arg5[%c7, %c0_66, %c0_67] : memref<16x32x128xbf16, #tpu.memory_space<vmem>>, vector<1x32x128xbf16>
    %89 = vector.shape_cast %88 : vector<1x32x128xbf16> to vector<32x128xbf16>
    %cst_68 = arith.constant dense<0.000000e+00> : vector<32x32xf32>
    %90 = tpu.matmul %89, %30, %cst_68 {dimension_numbers = #tpu.dot_dimension_numbers<[1], [0], [0], [1], [0, 0, 1, 1], [], []>} : vector<32x128xbf16>, vector<128x32xbf16>, vector<32x32xf32> -> vector<32x32xf32>
    %91 = arith.truncf %90 : vector<32x32xf32> to vector<32x32xbf16>
    %c7_69 = arith.constant 7 : index
    %c0_70 = arith.constant 0 : index
    %c0_71 = arith.constant 0 : index
    %92 = vector.load %arg6[%c7_69, %c0_70, %c0_71] : memref<16x32x64xbf16, #tpu.memory_space<vmem>>, vector<1x32x64xbf16>
    %93 = vector.shape_cast %92 : vector<1x32x64xbf16> to vector<32x64xbf16>
    %cst_72 = arith.constant dense<0.000000e+00> : vector<32x64xf32>
    %94 = tpu.matmul %91, %93, %cst_72 {dimension_numbers = #tpu.dot_dimension_numbers<[1], [0], [0], [1], [0, 0, 1, 1], [], []>} : vector<32x32xbf16>, vector<32x64xbf16>, vector<32x64xf32> -> vector<32x64xf32>
    %95 = arith.addf %87, %94 : vector<32x64xf32>
    %c8 = arith.constant 8 : index
    %c0_73 = arith.constant 0 : index
    %c0_74 = arith.constant 0 : index
    %96 = vector.load %arg5[%c8, %c0_73, %c0_74] : memref<16x32x128xbf16, #tpu.memory_space<vmem>>, vector<1x32x128xbf16>
    %97 = vector.shape_cast %96 : vector<1x32x128xbf16> to vector<32x128xbf16>
    %cst_75 = arith.constant dense<0.000000e+00> : vector<32x32xf32>
    %98 = tpu.matmul %97, %30, %cst_75 {dimension_numbers = #tpu.dot_dimension_numbers<[1], [0], [0], [1], [0, 0, 1, 1], [], []>} : vector<32x128xbf16>, vector<128x32xbf16>, vector<32x32xf32> -> vector<32x32xf32>
    %99 = arith.truncf %98 : vector<32x32xf32> to vector<32x32xbf16>
    %c8_76 = arith.constant 8 : index
    %c0_77 = arith.constant 0 : index
    %c0_78 = arith.constant 0 : index
    %100 = vector.load %arg6[%c8_76, %c0_77, %c0_78] : memref<16x32x64xbf16, #tpu.memory_space<vmem>>, vector<1x32x64xbf16>
    %101 = vector.shape_cast %100 : vector<1x32x64xbf16> to vector<32x64xbf16>
    %cst_79 = arith.constant dense<0.000000e+00> : vector<32x64xf32>
    %102 = tpu.matmul %99, %101, %cst_79 {dimension_numbers = #tpu.dot_dimension_numbers<[1], [0], [0], [1], [0, 0, 1, 1], [], []>} : vector<32x32xbf16>, vector<32x64xbf16>, vector<32x64xf32> -> vector<32x64xf32>
    %103 = arith.addf %95, %102 : vector<32x64xf32>
    %c9 = arith.constant 9 : index
    %c0_80 = arith.constant 0 : index
    %c0_81 = arith.constant 0 : index
    %104 = vector.load %arg5[%c9, %c0_80, %c0_81] : memref<16x32x128xbf16, #tpu.memory_space<vmem>>, vector<1x32x128xbf16>
    %105 = vector.shape_cast %104 : vector<1x32x128xbf16> to vector<32x128xbf16>
    %cst_82 = arith.constant dense<0.000000e+00> : vector<32x32xf32>
    %106 = tpu.matmul %105, %30, %cst_82 {dimension_numbers = #tpu.dot_dimension_numbers<[1], [0], [0], [1], [0, 0, 1, 1], [], []>} : vector<32x128xbf16>, vector<128x32xbf16>, vector<32x32xf32> -> vector<32x32xf32>
    %107 = arith.truncf %106 : vector<32x32xf32> to vector<32x32xbf16>
    %c9_83 = arith.constant 9 : index
    %c0_84 = arith.constant 0 : index
    %c0_85 = arith.constant 0 : index
    %108 = vector.load %arg6[%c9_83, %c0_84, %c0_85] : memref<16x32x64xbf16, #tpu.memory_space<vmem>>, vector<1x32x64xbf16>
    %109 = vector.shape_cast %108 : vector<1x32x64xbf16> to vector<32x64xbf16>
    %cst_86 = arith.constant dense<0.000000e+00> : vector<32x64xf32>
    %110 = tpu.matmul %107, %109, %cst_86 {dimension_numbers = #tpu.dot_dimension_numbers<[1], [0], [0], [1], [0, 0, 1, 1], [], []>} : vector<32x32xbf16>, vector<32x64xbf16>, vector<32x64xf32> -> vector<32x64xf32>
    %111 = arith.addf %103, %110 : vector<32x64xf32>
    %c10 = arith.constant 10 : index
    %c0_87 = arith.constant 0 : index
    %c0_88 = arith.constant 0 : index
    %112 = vector.load %arg5[%c10, %c0_87, %c0_88] : memref<16x32x128xbf16, #tpu.memory_space<vmem>>, vector<1x32x128xbf16>
    %113 = vector.shape_cast %112 : vector<1x32x128xbf16> to vector<32x128xbf16>
    %cst_89 = arith.constant dense<0.000000e+00> : vector<32x32xf32>
    %114 = tpu.matmul %113, %30, %cst_89 {dimension_numbers = #tpu.dot_dimension_numbers<[1], [0], [0], [1], [0, 0, 1, 1], [], []>} : vector<32x128xbf16>, vector<128x32xbf16>, vector<32x32xf32> -> vector<32x32xf32>
    %115 = arith.truncf %114 : vector<32x32xf32> to vector<32x32xbf16>
    %c10_90 = arith.constant 10 : index
    %c0_91 = arith.constant 0 : index
    %c0_92 = arith.constant 0 : index
    %116 = vector.load %arg6[%c10_90, %c0_91, %c0_92] : memref<16x32x64xbf16, #tpu.memory_space<vmem>>, vector<1x32x64xbf16>
    %117 = vector.shape_cast %116 : vector<1x32x64xbf16> to vector<32x64xbf16>
    %cst_93 = arith.constant dense<0.000000e+00> : vector<32x64xf32>
    %118 = tpu.matmul %115, %117, %cst_93 {dimension_numbers = #tpu.dot_dimension_numbers<[1], [0], [0], [1], [0, 0, 1, 1], [], []>} : vector<32x32xbf16>, vector<32x64xbf16>, vector<32x64xf32> -> vector<32x64xf32>
    %119 = arith.addf %111, %118 : vector<32x64xf32>
    %c11 = arith.constant 11 : index
    %c0_94 = arith.constant 0 : index
    %c0_95 = arith.constant 0 : index
    %120 = vector.load %arg5[%c11, %c0_94, %c0_95] : memref<16x32x128xbf16, #tpu.memory_space<vmem>>, vector<1x32x128xbf16>
    %121 = vector.shape_cast %120 : vector<1x32x128xbf16> to vector<32x128xbf16>
    %cst_96 = arith.constant dense<0.000000e+00> : vector<32x32xf32>
    %122 = tpu.matmul %121, %30, %cst_96 {dimension_numbers = #tpu.dot_dimension_numbers<[1], [0], [0], [1], [0, 0, 1, 1], [], []>} : vector<32x128xbf16>, vector<128x32xbf16>, vector<32x32xf32> -> vector<32x32xf32>
    %123 = arith.truncf %122 : vector<32x32xf32> to vector<32x32xbf16>
    %c11_97 = arith.constant 11 : index
    %c0_98 = arith.constant 0 : index
    %c0_99 = arith.constant 0 : index
    %124 = vector.load %arg6[%c11_97, %c0_98, %c0_99] : memref<16x32x64xbf16, #tpu.memory_space<vmem>>, vector<1x32x64xbf16>
    %125 = vector.shape_cast %124 : vector<1x32x64xbf16> to vector<32x64xbf16>
    %cst_100 = arith.constant dense<0.000000e+00> : vector<32x64xf32>
    %126 = tpu.matmul %123, %125, %cst_100 {dimension_numbers = #tpu.dot_dimension_numbers<[1], [0], [0], [1], [0, 0, 1, 1], [], []>} : vector<32x32xbf16>, vector<32x64xbf16>, vector<32x64xf32> -> vector<32x64xf32>
    %127 = arith.addf %119, %126 : vector<32x64xf32>
    %c12 = arith.constant 12 : index
    %c0_101 = arith.constant 0 : index
    %c0_102 = arith.constant 0 : index
    %128 = vector.load %arg5[%c12, %c0_101, %c0_102] : memref<16x32x128xbf16, #tpu.memory_space<vmem>>, vector<1x32x128xbf16>
    %129 = vector.shape_cast %128 : vector<1x32x128xbf16> to vector<32x128xbf16>
    %cst_103 = arith.constant dense<0.000000e+00> : vector<32x32xf32>
    %130 = tpu.matmul %129, %30, %cst_103 {dimension_numbers = #tpu.dot_dimension_numbers<[1], [0], [0], [1], [0, 0, 1, 1], [], []>} : vector<32x128xbf16>, vector<128x32xbf16>, vector<32x32xf32> -> vector<32x32xf32>
    %131 = arith.truncf %130 : vector<32x32xf32> to vector<32x32xbf16>
    %c12_104 = arith.constant 12 : index
    %c0_105 = arith.constant 0 : index
    %c0_106 = arith.constant 0 : index
    %132 = vector.load %arg6[%c12_104, %c0_105, %c0_106] : memref<16x32x64xbf16, #tpu.memory_space<vmem>>, vector<1x32x64xbf16>
    %133 = vector.shape_cast %132 : vector<1x32x64xbf16> to vector<32x64xbf16>
    %cst_107 = arith.constant dense<0.000000e+00> : vector<32x64xf32>
    %134 = tpu.matmul %131, %133, %cst_107 {dimension_numbers = #tpu.dot_dimension_numbers<[1], [0], [0], [1], [0, 0, 1, 1], [], []>} : vector<32x32xbf16>, vector<32x64xbf16>, vector<32x64xf32> -> vector<32x64xf32>
    %135 = arith.addf %127, %134 : vector<32x64xf32>
    %c13 = arith.constant 13 : index
    %c0_108 = arith.constant 0 : index
    %c0_109 = arith.constant 0 : index
    %136 = vector.load %arg5[%c13, %c0_108, %c0_109] : memref<16x32x128xbf16, #tpu.memory_space<vmem>>, vector<1x32x128xbf16>
    %137 = vector.shape_cast %136 : vector<1x32x128xbf16> to vector<32x128xbf16>
    %cst_110 = arith.constant dense<0.000000e+00> : vector<32x32xf32>
    %138 = tpu.matmul %137, %30, %cst_110 {dimension_numbers = #tpu.dot_dimension_numbers<[1], [0], [0], [1], [0, 0, 1, 1], [], []>} : vector<32x128xbf16>, vector<128x32xbf16>, vector<32x32xf32> -> vector<32x32xf32>
    %139 = arith.truncf %138 : vector<32x32xf32> to vector<32x32xbf16>
    %c13_111 = arith.constant 13 : index
    %c0_112 = arith.constant 0 : index
    %c0_113 = arith.constant 0 : index
    %140 = vector.load %arg6[%c13_111, %c0_112, %c0_113] : memref<16x32x64xbf16, #tpu.memory_space<vmem>>, vector<1x32x64xbf16>
    %141 = vector.shape_cast %140 : vector<1x32x64xbf16> to vector<32x64xbf16>
    %cst_114 = arith.constant dense<0.000000e+00> : vector<32x64xf32>
    %142 = tpu.matmul %139, %141, %cst_114 {dimension_numbers = #tpu.dot_dimension_numbers<[1], [0], [0], [1], [0, 0, 1, 1], [], []>} : vector<32x32xbf16>, vector<32x64xbf16>, vector<32x64xf32> -> vector<32x64xf32>
    %143 = arith.addf %135, %142 : vector<32x64xf32>
    %c14 = arith.constant 14 : index
    %c0_115 = arith.constant 0 : index
    %c0_116 = arith.constant 0 : index
    %144 = vector.load %arg5[%c14, %c0_115, %c0_116] : memref<16x32x128xbf16, #tpu.memory_space<vmem>>, vector<1x32x128xbf16>
    %145 = vector.shape_cast %144 : vector<1x32x128xbf16> to vector<32x128xbf16>
    %cst_117 = arith.constant dense<0.000000e+00> : vector<32x32xf32>
    %146 = tpu.matmul %145, %30, %cst_117 {dimension_numbers = #tpu.dot_dimension_numbers<[1], [0], [0], [1], [0, 0, 1, 1], [], []>} : vector<32x128xbf16>, vector<128x32xbf16>, vector<32x32xf32> -> vector<32x32xf32>
    %147 = arith.truncf %146 : vector<32x32xf32> to vector<32x32xbf16>
    %c14_118 = arith.constant 14 : index
    %c0_119 = arith.constant 0 : index
    %c0_120 = arith.constant 0 : index
    %148 = vector.load %arg6[%c14_118, %c0_119, %c0_120] : memref<16x32x64xbf16, #tpu.memory_space<vmem>>, vector<1x32x64xbf16>
    %149 = vector.shape_cast %148 : vector<1x32x64xbf16> to vector<32x64xbf16>
    %cst_121 = arith.constant dense<0.000000e+00> : vector<32x64xf32>
    %150 = tpu.matmul %147, %149, %cst_121 {dimension_numbers = #tpu.dot_dimension_numbers<[1], [0], [0], [1], [0, 0, 1, 1], [], []>} : vector<32x32xbf16>, vector<32x64xbf16>, vector<32x64xf32> -> vector<32x64xf32>
    %151 = arith.addf %143, %150 : vector<32x64xf32>
    %c15 = arith.constant 15 : index
    %c0_122 = arith.constant 0 : index
    %c0_123 = arith.constant 0 : index
    %152 = vector.load %arg5[%c15, %c0_122, %c0_123] : memref<16x32x128xbf16, #tpu.memory_space<vmem>>, vector<1x32x128xbf16>
    %153 = vector.shape_cast %152 : vector<1x32x128xbf16> to vector<32x128xbf16>
    %cst_124 = arith.constant dense<0.000000e+00> : vector<32x32xf32>
    %154 = tpu.matmul %153, %30, %cst_124 {dimension_numbers = #tpu.dot_dimension_numbers<[1], [0], [0], [1], [0, 0, 1, 1], [], []>} : vector<32x128xbf16>, vector<128x32xbf16>, vector<32x32xf32> -> vector<32x32xf32>
    %155 = arith.truncf %154 : vector<32x32xf32> to vector<32x32xbf16>
    %c15_125 = arith.constant 15 : index
    %c0_126 = arith.constant 0 : index
    %c0_127 = arith.constant 0 : index
    %156 = vector.load %arg6[%c15_125, %c0_126, %c0_127] : memref<16x32x64xbf16, #tpu.memory_space<vmem>>, vector<1x32x64xbf16>
    %157 = vector.shape_cast %156 : vector<1x32x64xbf16> to vector<32x64xbf16>
    %cst_128 = arith.constant dense<0.000000e+00> : vector<32x64xf32>
    %158 = tpu.matmul %155, %157, %cst_128 {dimension_numbers = #tpu.dot_dimension_numbers<[1], [0], [0], [1], [0, 0, 1, 1], [], []>} : vector<32x32xbf16>, vector<32x64xbf16>, vector<32x64xf32> -> vector<32x64xf32>
    %159 = arith.addf %151, %158 : vector<32x64xf32>
    %c0_129 = arith.constant 0 : index
    %c0_130 = arith.constant 0 : index
    %160 = vector.load %arg7[%c0_129, %c0_130] : memref<1x64xf32, #tpu.memory_space<vmem>>, vector<1x64xf32>
    %161 = vector.broadcast %160 : vector<1x64xf32> to vector<32x64xf32>
    %162 = arith.addf %159, %161 : vector<32x64xf32>
    %c0_131 = arith.constant 0 : index
    %c0_132 = arith.constant 0 : index
    %163 = vector.load %arg8[%c0_131, %c0_132] : memref<1x64xf32, #tpu.memory_space<vmem>>, vector<1x64xf32>
    %c0_133 = arith.constant 0 : index
    %c0_134 = arith.constant 0 : index
    %164 = vector.load %arg9[%c0_133, %c0_134] : memref<1x64xf32, #tpu.memory_space<vmem>>, vector<1x64xf32>
    %cst_135 = arith.constant dense<0.000000e+00> : vector<64xf32>
    %165 = vector.multi_reduction <add>, %162, %cst_135 [0] : vector<32x64xf32> to vector<64xf32>
    %166 = vector.shape_cast %165 : vector<64xf32> to vector<1x64xf32>
    %cst_136 = arith.constant 3.125000e-02 : f32
    %167 = vector.broadcast %cst_136 : f32 to vector<1x64xf32>
    %168 = arith.mulf %166, %167 : vector<1x64xf32>
    %169 = vector.broadcast %168 : vector<1x64xf32> to vector<32x64xf32>
    %170 = arith.subf %162, %169 : vector<32x64xf32>
    %171 = arith.mulf %170, %170 : vector<32x64xf32>
    %cst_137 = arith.constant dense<0.000000e+00> : vector<64xf32>
    %172 = vector.multi_reduction <add>, %171, %cst_137 [0] : vector<32x64xf32> to vector<64xf32>
    %173 = vector.shape_cast %172 : vector<64xf32> to vector<1x64xf32>
    %cst_138 = arith.constant 3.125000e-02 : f32
    %174 = vector.broadcast %cst_138 : f32 to vector<1x64xf32>
    %175 = arith.mulf %173, %174 : vector<1x64xf32>
    %cst_139 = arith.constant 9.99999974E-6 : f32
    %176 = vector.broadcast %cst_139 : f32 to vector<1x64xf32>
    %177 = arith.addf %175, %176 : vector<1x64xf32>
    %178 = math.rsqrt %177 : vector<1x64xf32>
    %179 = vector.broadcast %178 : vector<1x64xf32> to vector<32x64xf32>
    %180 = arith.mulf %170, %179 : vector<32x64xf32>
    %181 = vector.broadcast %163 : vector<1x64xf32> to vector<32x64xf32>
    %182 = arith.mulf %180, %181 : vector<32x64xf32>
    %183 = vector.broadcast %164 : vector<1x64xf32> to vector<32x64xf32>
    %184 = arith.addf %182, %183 : vector<32x64xf32>
    %cst_140 = arith.constant 0.000000e+00 : f32
    %185 = vector.broadcast %cst_140 : f32 to vector<32x64xf32>
    %186 = arith.maximumf %184, %185 : vector<32x64xf32>
    %187 = arith.truncf %186 : vector<32x64xf32> to vector<32x64xbf16>
    %c0_141 = arith.constant 0 : index
    %c0_142 = arith.constant 0 : index
    %188 = vector.load %arg10[%c0_141, %c0_142] : memref<32x64xbf16, #tpu.memory_space<vmem>>, vector<32x64xbf16>
    tpu.vector_store %arg10[%c0_141, %c0_142], %187 {strides = array<i32>} : memref<32x64xbf16, #tpu.memory_space<vmem>>, vector<32x64xbf16>,
    return
  }
}

module attributes {stable_mosaic.version = 11 : i64} {
  func.func @_latent_head_kernel(%arg0: memref<2x1024xbf16, #tpu.memory_space<vmem>>, %arg1: memref<1024x128xbf16, #tpu.memory_space<vmem>>, %arg2: memref<1x128xf32, #tpu.memory_space<vmem>>, %arg3: memref<2x64xf32, #tpu.memory_space<vmem>>, %arg4: memref<64x1024xbf16, #tpu.memory_space<vmem>>, %arg5: memref<1x1024xf32, #tpu.memory_space<vmem>>, %arg6: memref<2x128xf32, #tpu.memory_space<vmem>>, %arg7: memref<2x1024xbf16, #tpu.memory_space<vmem>>) attributes {dimension_semantics = [], scalar_prefetch = 0 : i64, scratch_operands = 0 : i64, tpu.core_type = #tpu.core_type<tc>} {
    %c0 = arith.constant 0 : index
    %c0_0 = arith.constant 0 : index
    %0 = vector.load %arg0[%c0, %c0_0] : memref<2x1024xbf16, #tpu.memory_space<vmem>>, vector<2x1024xbf16>
    %c0_1 = arith.constant 0 : index
    %c0_2 = arith.constant 0 : index
    %1 = vector.load %arg1[%c0_1, %c0_2] : memref<1024x128xbf16, #tpu.memory_space<vmem>>, vector<1024x128xbf16>
    %cst = arith.constant dense<0.000000e+00> : vector<2x128xf32>
    %2 = tpu.matmul %0, %1, %cst {dimension_numbers = #tpu.dot_dimension_numbers<[1], [0], [0], [1], [0, 0, 1, 1], [], []>} : vector<2x1024xbf16>, vector<1024x128xbf16>, vector<2x128xf32> -> vector<2x128xf32>
    %c0_3 = arith.constant 0 : index
    %c0_4 = arith.constant 0 : index
    %3 = vector.load %arg2[%c0_3, %c0_4] : memref<1x128xf32, #tpu.memory_space<vmem>>, vector<1x128xf32>
    %4 = vector.broadcast %3 : vector<1x128xf32> to vector<2x128xf32>
    %5 = arith.addf %2, %4 : vector<2x128xf32>
    %6 = vector.extract_strided_slice %5 {offsets = [0, 0], sizes = [2, 64], strides = [1, 1]} : vector<2x128xf32> to vector<2x64xf32>
    %7 = vector.extract_strided_slice %5 {offsets = [0, 64], sizes = [2, 64], strides = [1, 1]} : vector<2x128xf32> to vector<2x64xf32>
    %c0_5 = arith.constant 0 : index
    %c0_6 = arith.constant 0 : index
    %8 = vector.load %arg3[%c0_5, %c0_6] : memref<2x64xf32, #tpu.memory_space<vmem>>, vector<2x64xf32>
    %cst_7 = arith.constant 5.000000e-01 : f32
    %9 = vector.broadcast %cst_7 : f32 to vector<2x64xf32>
    %10 = arith.mulf %9, %7 : vector<2x64xf32>
    %11 = math.exp %10 : vector<2x64xf32>
    %12 = arith.mulf %8, %11 : vector<2x64xf32>
    %13 = arith.addf %6, %12 : vector<2x64xf32>
    %14 = arith.truncf %13 : vector<2x64xf32> to vector<2x64xbf16>
    %c0_8 = arith.constant 0 : index
    %c0_9 = arith.constant 0 : index
    %15 = vector.load %arg4[%c0_8, %c0_9] : memref<64x1024xbf16, #tpu.memory_space<vmem>>, vector<64x1024xbf16>
    %cst_10 = arith.constant dense<0.000000e+00> : vector<2x1024xf32>
    %16 = tpu.matmul %14, %15, %cst_10 {dimension_numbers = #tpu.dot_dimension_numbers<[1], [0], [0], [1], [0, 0, 1, 1], [], []>} : vector<2x64xbf16>, vector<64x1024xbf16>, vector<2x1024xf32> -> vector<2x1024xf32>
    %c0_11 = arith.constant 0 : index
    %c0_12 = arith.constant 0 : index
    %17 = vector.load %arg5[%c0_11, %c0_12] : memref<1x1024xf32, #tpu.memory_space<vmem>>, vector<1x1024xf32>
    %18 = vector.broadcast %17 : vector<1x1024xf32> to vector<2x1024xf32>
    %19 = arith.addf %16, %18 : vector<2x1024xf32>
    %c0_13 = arith.constant 0 : index
    %c0_14 = arith.constant 0 : index
    %20 = vector.load %arg6[%c0_13, %c0_14] : memref<2x128xf32, #tpu.memory_space<vmem>>, vector<2x128xf32>
    tpu.vector_store %arg6[%c0_13, %c0_14], %5 {strides = array<i32>} : memref<2x128xf32, #tpu.memory_space<vmem>>, vector<2x128xf32>,
    %21 = arith.truncf %19 : vector<2x1024xf32> to vector<2x1024xbf16>
    %c0_15 = arith.constant 0 : index
    %c0_16 = arith.constant 0 : index
    %22 = vector.load %arg7[%c0_15, %c0_16] : memref<2x1024xbf16, #tpu.memory_space<vmem>>, vector<2x1024xbf16>
    tpu.vector_store %arg7[%c0_15, %c0_16], %21 {strides = array<i32>} : memref<2x1024xbf16, #tpu.memory_space<vmem>>, vector<2x1024xbf16>,
    return
  }
}

module attributes {stable_mosaic.version = 11 : i64} {
  func.func @_decoder_trunk_kernel(%arg0: memref<162x576xbf16, #tpu.memory_space<vmem>>, %arg1: memref<576x32xbf16, #tpu.memory_space<vmem>>, %arg2: memref<1x32xf32, #tpu.memory_space<vmem>>, %arg3: memref<1x32xf32, #tpu.memory_space<vmem>>, %arg4: memref<1x32xf32, #tpu.memory_space<vmem>>, %arg5: memref<32x9xbf16, #tpu.memory_space<vmem>>, %arg6: memref<162x9xf32, #tpu.memory_space<vmem>>) attributes {dimension_semantics = [], scalar_prefetch = 0 : i64, scratch_operands = 0 : i64, tpu.core_type = #tpu.core_type<tc>} {
    %c0 = arith.constant 0 : index
    %c0_0 = arith.constant 0 : index
    %0 = vector.load %arg0[%c0, %c0_0] : memref<162x576xbf16, #tpu.memory_space<vmem>>, vector<162x576xbf16>
    %c0_1 = arith.constant 0 : index
    %c0_2 = arith.constant 0 : index
    %1 = vector.load %arg1[%c0_1, %c0_2] : memref<576x32xbf16, #tpu.memory_space<vmem>>, vector<576x32xbf16>
    %cst = arith.constant dense<0.000000e+00> : vector<162x32xf32>
    %2 = tpu.matmul %0, %1, %cst {dimension_numbers = #tpu.dot_dimension_numbers<[1], [0], [0], [1], [0, 0, 1, 1], [], []>} : vector<162x576xbf16>, vector<576x32xbf16>, vector<162x32xf32> -> vector<162x32xf32>
    %c0_3 = arith.constant 0 : index
    %c0_4 = arith.constant 0 : index
    %3 = vector.load %arg2[%c0_3, %c0_4] : memref<1x32xf32, #tpu.memory_space<vmem>>, vector<1x32xf32>
    %4 = vector.broadcast %3 : vector<1x32xf32> to vector<162x32xf32>
    %5 = arith.addf %2, %4 : vector<162x32xf32>
    %c0_5 = arith.constant 0 : index
    %c0_6 = arith.constant 0 : index
    %6 = vector.load %arg3[%c0_5, %c0_6] : memref<1x32xf32, #tpu.memory_space<vmem>>, vector<1x32xf32>
    %c0_7 = arith.constant 0 : index
    %c0_8 = arith.constant 0 : index
    %7 = vector.load %arg4[%c0_7, %c0_8] : memref<1x32xf32, #tpu.memory_space<vmem>>, vector<1x32xf32>
    %cst_9 = arith.constant dense<0.000000e+00> : vector<32xf32>
    %8 = vector.multi_reduction <add>, %5, %cst_9 [0] : vector<162x32xf32> to vector<32xf32>
    %9 = vector.shape_cast %8 : vector<32xf32> to vector<1x32xf32>
    %cst_10 = arith.constant 0.00617283955 : f32
    %10 = vector.broadcast %cst_10 : f32 to vector<1x32xf32>
    %11 = arith.mulf %9, %10 : vector<1x32xf32>
    %12 = vector.broadcast %11 : vector<1x32xf32> to vector<162x32xf32>
    %13 = arith.subf %5, %12 : vector<162x32xf32>
    %14 = arith.mulf %13, %13 : vector<162x32xf32>
    %cst_11 = arith.constant dense<0.000000e+00> : vector<32xf32>
    %15 = vector.multi_reduction <add>, %14, %cst_11 [0] : vector<162x32xf32> to vector<32xf32>
    %16 = vector.shape_cast %15 : vector<32xf32> to vector<1x32xf32>
    %cst_12 = arith.constant 0.00617283955 : f32
    %17 = vector.broadcast %cst_12 : f32 to vector<1x32xf32>
    %18 = arith.mulf %16, %17 : vector<1x32xf32>
    %cst_13 = arith.constant 9.99999974E-6 : f32
    %19 = vector.broadcast %cst_13 : f32 to vector<1x32xf32>
    %20 = arith.addf %18, %19 : vector<1x32xf32>
    %21 = math.rsqrt %20 : vector<1x32xf32>
    %22 = vector.broadcast %21 : vector<1x32xf32> to vector<162x32xf32>
    %23 = arith.mulf %13, %22 : vector<162x32xf32>
    %24 = vector.broadcast %6 : vector<1x32xf32> to vector<162x32xf32>
    %25 = arith.mulf %23, %24 : vector<162x32xf32>
    %26 = vector.broadcast %7 : vector<1x32xf32> to vector<162x32xf32>
    %27 = arith.addf %25, %26 : vector<162x32xf32>
    %cst_14 = arith.constant 0.000000e+00 : f32
    %28 = vector.broadcast %cst_14 : f32 to vector<162x32xf32>
    %29 = arith.maximumf %27, %28 : vector<162x32xf32>
    %30 = arith.truncf %29 : vector<162x32xf32> to vector<162x32xbf16>
    %c0_15 = arith.constant 0 : index
    %c0_16 = arith.constant 0 : index
    %31 = vector.load %arg5[%c0_15, %c0_16] : memref<32x9xbf16, #tpu.memory_space<vmem>>, vector<32x9xbf16>
    %cst_17 = arith.constant dense<0.000000e+00> : vector<162x9xf32>
    %32 = tpu.matmul %30, %31, %cst_17 {dimension_numbers = #tpu.dot_dimension_numbers<[1], [0], [0], [1], [0, 0, 1, 1], [], []>} : vector<162x32xbf16>, vector<32x9xbf16>, vector<162x9xf32> -> vector<162x9xf32>
    %c0_18 = arith.constant 0 : index
    %c0_19 = arith.constant 0 : index
    %33 = vector.load %arg6[%c0_18, %c0_19] : memref<162x9xf32, #tpu.memory_space<vmem>>, vector<162x9xf32>
    tpu.vector_store %arg6[%c0_18, %c0_19], %32 {strides = array<i32>} : memref<162x9xf32, #tpu.memory_space<vmem>>, vector<162x9xf32>,
    return
  }
}

</mosaic_0001>

<llo_original>
// kernel: vae_forward.4
$region0: #{vae_forward.4}
  #allocation0 [shape = 'u32[]', space=smem, size = 0x4, offset = 0x4, fixed_abs, tag = 'smem constant byte address 0x4 - core index']
  #allocation1 [shape = 'u32[144,128]{1,0:T(1,128)}', space=vmem, size = 0x12000, scoped, tag = 'internal scratch']
  %s0 = inlined_call_operand.vmem [shape: bf16[2,1024], index: 0, kind: input, shape index: {}]
  %s1 = inlined_call_operand.vmem [shape: bf16[1024,128], index: 1, kind: input, shape index: {}]
  %s2 = inlined_call_operand.vmem [shape: f32[1,128], index: 2, kind: input, shape index: {}]
  %s3 = inlined_call_operand.vmem [shape: f32[2,64], index: 3, kind: input, shape index: {}]
  %s4 = inlined_call_operand.vmem [shape: bf16[64,1024], index: 4, kind: input, shape index: {}]
  %s5 = inlined_call_operand.vmem [shape: f32[1,1024], index: 5, kind: input, shape index: {}]
  %s6 = inlined_call_operand.vmem [shape: f32[2,128], index: 6, kind: output, shape index: {0}]
  %s7 = inlined_call_operand.vmem [shape: bf16[2,1024], index: 7, kind: output, shape index: {1}]
  %8 = xla_tuple %s6, %s7
  %s9 = sld [smem:[#allocation0]]
  $region42: #{vae_forward.4} parent=0
    _
  %s11 = ssub.s32 1, %s9
  %s12 = scalar_select 0, %s11, %s9
  // Predicated region
  $region2: #{vae_forward.4} parent=0 // pred_check
    _
  $region3: #{vae_forward.4} parent=0 // pred_check_branch
    %14 = sbr.rel (0) target = $region5
  $region4: #{vae_forward.4} parent=0 // pred_region
    _
  $region5: #{vae_forward.4} parent=0 // pred_fallthru
    _
  // Predicated region
  $region6: #{vae_forward.4} parent=0 // pred_check
    _
  $region7: #{vae_forward.4} parent=0 // pred_check_branch
    %16 = sbr.rel (0) target = $region9
  $region8: #{vae_forward.4} parent=0 // pred_region
    _
  $region9: #{vae_forward.4} parent=0 // pred_fallthru
    _
  // Predicated region
  $region10: #{vae_forward.4} parent=0 // pred_check
    _
  $region11: #{vae_forward.4} parent=0 // pred_check_branch
    %18 = sbr.rel (0) target = $region13
  $region12: #{vae_forward.4} parent=0 // pred_region
    _
  $region13: #{vae_forward.4} parent=0 // pred_fallthru
    _
  // Predicated region
  $region14: #{vae_forward.4} parent=0 // pred_check
    _
  $region15: #{vae_forward.4} parent=0 // pred_check_branch
    %20 = sbr.rel (0) target = $region17
  $region16: #{vae_forward.4} parent=0 // pred_region
    _
  $region17: #{vae_forward.4} parent=0 // pred_fallthru
    _
  // Predicated region
  $region18: #{vae_forward.4} parent=0 // pred_check
    _
  $region19: #{vae_forward.4} parent=0 // pred_check_branch
    %22 = sbr.rel (0) target = $region21
  $region20: #{vae_forward.4} parent=0 // pred_region
    _
  $region21: #{vae_forward.4} parent=0 // pred_fallthru
    _
  // Predicated region
  $region22: #{vae_forward.4} parent=0 // pred_check
    _
  $region23: #{vae_forward.4} parent=0 // pred_check_branch
    %24 = sbr.rel (0) target = $region25
  $region24: #{vae_forward.4} parent=0 // pred_region
    _
  $region25: #{vae_forward.4} parent=0 // pred_fallthru
    _
  %v26 = vld [vmem:[%s0] sm:$0xff]
  %v27 = vld [vmem:[%s1] sm:$0xf]
  %v28 = vld [vmem:[%s1 + $0x4] sm:$0xf]
  %v29 = vld [vmem:[%s1 + $0x8] sm:$0xf]
  %v30 = vld [vmem:[%s1 + $0xc] sm:$0xf]
  %v31 = vld [vmem:[%s1 + $0x10] sm:$0xf]
  %v32 = vld [vmem:[%s1 + $0x14] sm:$0xf]
  %v33 = vld [vmem:[%s1 + $0x18] sm:$0xf]
  %v34 = vld [vmem:[%s1 + $0x1c] sm:$0xf]
  %v35 = vld [vmem:[%s1 + $0x20] sm:$0xf]
  %v36 = vld [vmem:[%s1 + $0x24] sm:$0xf]
  %v37 = vld [vmem:[%s1 + $0x28] sm:$0xf]
  %v38 = vld [vmem:[%s1 + $0x2c] sm:$0xf]
  %v39 = vld [vmem:[%s1 + $0x30] sm:$0xf]
  %v40 = vld [vmem:[%s1 + $0x34] sm:$0xf]
  %v41 = vld [vmem:[%s1 + $0x38] sm:$0xf]
  %v42 = vld [vmem:[%s1 + $0x3c] sm:$0xf]
  %v43 = vld [vmem:[%s1 + $0x40] sm:$0xf]
  %v44 = vld [vmem:[%s1 + $0x44] sm:$0xf]
  %v45 = vld [vmem:[%s1 + $0x48] sm:$0xf]
  %v46 = vld [vmem:[%s1 + $0x4c] sm:$0xf]
  %v47 = vld [vmem:[%s1 + $0x50] sm:$0xf]
  %v48 = vld [vmem:[%s1 + $0x54] sm:$0xf]
  %v49 = vld [vmem:[%s1 + $0x58] sm:$0xf]
  %v50 = vld [vmem:[%s1 + $0x5c] sm:$0xf]
  %v51 = vld [vmem:[%s1 + $0x60] sm:$0xf]
  %v52 = vld [vmem:[%s1 + $0x64] sm:$0xf]
  %v53 = vld [vmem:[%s1 + $0x68] sm:$0xf]
  %v54 = vld [vmem:[%s1 + $0x6c] sm:$0xf]
  %v55 = vld [vmem:[%s1 + $0x70] sm:$0xf]
  %v56 = vld [vmem:[%s1 + $0x74] sm:$0xf]
  %v57 = vld [vmem:[%s1 + $0x78] sm:$0xf]
  %v58 = vld [vmem:[%s1 + $0x7c] sm:$0xf]
  %v59 = vld [vmem:[%s1 + $0x80] sm:$0xf]
  %v60 = vld [vmem:[%s1 + $0x84] sm:$0xf]
  %v61 = vld [vmem:[%s1 + $0x88] sm:$0xf]
  %v62 = vld [vmem:[%s1 + $0x8c] sm:$0xf]
  %v63 = vld [vmem:[%s1 + $0x90] sm:$0xf]
  %v64 = vld [vmem:[%s1 + $0x94] sm:$0xf]
  %v65 = vld [vmem:[%s1 + $0x98] sm:$0xf]
  %v66 = vld [vmem:[%s1 + $0x9c] sm:$0xf]
  %v67 = vld [vmem:[%s1 + $0xa0] sm:$0xf]
  %v68 = vld [vmem:[%s1 + $0xa4] sm:$0xf]
  %v69 = vld [vmem:[%s1 + $0xa8] sm:$0xf]
  %v70 = vld [vmem:[%s1 + $0xac] sm:$0xf]
  %v71 = vld [vmem:[%s1 + $0xb0] sm:$0xf]
  %v72 = vld [vmem:[%s1 + $0xb4] sm:$0xf]
  %v73 = vld [vmem:[%s1 + $0xb8] sm:$0xf]
  %v74 = vld [vmem:[%s1 + $0xbc] sm:$0xf]
  %v75 = vld [vmem:[%s1 + $0xc0] sm:$0xf]
  %v76 = vld [vmem:[%s1 + $0xc4] sm:$0xf]
  %v77 = vld [vmem:[%s1 + $0xc8] sm:$0xf]
  %v78 = vld [vmem:[%s1 + $0xcc] sm:$0xf]
  %v79 = vld [vmem:[%s1 + $0xd0] sm:$0xf]
  %v80 = vld [vmem:[%s1 + $0xd4] sm:$0xf]
  %v81 = vld [vmem:[%s1 + $0xd8] sm:$0xf]
  %v82 = vld [vmem:[%s1 + $0xdc] sm:$0xf]
  %v83 = vld [vmem:[%s1 + $0xe0] sm:$0xf]
  %v84 = vld [vmem:[%s1 + $0xe4] sm:$0xf]
  %v85 = vld [vmem:[%s1 + $0xe8] sm:$0xf]
  %v86 = vld [vmem:[%s1 + $0xec] sm:$0xf]
  %v87 = vld [vmem:[%s1 + $0xf0] sm:$0xf]
  %v88 = vld [vmem:[%s1 + $0xf4] sm:$0xf]
  %v89 = vld [vmem:[%s1 + $0xf8] sm:$0xf]
  %v90 = vld [vmem:[%s1 + $0xfc] sm:$0xf]
  %v91 = vld [vmem:[%s1 + $0x100] sm:$0xf]
  %v92 = vld [vmem:[%s1 + $0x104] sm:$0xf]
  %v93 = vld [vmem:[%s1 + $0x108] sm:$0xf]
  %v94 = vld [vmem:[%s1 + $0x10c] sm:$0xf]
  %v95 = vld [vmem:[%s1 + $0x110] sm:$0xf]
  %v96 = vld [vmem:[%s1 + $0x114] sm:$0xf]
  %v97 = vld [vmem:[%s1 + $0x118] sm:$0xf]
  %v98 = vld [vmem:[%s1 + $0x11c] sm:$0xf]
  %v99 = vld [vmem:[%s1 + $0x120] sm:$0xf]
  %v100 = vld [vmem:[%s1 + $0x124] sm:$0xf]
  %v101 = vld [vmem:[%s1 + $0x128] sm:$0xf]
  %v102 = vld [vmem:[%s1 + $0x12c] sm:$0xf]
  %v103 = vld [vmem:[%s1 + $0x130] sm:$0xf]
  %v104 = vld [vmem:[%s1 + $0x134] sm:$0xf]
  %v105 = vld [vmem:[%s1 + $0x138] sm:$0xf]
  %v106 = vld [vmem:[%s1 + $0x13c] sm:$0xf]
  %v107 = vld [vmem:[%s1 + $0x140] sm:$0xf]
  %v108 = vld [vmem:[%s1 + $0x144] sm:$0xf]
  %v109 = vld [vmem:[%s1 + $0x148] sm:$0xf]
  %v110 = vld [vmem:[%s1 + $0x14c] sm:$0xf]
  %v111 = vld [vmem:[%s1 + $0x150] sm:$0xf]
  %v112 = vld [vmem:[%s1 + $0x154] sm:$0xf]
  %v113 = vld [vmem:[%s1 + $0x158] sm:$0xf]
  %v114 = vld [vmem:[%s1 + $0x15c] sm:$0xf]
  %v115 = vld [vmem:[%s1 + $0x160] sm:$0xf]
  %v116 = vld [vmem:[%s1 + $0x164] sm:$0xf]
  %v117 = vld [vmem:[%s1 + $0x168] sm:$0xf]
  %v118 = vld [vmem:[%s1 + $0x16c] sm:$0xf]
  %v119 = vld [vmem:[%s1 + $0x170] sm:$0xf]
  %v120 = vld [vmem:[%s1 + $0x174] sm:$0xf]
  %v121 = vld [vmem:[%s1 + $0x178] sm:$0xf]
  %v122 = vld [vmem:[%s1 + $0x17c] sm:$0xf]
  %v123 = vld [vmem:[%s1 + $0x180] sm:$0xf]
  %v124 = vld [vmem:[%s1 + $0x184] sm:$0xf]
  %v125 = vld [vmem:[%s1 + $0x188] sm:$0xf]
  %v126 = vld [vmem:[%s1 + $0x18c] sm:$0xf]
  %v127 = vld [vmem:[%s1 + $0x190] sm:$0xf]
  %v128 = vld [vmem:[%s1 + $0x194] sm:$0xf]
  %v129 = vld [vmem:[%s1 + $0x198] sm:$0xf]
  %v130 = vld [vmem:[%s1 + $0x19c] sm:$0xf]
  %v131 = vld [vmem:[%s1 + $0x1a0] sm:$0xf]
  %v132 = vld [vmem:[%s1 + $0x1a4] sm:$0xf]
  %v133 = vld [vmem:[%s1 + $0x1a8] sm:$0xf]
  %v134 = vld [vmem:[%s1 + $0x1ac] sm:$0xf]
  %v135 = vld [vmem:[%s1 + $0x1b0] sm:$0xf]
  %v136 = vld [vmem:[%s1 + $0x1b4] sm:$0xf]
  %v137 = vld [vmem:[%s1 + $0x1b8] sm:$0xf]
  %v138 = vld [vmem:[%s1 + $0x1bc] sm:$0xf]
  %v139 = vld [vmem:[%s1 + $0x1c0] sm:$0xf]
  %v140 = vld [vmem:[%s1 + $0x1c4] sm:$0xf]
  %v141 = vld [vmem:[%s1 + $0x1c8] sm:$0xf]
  %v142 = vld [vmem:[%s1 + $0x1cc] sm:$0xf]
  %v143 = vld [vmem:[%s1 + $0x1d0] sm:$0xf]
  %v144 = vld [vmem:[%s1 + $0x1d4] sm:$0xf]
  %v145 = vld [vmem:[%s1 + $0x1d8] sm:$0xf]
  %v146 = vld [vmem:[%s1 + $0x1dc] sm:$0xf]
  %v147 = vld [vmem:[%s1 + $0x1e0] sm:$0xf]
  %v148 = vld [vmem:[%s1 + $0x1e4] sm:$0xf]
  %v149 = vld [vmem:[%s1 + $0x1e8] sm:$0xf]
  %v150 = vld [vmem:[%s1 + $0x1ec] sm:$0xf]
  %v151 = vld [vmem:[%s1 + $0x1f0] sm:$0xf]
  %v152 = vld [vmem:[%s1 + $0x1f4] sm:$0xf]
  %v153 = vld [vmem:[%s1 + $0x1f8] sm:$0xf]
  %v154 = vld [vmem:[%s1 + $0x1fc] sm:$0xf]
  %v155 = vld [vmem:[%s2] sm:$0x1]
  %v157 = vlaneseq
  %v158 = vshrl.u32 %v157, 7
  %v159 = vsub.s32 0, %v158
  %v160 = vrot.slane %v155, %v159
  %v163 = vcombine.high %v26, %v26
  %v165 = vunpack.c.l.s4 1966171168
  %v166 = vunpack.c.0.s8 %v165
  %v167 = vlaneseq
  %v168 = vshrl.u32 %v167, 7
  %v169 = vsub.s32 %v166, %v168
  %v170 = vrot.slane %v26, %v169
  %v172 = vunpack.c.l.s4 1966171168
  %v173 = vunpack.c.0.s8 %v172
  %v174 = vlaneseq
  %v175 = vshrl.u32 %v174, 7
  %v176 = vsub.s32 %v173, %v175
  %v177 = vrot.slane %v163, %v176
  %v178 = vcombine.high %v170, %v170
  %v179 = vcombine.high %v177, %v177
  %v181 = vunpack.c.l.s4 1966171168
  %v182 = vunpack.c.0.s8 %v181
  %v183 = vlaneseq
  %v184 = vshrl.u32 %v183, 7
  %v185 = vsub.s32 %v182, %v184
  %v186 = vrot.slane %v170, %v185
  %v188 = vunpack.c.l.s4 1966171168
  %v189 = vunpack.c.0.s8 %v188
  %v190 = vlaneseq
  %v191 = vshrl.u32 %v190, 7
  %v192 = vsub.s32 %v189, %v191
  %v193 = vrot.slane %v177, %v192
  %v195 = vunpack.c.l.s4 1966171168
  %v196 = vunpack.c.0.s8 %v195
  %v197 = vlaneseq
  %v198 = vshrl.u32 %v197, 7
  %v199 = vsub.s32 %v196, %v198
  %v200 = vrot.slane %v178, %v199
  %v202 = vunpack.c.l.s4 1966171168
  %v203 = vunpack.c.0.s8 %v202
  %v204 = vlaneseq
  %v205 = vshrl.u32 %v204, 7
  %v206 = vsub.s32 %v203, %v205
  %v207 = vrot.slane %v179, %v206
  %v208 = vcombine.high %v186, %v186
  %v209 = vcombine.high %v193, %v193
  %v210 = vcombine.high %v200, %v200
  %v211 = vcombine.high %v207, %v207
  %v348 = vunpack.c.l.b16 %v27
  %v349 = vunpack.c.l.b16 %v28
  %v350 = vunpack.c.l.b16 %v29
  %v351 = vunpack.c.l.b16 %v30
  %v352 = vunpack.c.l.b16 %v31
  %v353 = vunpack.c.l.b16 %v32
  %v354 = vunpack.c.l.b16 %v33
  %v355 = vunpack.c.l.b16 %v34
  %v356 = vunpack.c.l.b16 %v35
  %v357 = vunpack.c.l.b16 %v36
  %v358 = vunpack.c.l.b16 %v37
  %v359 = vunpack.c.l.b16 %v38
  %v360 = vunpack.c.l.b16 %v39
  %v361 = vunpack.c.l.b16 %v40
  %v362 = vunpack.c.l.b16 %v41
  %v363 = vunpack.c.l.b16 %v42
  %v364 = vunpack.c.l.b16 %v43
  %v365 = vunpack.c.l.b16 %v44
  %v366 = vunpack.c.l.b16 %v45
  %v367 = vunpack.c.l.b16 %v46
  %v368 = vunpack.c.l.b16 %v47
  %v369 = vunpack.c.l.b16 %v48
  %v370 = vunpack.c.l.b16 %v49
  %v371 = vunpack.c.l.b16 %v50
  %v372 = vunpack.c.l.b16 %v51
  %v373 = vunpack.c.l.b16 %v52
  %v374 = vunpack.c.l.b16 %v53
  %v375 = vunpack.c.l.b16 %v54
  %v376 = vunpack.c.l.b16 %v55
  %v377 = vunpack.c.l.b16 %v56
  %v378 = vunpack.c.l.b16 %v57
  %v379 = vunpack.c.l.b16 %v58
  %v380 = vunpack.c.l.b16 %v59
  %v381 = vunpack.c.l.b16 %v60
  %v382 = vunpack.c.l.b16 %v61
  %v383 = vunpack.c.l.b16 %v62
  %v384 = vunpack.c.l.b16 %v63
  %v385 = vunpack.c.l.b16 %v64
  %v386 = vunpack.c.l.b16 %v65
  %v387 = vunpack.c.l.b16 %v66
  %v388 = vunpack.c.l.b16 %v67
  %v389 = vunpack.c.l.b16 %v68
  %v390 = vunpack.c.l.b16 %v69
  %v391 = vunpack.c.l.b16 %v70
  %v392 = vunpack.c.l.b16 %v71
  %v393 = vunpack.c.l.b16 %v72
  %v394 = vunpack.c.l.b16 %v73
  %v395 = vunpack.c.l.b16 %v74
  %v396 = vunpack.c.l.b16 %v75
  %v397 = vunpack.c.l.b16 %v76
  %v398 = vunpack.c.l.b16 %v77
  %v399 = vunpack.c.l.b16 %v78
  %v400 = vunpack.c.l.b16 %v79
  %v401 = vunpack.c.l.b16 %v80
  %v402 = vunpack.c.l.b16 %v81
  %v403 = vunpack.c.l.b16 %v82
  %v404 = vunpack.c.l.b16 %v83
  %v405 = vunpack.c.l.b16 %v84
  %v406 = vunpack.c.l.b16 %v85
  %v407 = vunpack.c.l.b16 %v86
  %v408 = vunpack.c.l.b16 %v87
  %v409 = vunpack.c.l.b16 %v88
  %v410 = vunpack.c.l.b16 %v89
  %v411 = vunpack.c.l.b16 %v90
  %v412 = vunpack.c.l.b16 %v91
  %v413 = vunpack.c.l.b16 %v92
  %v414 = vunpack.c.l.b16 %v93
  %v415 = vunpack.c.l.b16 %v94
  %v416 = vunpack.c.l.b16 %v95
  %v417 = vunpack.c.l.b16 %v96
  %v418 = vunpack.c.l.b16 %v97
  %v419 = vunpack.c.l.b16 %v98
  %v420 = vunpack.c.l.b16 %v99
  %v421 = vunpack.c.l.b16 %v100
  %v422 = vunpack.c.l.b16 %v101
  %v423 = vunpack.c.l.b16 %v102
  %v424 = vunpack.c.l.b16 %v103
  %v425 = vunpack.c.l.b16 %v104
  %v426 = vunpack.c.l.b16 %v105
  %v427 = vunpack.c.l.b16 %v106
  %v428 = vunpack.c.l.b16 %v107
  %v429 = vunpack.c.l.b16 %v108
  %v430 = vunpack.c.l.b16 %v109
  %v431 = vunpack.c.l.b16 %v110
  %v432 = vunpack.c.l.b16 %v111
  %v433 = vunpack.c.l.b16 %v112
  %v434 = vunpack.c.l.b16 %v113
  %v435 = vunpack.c.l.b16 %v114
  %v436 = vunpack.c.l.b16 %v115
  %v437 = vunpack.c.l.b16 %v116
  %v438 = vunpack.c.l.b16 %v117
  %v439 = vunpack.c.l.b16 %v118
  %v440 = vunpack.c.l.b16 %v119
  %v441 = vunpack.c.l.b16 %v120
  %v442 = vunpack.c.l.b16 %v121
  %v443 = vunpack.c.l.b16 %v122
  %v444 = vunpack.c.l.b16 %v123
  %v445 = vunpack.c.l.b16 %v124
  %v446 = vunpack.c.l.b16 %v125
  %v447 = vunpack.c.l.b16 %v126
  %v448 = vunpack.c.l.b16 %v127
  %v449 = vunpack.c.l.b16 %v128
  %v450 = vunpack.c.l.b16 %v129
  %v451 = vunpack.c.l.b16 %v130
  %v452 = vunpack.c.l.b16 %v131
  %v453 = vunpack.c.l.b16 %v132
  %v454 = vunpack.c.l.b16 %v133
  %v455 = vunpack.c.l.b16 %v134
  %v456 = vunpack.c.l.b16 %v135
  %v457 = vunpack.c.l.b16 %v136
  %v458 = vunpack.c.l.b16 %v137
  %v459 = vunpack.c.l.b16 %v138
  %v460 = vunpack.c.l.b16 %v139
  %v461 = vunpack.c.l.b16 %v140
  %v462 = vunpack.c.l.b16 %v141
  %v463 = vunpack.c.l.b16 %v142
  %v464 = vunpack.c.l.b16 %v143
  %v465 = vunpack.c.l.b16 %v144
  %v466 = vunpack.c.l.b16 %v145
  %v467 = vunpack.c.l.b16 %v146
  %v468 = vunpack.c.l.b16 %v147
  %v469 = vunpack.c.l.b16 %v148
  %v470 = vunpack.c.l.b16 %v149
  %v471 = vunpack.c.l.b16 %v150
  %v472 = vunpack.c.l.b16 %v151
  %v473 = vunpack.c.l.b16 %v152
  %v474 = vunpack.c.l.b16 %v153
  %v475 = vunpack.c.l.b16 %v154
  %v476 = vpack.c.b16 %v349, %v348
  %v477 = vpack.c.b16 %v351, %v350
  %v478 = vpack.c.b16 %v353, %v352
  %v479 = vpack.c.b16 %v355, %v354
  %v480 = vpack.c.b16 %v357, %v356
  %v481 = vpack.c.b16 %v359, %v358
  %v482 = vpack.c.b16 %v361, %v360
  %v483 = vpack.c.b16 %v363, %v362
  %v484 = vpack.c.b16 %v365, %v364
  %v485 = vpack.c.b16 %v367, %v366
  %v486 = vpack.c.b16 %v369, %v368
  %v487 = vpack.c.b16 %v371, %v370
  %v488 = vpack.c.b16 %v373, %v372
  %v489 = vpack.c.b16 %v375, %v374
  %v490 = vpack.c.b16 %v377, %v376
  %v491 = vpack.c.b16 %v379, %v378
  %v492 = vpack.c.b16 %v381, %v380
  %v493 = vpack.c.b16 %v383, %v382
  %v494 = vpack.c.b16 %v385, %v384
  %v495 = vpack.c.b16 %v387, %v386
  %v496 = vpack.c.b16 %v389, %v388
  %v497 = vpack.c.b16 %v391, %v390
  %v498 = vpack.c.b16 %v393, %v392
  %v499 = vpack.c.b16 %v395, %v394
  %v500 = vpack.c.b16 %v397, %v396
  %v501 = vpack.c.b16 %v399, %v398
  %v502 = vpack.c.b16 %v401, %v400
  %v503 = vpack.c.b16 %v403, %v402
  %v504 = vpack.c.b16 %v405, %v404
  %v505 = vpack.c.b16 %v407, %v406
  %v506 = vpack.c.b16 %v409, %v408
  %v507 = vpack.c.b16 %v411, %v410
  %v508 = vpack.c.b16 %v413, %v412
  %v509 = vpack.c.b16 %v415, %v414
  %v510 = vpack.c.b16 %v417, %v416
  %v511 = vpack.c.b16 %v419, %v418
  %v512 = vpack.c.b16 %v421, %v420
  %v513 = vpack.c.b16 %v423, %v422
  %v514 = vpack.c.b16 %v425, %v424
  %v515 = vpack.c.b16 %v427, %v426
  %v516 = vpack.c.b16 %v429, %v428
  %v517 = vpack.c.b16 %v431, %v430
  %v518 = vpack.c.b16 %v433, %v432
  %v519 = vpack.c.b16 %v435, %v434
  %v520 = vpack.c.b16 %v437, %v436
  %v521 = vpack.c.b16 %v439, %v438
  %v522 = vpack.c.b16 %v441, %v440
  %v523 = vpack.c.b16 %v443, %v442
  %v524 = vpack.c.b16 %v445, %v444
  %v525 = vpack.c.b16 %v447, %v446
  %v526 = vpack.c.b16 %v449, %v448
  %v527 = vpack.c.b16 %v451, %v450
  %v528 = vpack.c.b16 %v453, %v452
  %v529 = vpack.c.b16 %v455, %v454
  %v530 = vpack.c.b16 %v457, %v456
  %v531 = vpack.c.b16 %v459, %v458
  %v532 = vpack.c.b16 %v461, %v460
  %v533 = vpack.c.b16 %v463, %v462
  %v534 = vpack.c.b16 %v465, %v464
  %v535 = vpack.c.b16 %v467, %v466
  %v536 = vpack.c.b16 %v469, %v468
  %v537 = vpack.c.b16 %v471, %v470
  %v538 = vpack.c.b16 %v473, %v472
  %v539 = vpack.c.b16 %v475, %v474
  %604 = vmatprep.subr.bf16.mxu0 0
  %605 = vmatpush1.bf16.msra.mxu0 %v476
  %606 = vmatprep.subr.bf16.mxu0 0
  %607 = vmatpush1.bf16.msra.mxu0 %v477
  %608 = vmatprep.subr.bf16.mxu0 0
  %609 = vmatpush1.bf16.msra.mxu0 %v478
  %610 = vmatprep.subr.bf16.mxu0 0
  %611 = vmatpush1.bf16.msra.mxu0 %v479
  %612 = vmatprep.subr.bf16.mxu0 0
  %613 = vmatpush1.bf16.msra.mxu0 %v480
  %614 = vmatprep.subr.bf16.mxu0 0
  %615 = vmatpush1.bf16.msra.mxu0 %v481
  %616 = vmatprep.subr.bf16.mxu0 0
  %617 = vmatpush1.bf16.msra.mxu0 %v482
  %618 = vmatprep.subr.bf16.mxu0 0
  %619 = vmatpush1.bf16.msra.mxu0 %v483
  %620 = vmatprep.subr.bf16.mxu0 0
  %621 = vmatpush1.bf16.msra.mxu0 %v484
  %622 = vmatprep.subr.bf16.mxu0 0
  %623 = vmatpush1.bf16.msra.mxu0 %v485
  %624 = vmatprep.subr.bf16.mxu0 0
  %625 = vmatpush1.bf16.msra.mxu0 %v486
  %626 = vmatprep.subr.bf16.mxu0 0
  %627 = vmatpush1.bf16.msra.mxu0 %v487
  %628 = vmatprep.subr.bf16.mxu0 0
  %629 = vmatpush1.bf16.msra.mxu0 %v488
  %630 = vmatprep.subr.bf16.mxu0 0
  %631 = vmatpush1.bf16.msra.mxu0 %v489
  %632 = vmatprep.subr.bf16.mxu0 0
  %633 = vmatpush1.bf16.msra.mxu0 %v490
  %634 = vmatprep.subr.bf16.mxu0 0
  %635 = vmatpush1.bf16.msra.mxu0 %v491
  %636 = vmatprep.mubr.bf16.mxu0 %v200
  %637 = vmatmul.mubr.bf16.gmra.mrb[0].mxu0 %v186
  %v638 = vpop.f32.mrb[0].mxu0
  %v639 = vadd.f32 %v160, %v638
  %v640 = vpop.f32.mrb[0].mxu0
  %v641 = vpop.f32.mrb[0].mxu0
  %v642 = vpop.f32.mrb[0].mxu0
  %643 = vdwg.mxu0
  %644 = vmatprep.subr.bf16.mxu0 0
  %645 = vmatpush1.bf16.msra.mxu0 %v492
  %646 = vmatprep.subr.bf16.mxu0 0
  %647 = vmatpush1.bf16.msra.mxu0 %v493
  %648 = vmatprep.subr.bf16.mxu0 0
  %649 = vmatpush1.bf16.msra.mxu0 %v494
  %650 = vmatprep.subr.bf16.mxu0 0
  %651 = vmatpush1.bf16.msra.mxu0 %v495
  %652 = vmatprep.subr.bf16.mxu0 0
  %653 = vmatpush1.bf16.msra.mxu0 %v496
  %654 = vmatprep.subr.bf16.mxu0 0
  %655 = vmatpush1.bf16.msra.mxu0 %v497
  %656 = vmatprep.subr.bf16.mxu0 0
  %657 = vmatpush1.bf16.msra.mxu0 %v498
  %658 = vmatprep.subr.bf16.mxu0 0
  %659 = vmatpush1.bf16.msra.mxu0 %v499
  %660 = vmatprep.subr.bf16.mxu0 0
  %661 = vmatpush1.bf16.msra.mxu0 %v500
  %662 = vmatprep.subr.bf16.mxu0 0
  %663 = vmatpush1.bf16.msra.mxu0 %v501
  %664 = vmatprep.subr.bf16.mxu0 0
  %665 = vmatpush1.bf16.msra.mxu0 %v502
  %666 = vmatprep.subr.bf16.mxu0 0
  %667 = vmatpush1.bf16.msra.mxu0 %v503
  %668 = vmatprep.subr.bf16.mxu0 0
  %669 = vmatpush1.bf16.msra.mxu0 %v504
  %670 = vmatprep.subr.bf16.mxu0 0
  %671 = vmatpush1.bf16.msra.mxu0 %v505
  %672 = vmatprep.subr.bf16.mxu0 0
  %673 = vmatpush1.bf16.msra.mxu0 %v506
  %674 = vmatprep.subr.bf16.mxu0 0
  %675 = vmatpush1.bf16.msra.mxu0 %v507
  %676 = vmatprep.mubr.bf16.mxu0 %v210
  %677 = vmatmul.mubr.bf16.gmra.mrb[0].mxu0 %v208
  %v678 = vpop.f32.mrb[0].mxu0
  %v679 = vadd.f32 %v639, %v678
  %v680 = vpop.f32.mrb[0].mxu0
  %v681 = vpop.f32.mrb[0].mxu0
  %v682 = vpop.f32.mrb[0].mxu0
  %683 = vdwg.mxu0
  %684 = vmatprep.subr.bf16.mxu0 0
  %685 = vmatpush1.bf16.msra.mxu0 %v508
  %686 = vmatprep.subr.bf16.mxu0 0
  %687 = vmatpush1.bf16.msra.mxu0 %v509
  %688 = vmatprep.subr.bf16.mxu0 0
  %689 = vmatpush1.bf16.msra.mxu0 %v510
  %690 = vmatprep.subr.bf16.mxu0 0
  %691 = vmatpush1.bf16.msra.mxu0 %v511
  %692 = vmatprep.subr.bf16.mxu0 0
  %693 = vmatpush1.bf16.msra.mxu0 %v512
  %694 = vmatprep.subr.bf16.mxu0 0
  %695 = vmatpush1.bf16.msra.mxu0 %v513
  %696 = vmatprep.subr.bf16.mxu0 0
  %697 = vmatpush1.bf16.msra.mxu0 %v514
  %698 = vmatprep.subr.bf16.mxu0 0
  %699 = vmatpush1.bf16.msra.mxu0 %v515
  %700 = vmatprep.subr.bf16.mxu0 0
  %701 = vmatpush1.bf16.msra.mxu0 %v516
  %702 = vmatprep.subr.bf16.mxu0 0
  %703 = vmatpush1.bf16.msra.mxu0 %v517
  %704 = vmatprep.subr.bf16.mxu0 0
  %705 = vmatpush1.bf16.msra.mxu0 %v518
  %706 = vmatprep.subr.bf16.mxu0 0
  %707 = vmatpush1.bf16.msra.mxu0 %v519
  %708 = vmatprep.subr.bf16.mxu0 0
  %709 = vmatpush1.bf16.msra.mxu0 %v520
  %710 = vmatprep.subr.bf16.mxu0 0
  %711 = vmatpush1.bf16.msra.mxu0 %v521
  %712 = vmatprep.subr.bf16.mxu0 0
  %713 = vmatpush1.bf16.msra.mxu0 %v522
  %714 = vmatprep.subr.bf16.mxu0 0
  %715 = vmatpush1.bf16.msra.mxu0 %v523
  %716 = vmatprep.mubr.bf16.mxu0 %v207
  %717 = vmatmul.mubr.bf16.gmra.mrb[0].mxu0 %v193
  %v718 = vpop.f32.mrb[0].mxu0
  %v719 = vadd.f32 %v679, %v718
  %v720 = vpop.f32.mrb[0].mxu0
  %v721 = vpop.f32.mrb[0].mxu0
  %v722 = vpop.f32.mrb[0].mxu0
  %723 = vdwg.mxu0
  %724 = vmatprep.subr.bf16.mxu0 0
  %725 = vmatpush1.bf16.msra.mxu0 %v524
  %726 = vmatprep.subr.bf16.mxu0 0
  %727 = vmatpush1.bf16.msra.mxu0 %v525
  %728 = vmatprep.subr.bf16.mxu0 0
  %729 = vmatpush1.bf16.msra.mxu0 %v526
  %730 = vmatprep.subr.bf16.mxu0 0
  %731 = vmatpush1.bf16.msra.mxu0 %v527
  %732 = vmatprep.subr.bf16.mxu0 0
  %733 = vmatpush1.bf16.msra.mxu0 %v528
  %734 = vmatprep.subr.bf16.mxu0 0
  %735 = vmatpush1.bf16.msra.mxu0 %v529
  %736 = vmatprep.subr.bf16.mxu0 0
  %737 = vmatpush1.bf16.msra.mxu0 %v530
  %738 = vmatprep.subr.bf16.mxu0 0
  %739 = vmatpush1.bf16.msra.mxu0 %v531
  %740 = vmatprep.subr.bf16.mxu0 0
  %741 = vmatpush1.bf16.msra.mxu0 %v532
  %742 = vmatprep.subr.bf16.mxu0 0
  %743 = vmatpush1.bf16.msra.mxu0 %v533
  %744 = vmatprep.subr.bf16.mxu0 0
  %745 = vmatpush1.bf16.msra.mxu0 %v534
  %746 = vmatprep.subr.bf16.mxu0 0
  %747 = vmatpush1.bf16.msra.mxu0 %v535
  %748 = vmatprep.subr.bf16.mxu0 0
  %749 = vmatpush1.bf16.msra.mxu0 %v536
  %750 = vmatprep.subr.bf16.mxu0 0
  %751 = vmatpush1.bf16.msra.mxu0 %v537
  %752 = vmatprep.subr.bf16.mxu0 0
  %753 = vmatpush1.bf16.msra.mxu0 %v538
  %754 = vmatprep.subr.bf16.mxu0 0
  %755 = vmatpush1.bf16.msra.mxu0 %v539
  %756 = vmatprep.mubr.bf16.mxu0 %v211
  %757 = vmatmul.mubr.bf16.gmra.mrb[0].mxu0 %v209
  %v758 = vpop.f32.mrb[0].mxu0
  %v759 = vadd.f32 %v719, %v758
  %v760 = vpop.f32.mrb[0].mxu0
  %v761 = vpop.f32.mrb[0].mxu0
  %v762 = vpop.f32.mrb[0].mxu0
  %763 = vdwg.mxu0
  %v764 = vld [vmem:[%s3] sm:$0x3]
  %v765 = vmul.f32 %v759, 0.5
  %v766 = vmul.f32 %v765, 1.442695
  %v767 = vpow.pop %v766
  %769 = vrot.lane.b32.xlu0 %v767, 64
  %v770 = vpop.permute.xlu0 %769
  %v772 = vmul.f32 %v764, %v770
  %v773 = vadd.f32 %v759, %v772
  %v774 = vpack.c.bf16 %v773, %v773
  %v775 = vld [vmem:[%s4] sm:$0xff]
  %v776 = vld [vmem:[%s4 + $0x8] sm:$0xff]
  %v777 = vld [vmem:[%s4 + $0x10] sm:$0xff]
  %v778 = vld [vmem:[%s4 + $0x18] sm:$0xff]
  %v779 = vld [vmem:[%s4 + $0x20] sm:$0xff]
  %v780 = vld [vmem:[%s4 + $0x28] sm:$0xff]
  %v781 = vld [vmem:[%s4 + $0x30] sm:$0xff]
  %v782 = vld [vmem:[%s4 + $0x38] sm:$0xff]
  %v783 = vld [vmem:[%s4 + $0x40] sm:$0xff]
  %v784 = vld [vmem:[%s4 + $0x48] sm:$0xff]
  %v785 = vld [vmem:[%s4 + $0x50] sm:$0xff]
  %v786 = vld [vmem:[%s4 + $0x58] sm:$0xff]
  %v787 = vld [vmem:[%s4 + $0x60] sm:$0xff]
  %v788 = vld [vmem:[%s4 + $0x68] sm:$0xff]
  %v789 = vld [vmem:[%s4 + $0x70] sm:$0xff]
  %v790 = vld [vmem:[%s4 + $0x78] sm:$0xff]
  %v791 = vld [vmem:[%s4 + $0x80] sm:$0xff]
  %v792 = vld [vmem:[%s4 + $0x88] sm:$0xff]
  %v793 = vld [vmem:[%s4 + $0x90] sm:$0xff]
  %v794 = vld [vmem:[%s4 + $0x98] sm:$0xff]
  %v795 = vld [vmem:[%s4 + $0xa0] sm:$0xff]
  %v796 = vld [vmem:[%s4 + $0xa8] sm:$0xff]
  %v797 = vld [vmem:[%s4 + $0xb0] sm:$0xff]
  %v798 = vld [vmem:[%s4 + $0xb8] sm:$0xff]
  %v799 = vld [vmem:[%s4 + $0xc0] sm:$0xff]
  %v800 = vld [vmem:[%s4 + $0xc8] sm:$0xff]
  %v801 = vld [vmem:[%s4 + $0xd0] sm:$0xff]
  %v802 = vld [vmem:[%s4 + $0xd8] sm:$0xff]
  %v803 = vld [vmem:[%s4 + $0xe0] sm:$0xff]
  %v804 = vld [vmem:[%s4 + $0xe8] sm:$0xff]
  %v805 = vld [vmem:[%s4 + $0xf0] sm:$0xff]
  %v806 = vld [vmem:[%s4 + $0xf8] sm:$0xff]
  %v807 = vld [vmem:[%s5] sm:$0xff]
  %v809 = vlaneseq
  %v810 = vshrl.u32 %v809, 7
  %v811 = vsub.s32 0, %v810
  %v812 = vrot.slane %v807, %v811
  %v813 = vlaneseq
  %v814 = vshrl.u32 %v813, 7
  %v815 = vsub.s32 1, %v814
  %v816 = vrot.slane %v807, %v815
  %v817 = vlaneseq
  %v818 = vshrl.u32 %v817, 7
  %v819 = vsub.s32 2, %v818
  %v820 = vrot.slane %v807, %v819
  %v821 = vlaneseq
  %v822 = vshrl.u32 %v821, 7
  %v823 = vsub.s32 3, %v822
  %v824 = vrot.slane %v807, %v823
  %v825 = vlaneseq
  %v826 = vshrl.u32 %v825, 7
  %v827 = vsub.s32 4, %v826
  %v828 = vrot.slane %v807, %v827
  %v829 = vlaneseq
  %v830 = vshrl.u32 %v829, 7
  %v831 = vsub.s32 5, %v830
  %v832 = vrot.slane %v807, %v831
  %v833 = vlaneseq
  %v834 = vshrl.u32 %v833, 7
  %v835 = vsub.s32 6, %v834
  %v836 = vrot.slane %v807, %v835
  %v837 = vlaneseq
  %v838 = vshrl.u32 %v837, 7
  %v839 = vsub.s32 7, %v838
  %v840 = vrot.slane %v807, %v839
  %v881 = vunpack.c.l.b16 %v775
  %v882 = vunpack.c.h.b16 %v775
  %v883 = vunpack.c.l.b16 %v776
  %v884 = vunpack.c.h.b16 %v776
  %v885 = vunpack.c.l.b16 %v777
  %v886 = vunpack.c.h.b16 %v777
  %v887 = vunpack.c.l.b16 %v778
  %v888 = vunpack.c.h.b16 %v778
  %v889 = vunpack.c.l.b16 %v779
  %v890 = vunpack.c.h.b16 %v779
  %v891 = vunpack.c.l.b16 %v780
  %v892 = vunpack.c.h.b16 %v780
  %v893 = vunpack.c.l.b16 %v781
  %v894 = vunpack.c.h.b16 %v781
  %v895 = vunpack.c.l.b16 %v782
  %v896 = vunpack.c.h.b16 %v782
  %v897 = vunpack.c.l.b16 %v783
  %v898 = vunpack.c.h.b16 %v783
  %v899 = vunpack.c.l.b16 %v784
  %v900 = vunpack.c.h.b16 %v784
  %v901 = vunpack.c.l.b16 %v785
  %v902 = vunpack.c.h.b16 %v785
  %v903 = vunpack.c.l.b16 %v786
  %v904 = vunpack.c.h.b16 %v786
  %v905 = vunpack.c.l.b16 %v787
  %v906 = vunpack.c.h.b16 %v787
  %v907 = vunpack.c.l.b16 %v788
  %v908 = vunpack.c.h.b16 %v788
  %v909 = vunpack.c.l.b16 %v789
  %v910 = vunpack.c.h.b16 %v789
  %v911 = vunpack.c.l.b16 %v790
  %v912 = vunpack.c.h.b16 %v790
  %v913 = vunpack.c.l.b16 %v791
  %v914 = vunpack.c.h.b16 %v791
  %v915 = vunpack.c.l.b16 %v792
  %v916 = vunpack.c.h.b16 %v792
  %v917 = vunpack.c.l.b16 %v793
  %v918 = vunpack.c.h.b16 %v793
  %v919 = vunpack.c.l.b16 %v794
  %v920 = vunpack.c.h.b16 %v794
  %v921 = vunpack.c.l.b16 %v795
  %v922 = vunpack.c.h.b16 %v795
  %v923 = vunpack.c.l.b16 %v796
  %v924 = vunpack.c.h.b16 %v796
  %v925 = vunpack.c.l.b16 %v797
  %v926 = vunpack.c.h.b16 %v797
  %v927 = vunpack.c.l.b16 %v798
  %v928 = vunpack.c.h.b16 %v798
  %v929 = vunpack.c.l.b16 %v799
  %v930 = vunpack.c.h.b16 %v799
  %v931 = vunpack.c.l.b16 %v800
  %v932 = vunpack.c.h.b16 %v800
  %v933 = vunpack.c.l.b16 %v801
  %v934 = vunpack.c.h.b16 %v801
  %v935 = vunpack.c.l.b16 %v802
  %v936 = vunpack.c.h.b16 %v802
  %v937 = vunpack.c.l.b16 %v803
  %v938 = vunpack.c.h.b16 %v803
  %v939 = vunpack.c.l.b16 %v804
  %v940 = vunpack.c.h.b16 %v804
  %v941 = vunpack.c.l.b16 %v805
  %v942 = vunpack.c.h.b16 %v805
  %v943 = vunpack.c.l.b16 %v806
  %v944 = vunpack.c.h.b16 %v806
  %v945 = vpack.c.b16 %v889, %v881
  %v946 = vpack.c.b16 %v890, %v882
  %v947 = vpack.c.b16 %v891, %v883
  %v948 = vpack.c.b16 %v892, %v884
  %v949 = vpack.c.b16 %v893, %v885
  %v950 = vpack.c.b16 %v894, %v886
  %v951 = vpack.c.b16 %v895, %v887
  %v952 = vpack.c.b16 %v896, %v888
  %v953 = vpack.c.b16 %v905, %v897
  %v954 = vpack.c.b16 %v906, %v898
  %v955 = vpack.c.b16 %v907, %v899
  %v956 = vpack.c.b16 %v908, %v900
  %v957 = vpack.c.b16 %v909, %v901
  %v958 = vpack.c.b16 %v910, %v902
  %v959 = vpack.c.b16 %v911, %v903
  %v960 = vpack.c.b16 %v912, %v904
  %v961 = vpack.c.b16 %v921, %v913
  %v962 = vpack.c.b16 %v922, %v914
  %v963 = vpack.c.b16 %v923, %v915
  %v964 = vpack.c.b16 %v924, %v916
  %v965 = vpack.c.b16 %v925, %v917
  %v966 = vpack.c.b16 %v926, %v918
  %v967 = vpack.c.b16 %v927, %v919
  %v968 = vpack.c.b16 %v928, %v920
  %v969 = vpack.c.b16 %v937, %v929
  %v970 = vpack.c.b16 %v938, %v930
  %v971 = vpack.c.b16 %v939, %v931
  %v972 = vpack.c.b16 %v940, %v932
  %v973 = vpack.c.b16 %v941, %v933
  %v974 = vpack.c.b16 %v942, %v934
  %v975 = vpack.c.b16 %v943, %v935
  %v976 = vpack.c.b16 %v944, %v936
  %vm1009 = vcmask 523264
  %v1011 = vsel %vm1009, %v774, 0
  %1013 = vmatprep.subr.bf16.mxu0 %v946
  %1014 = vmatpush1.bf16.msra.mxu0 %v945
  %1015 = vmatprep.subr.bf16.mxu0 %v954
  %1016 = vmatpush1.bf16.msra.mxu0 %v953
  %1017 = vmatprep.subr.bf16.mxu0 %v962
  %1018 = vmatpush1.bf16.msra.mxu0 %v961
  %1019 = vmatprep.subr.bf16.mxu0 %v970
  %1020 = vmatpush1.bf16.msra.mxu0 %v969
  %1021 = vmatprep.subr.bf16.mxu0 0
  %1022 = vmatpush1.bf16.msra.mxu0 0
  %1023 = vmatprep.subr.bf16.mxu0 0
  %1024 = vmatpush1.bf16.msra.mxu0 0
  %1025 = vmatprep.subr.bf16.mxu0 0
  %1026 = vmatpush1.bf16.msra.mxu0 0
  %1027 = vmatprep.subr.bf16.mxu0 0
  %1028 = vmatpush1.bf16.msra.mxu0 0
  %1029 = vmatprep.subr.bf16.mxu0 0
  %1030 = vmatpush1.bf16.msra.mxu0 0
  %1031 = vmatprep.subr.bf16.mxu0 0
  %1032 = vmatpush1.bf16.msra.mxu0 0
  %1033 = vmatprep.subr.bf16.mxu0 0
  %1034 = vmatpush1.bf16.msra.mxu0 0
  %1035 = vmatprep.subr.bf16.mxu0 0
  %1036 = vmatpush1.bf16.msra.mxu0 0
  %1037 = vmatprep.subr.bf16.mxu0 0
  %1038 = vmatpush1.bf16.msra.mxu0 0
  %1039 = vmatprep.subr.bf16.mxu0 0
  %1040 = vmatpush1.bf16.msra.mxu0 0
  %1041 = vmatprep.subr.bf16.mxu0 0
  %1042 = vmatpush1.bf16.msra.mxu0 0
  %1043 = vmatprep.subr.bf16.mxu0 0
  %1044 = vmatpush1.bf16.msra.mxu0 0
  %1045 = vmatprep.mubr.bf16.mxu0 0
  %1046 = vmatmul.mubr.bf16.gmra.mrb[0].mxu0 %v1011
  %v1047 = vpop.f32.mrb[0].mxu0
  %v1048 = vadd.f32 %v812, %v1047
  %v1049 = vpop.f32.mrb[0].mxu0
  %v1050 = vadd.f32 %v816, %v1049
  %v1051 = vpop.f32.mrb[0].mxu0
  %v1052 = vpop.f32.mrb[0].mxu0
  %1053 = vdwg.mxu0
  %1054 = vmatprep.subr.bf16.mxu0 %v948
  %1055 = vmatpush1.bf16.msra.mxu0 %v947
  %1056 = vmatprep.subr.bf16.mxu0 %v956
  %1057 = vmatpush1.bf16.msra.mxu0 %v955
  %1058 = vmatprep.subr.bf16.mxu0 %v964
  %1059 = vmatpush1.bf16.msra.mxu0 %v963
  %1060 = vmatprep.subr.bf16.mxu0 %v972
  %1061 = vmatpush1.bf16.msra.mxu0 %v971
  %1062 = vmatprep.subr.bf16.mxu0 0
  %1063 = vmatpush1.bf16.msra.mxu0 0
  %1064 = vmatprep.subr.bf16.mxu0 0
  %1065 = vmatpush1.bf16.msra.mxu0 0
  %1066 = vmatprep.subr.bf16.mxu0 0
  %1067 = vmatpush1.bf16.msra.mxu0 0
  %1068 = vmatprep.subr.bf16.mxu0 0
  %1069 = vmatpush1.bf16.msra.mxu0 0
  %1070 = vmatprep.subr.bf16.mxu0 0
  %1071 = vmatpush1.bf16.msra.mxu0 0
  %1072 = vmatprep.subr.bf16.mxu0 0
  %1073 = vmatpush1.bf16.msra.mxu0 0
  %1074 = vmatprep.subr.bf16.mxu0 0
  %1075 = vmatpush1.bf16.msra.mxu0 0
  %1076 = vmatprep.subr.bf16.mxu0 0
  %1077 = vmatpush1.bf16.msra.mxu0 0
  %1078 = vmatprep.subr.bf16.mxu0 0
  %1079 = vmatpush1.bf16.msra.mxu0 0
  %1080 = vmatprep.subr.bf16.mxu0 0
  %1081 = vmatpush1.bf16.msra.mxu0 0
  %1082 = vmatprep.subr.bf16.mxu0 0
  %1083 = vmatpush1.bf16.msra.mxu0 0
  %1084 = vmatprep.subr.bf16.mxu0 0
  %1085 = vmatpush1.bf16.msra.mxu0 0
  %1086 = vmatprep.mubr.bf16.mxu0 0
  %1087 = vmatmul.mubr.bf16.gmra.mrb[0].mxu0 %v1011
  %v1088 = vpop.f32.mrb[0].mxu0
  %v1089 = vadd.f32 %v820, %v1088
  %v1090 = vpop.f32.mrb[0].mxu0
  %v1091 = vadd.f32 %v824, %v1090
  %v1092 = vpop.f32.mrb[0].mxu0
  %v1093 = vpop.f32.mrb[0].mxu0
  %1094 = vdwg.mxu0
  %1095 = vmatprep.subr.bf16.mxu0 %v950
  %1096 = vmatpush1.bf16.msra.mxu0 %v949
  %1097 = vmatprep.subr.bf16.mxu0 %v958
  %1098 = vmatpush1.bf16.msra.mxu0 %v957
  %1099 = vmatprep.subr.bf16.mxu0 %v966
  %1100 = vmatpush1.bf16.msra.mxu0 %v965
  %1101 = vmatprep.subr.bf16.mxu0 %v974
  %1102 = vmatpush1.bf16.msra.mxu0 %v973
  %1103 = vmatprep.subr.bf16.mxu0 0
  %1104 = vmatpush1.bf16.msra.mxu0 0
  %1105 = vmatprep.subr.bf16.mxu0 0
  %1106 = vmatpush1.bf16.msra.mxu0 0
  %1107 = vmatprep.subr.bf16.mxu0 0
  %1108 = vmatpush1.bf16.msra.mxu0 0
  %1109 = vmatprep.subr.bf16.mxu0 0
  %1110 = vmatpush1.bf16.msra.mxu0 0
  %1111 = vmatprep.subr.bf16.mxu0 0
  %1112 = vmatpush1.bf16.msra.mxu0 0
  %1113 = vmatprep.subr.bf16.mxu0 0
  %1114 = vmatpush1.bf16.msra.mxu0 0
  %1115 = vmatprep.subr.bf16.mxu0 0
  %1116 = vmatpush1.bf16.msra.mxu0 0
  %1117 = vmatprep.subr.bf16.mxu0 0
  %1118 = vmatpush1.bf16.msra.mxu0 0
  %1119 = vmatprep.subr.bf16.mxu0 0
  %1120 = vmatpush1.bf16.msra.mxu0 0
  %1121 = vmatprep.subr.bf16.mxu0 0
  %1122 = vmatpush1.bf16.msra.mxu0 0
  %1123 = vmatprep.subr.bf16.mxu0 0
  %1124 = vmatpush1.bf16.msra.mxu0 0
  %1125 = vmatprep.subr.bf16.mxu0 0
  %1126 = vmatpush1.bf16.msra.mxu0 0
  %1127 = vmatprep.mubr.bf16.mxu0 0
  %1128 = vmatmul.mubr.bf16.gmra.mrb[0].mxu0 %v1011
  %v1129 = vpop.f32.mrb[0].mxu0
  %v1130 = vadd.f32 %v828, %v1129
  %v1131 = vpop.f32.mrb[0].mxu0
  %v1132 = vadd.f32 %v832, %v1131
  %v1133 = vpop.f32.mrb[0].mxu0
  %v1134 = vpop.f32.mrb[0].mxu0
  %1135 = vdwg.mxu0
  %1136 = vmatprep.subr.bf16.mxu0 %v952
  %1137 = vmatpush1.bf16.msra.mxu0 %v951
  %1138 = vmatprep.subr.bf16.mxu0 %v960
  %1139 = vmatpush1.bf16.msra.mxu0 %v959
  %1140 = vmatprep.subr.bf16.mxu0 %v968
  %1141 = vmatpush1.bf16.msra.mxu0 %v967
  %1142 = vmatprep.subr.bf16.mxu0 %v976
  %1143 = vmatpush1.bf16.msra.mxu0 %v975
  %1144 = vmatprep.subr.bf16.mxu0 0
  %1145 = vmatpush1.bf16.msra.mxu0 0
  %1146 = vmatprep.subr.bf16.mxu0 0
  %1147 = vmatpush1.bf16.msra.mxu0 0
  %1148 = vmatprep.subr.bf16.mxu0 0
  %1149 = vmatpush1.bf16.msra.mxu0 0
  %1150 = vmatprep.subr.bf16.mxu0 0
  %1151 = vmatpush1.bf16.msra.mxu0 0
  %1152 = vmatprep.subr.bf16.mxu0 0
  %1153 = vmatpush1.bf16.msra.mxu0 0
  %1154 = vmatprep.subr.bf16.mxu0 0
  %1155 = vmatpush1.bf16.msra.mxu0 0
  %1156 = vmatprep.subr.bf16.mxu0 0
  %1157 = vmatpush1.bf16.msra.mxu0 0
  %1158 = vmatprep.subr.bf16.mxu0 0
  %1159 = vmatpush1.bf16.msra.mxu0 0
  %1160 = vmatprep.subr.bf16.mxu0 0
  %1161 = vmatpush1.bf16.msra.mxu0 0
  %1162 = vmatprep.subr.bf16.mxu0 0
  %1163 = vmatpush1.bf16.msra.mxu0 0
  %1164 = vmatprep.subr.bf16.mxu0 0
  %1165 = vmatpush1.bf16.msra.mxu0 0
  %1166 = vmatprep.subr.bf16.mxu0 0
  %1167 = vmatpush1.bf16.msra.mxu0 0
  %1168 = vmatprep.mubr.bf16.mxu0 0
  %1169 = vmatmul.mubr.bf16.gmra.mrb[0].mxu0 %v1011
  %v1170 = vpop.f32.mrb[0].mxu0
  %v1171 = vadd.f32 %v836, %v1170
  %v1172 = vpop.f32.mrb[0].mxu0
  %v1173 = vadd.f32 %v840, %v1172
  %v1174 = vpop.f32.mrb[0].mxu0
  %v1175 = vpop.f32.mrb[0].mxu0
  %1176 = vdwg.mxu0
  %1177 = vst [vmem:[%s6] sm:$0x3] %v759
  %v1178 = vpack.c.bf16 %v1048, %v1048
  %v1179 = vpack.c.bf16 %v1050, %v1050
  %v1180 = vpack.c.bf16 %v1089, %v1089
  %v1181 = vpack.c.bf16 %v1091, %v1091
  %v1182 = vpack.c.bf16 %v1130, %v1130
  %v1183 = vpack.c.bf16 %v1132, %v1132
  %v1184 = vpack.c.bf16 %v1171, %v1171
  %v1185 = vpack.c.bf16 %v1173, %v1173
  %v1194 = vcombine.low %v1178, %v1179
  %v1195 = vcombine.low %v1180, %v1181
  %v1196 = vcombine.low %v1182, %v1183
  %v1197 = vcombine.low %v1184, %v1185
  %v1199 = vunpack.c.l.s4 1966171168
  %v1200 = vunpack.c.0.s8 %v1199
  %v1201 = vlaneseq
  %v1202 = vshrl.u32 %v1201, 7
  %v1203 = vsub.s32 %v1200, %v1202
  %v1204 = vrot.slane %v1194, %v1203
  %v1206 = vunpack.c.l.s4 1966171168
  %v1207 = vunpack.c.0.s8 %v1206
  %v1208 = vlaneseq
  %v1209 = vshrl.u32 %v1208, 7
  %v1210 = vsub.s32 %v1207, %v1209
  %v1211 = vrot.slane %v1195, %v1210
  %v1213 = vunpack.c.l.s4 1966171168
  %v1214 = vunpack.c.0.s8 %v1213
  %v1215 = vlaneseq
  %v1216 = vshrl.u32 %v1215, 7
  %v1217 = vsub.s32 %v1214, %v1216
  %v1218 = vrot.slane %v1196, %v1217
  %v1220 = vunpack.c.l.s4 1966171168
  %v1221 = vunpack.c.0.s8 %v1220
  %v1222 = vlaneseq
  %v1223 = vshrl.u32 %v1222, 7
  %v1224 = vsub.s32 %v1221, %v1223
  %v1225 = vrot.slane %v1197, %v1224
  %v1226 = vcombine.low %v1204, %v1211
  %v1227 = vcombine.low %v1218, %v1225
  %v1229 = vunpack.c.l.s4 1966171168
  %v1230 = vunpack.c.0.s8 %v1229
  %v1231 = vlaneseq
  %v1232 = vshrl.u32 %v1231, 7
  %v1233 = vsub.s32 %v1230, %v1232
  %v1234 = vrot.slane %v1226, %v1233
  %v1236 = vunpack.c.l.s4 1966171168
  %v1237 = vunpack.c.0.s8 %v1236
  %v1238 = vlaneseq
  %v1239 = vshrl.u32 %v1238, 7
  %v1240 = vsub.s32 %v1237, %v1239
  %v1241 = vrot.slane %v1227, %v1240
  %v1242 = vcombine.low %v1234, %v1241
  %1244 = vst [vmem:[%s7] sm:$0xff] %v1242
  // Predicated region
  $region26: #{vae_forward.4} parent=0 // pred_check
    _
  $region27: #{vae_forward.4} parent=0 // pred_check_branch
    %1246 = sbr.rel (0) target = $region29
  $region28: #{vae_forward.4} parent=0 // pred_region
    _
  $region29: #{vae_forward.4} parent=0 // pred_fallthru
    _
  // Predicated region
  $region30: #{vae_forward.4} parent=0 // pred_check
    _
  $region31: #{vae_forward.4} parent=0 // pred_check_branch
    %1248 = sbr.rel (0) target = $region33
  $region32: #{vae_forward.4} parent=0 // pred_region
    _
  $region33: #{vae_forward.4} parent=0 // pred_fallthru
    _
  // Predicated region
  $region34: #{vae_forward.4} parent=0 // pred_check
    _
  $region35: #{vae_forward.4} parent=0 // pred_check_branch
    %1250 = sbr.rel (0) target = $region37
  $region36: #{vae_forward.4} parent=0 // pred_region
    _
  $region37: #{vae_forward.4} parent=0 // pred_fallthru
    _
  // Predicated region
  $region38: #{vae_forward.4} parent=0 // pred_check
    _
  $region39: #{vae_forward.4} parent=0 // pred_check_branch
    %1252 = sbr.rel (0) target = $region41
  $region40: #{vae_forward.4} parent=0 // pred_region
    _
  $region41: #{vae_forward.4} parent=0 // pred_fallthru
    _

// kernel: vae_forward.3
$region0: #{vae_forward.3}
  #allocation0 [shape = 'u32[]', space=smem, size = 0x4, offset = 0x4, fixed_abs, tag = 'smem constant byte address 0x4 - core index']
  #allocation1 [shape = 'u32[144,128]{1,0:T(1,128)}', space=vmem, size = 0x12000, scoped, tag = 'internal scratch']
  %s0 = inlined_call_operand.vmem [shape: bf16[128,16], index: 0, kind: input, shape index: {}]
  %s1 = inlined_call_operand.vmem [shape: bf16[16,32], index: 1, kind: input, shape index: {}]
  %s2 = inlined_call_operand.vmem [shape: f32[1,32], index: 2, kind: input, shape index: {}]
  %s3 = inlined_call_operand.vmem [shape: f32[1,32], index: 3, kind: input, shape index: {}]
  %s4 = inlined_call_operand.vmem [shape: f32[1,32], index: 4, kind: input, shape index: {}]
  %s5 = inlined_call_operand.vmem [shape: bf16[16,32,128], index: 5, kind: input, shape index: {}]
  %s6 = inlined_call_operand.vmem [shape: bf16[16,32,64], index: 6, kind: input, shape index: {}]
  %s7 = inlined_call_operand.vmem [shape: f32[1,64], index: 7, kind: input, shape index: {}]
  %s8 = inlined_call_operand.vmem [shape: f32[1,64], index: 8, kind: input, shape index: {}]
  %s9 = inlined_call_operand.vmem [shape: f32[1,64], index: 9, kind: input, shape index: {}]
  %s10 = inlined_call_operand.vmem [shape: bf16[32,64], index: 10, kind: output, shape index: {}]
  %s11 = sld [smem:[#allocation0]]
  $region50: #{vae_forward.3} parent=0
    _
  %s13 = ssub.s32 1, %s11
  %s14 = scalar_select 0, %s13, %s11
  // Predicated region
  $region2: #{vae_forward.3} parent=0 // pred_check
    _
  $region3: #{vae_forward.3} parent=0 // pred_check_branch
    %16 = sbr.rel (0) target = $region5
  $region4: #{vae_forward.3} parent=0 // pred_region
    _
  $region5: #{vae_forward.3} parent=0 // pred_fallthru
    _
  // Predicated region
  $region6: #{vae_forward.3} parent=0 // pred_check
    _
  $region7: #{vae_forward.3} parent=0 // pred_check_branch
    %18 = sbr.rel (0) target = $region9
  $region8: #{vae_forward.3} parent=0 // pred_region
    _
  $region9: #{vae_forward.3} parent=0 // pred_fallthru
    _
  // Predicated region
  $region10: #{vae_forward.3} parent=0 // pred_check
    _
  $region11: #{vae_forward.3} parent=0 // pred_check_branch
    %20 = sbr.rel (0) target = $region13
  $region12: #{vae_forward.3} parent=0 // pred_region
    _
  $region13: #{vae_forward.3} parent=0 // pred_fallthru
    _
  // Predicated region
  $region14: #{vae_forward.3} parent=0 // pred_check
    _
  $region15: #{vae_forward.3} parent=0 // pred_check_branch
    %22 = sbr.rel (0) target = $region17
  $region16: #{vae_forward.3} parent=0 // pred_region
    _
  $region17: #{vae_forward.3} parent=0 // pred_fallthru
    _
  // Predicated region
  $region18: #{vae_forward.3} parent=0 // pred_check
    _
  $region19: #{vae_forward.3} parent=0 // pred_check_branch
    %24 = sbr.rel (0) target = $region21
  $region20: #{vae_forward.3} parent=0 // pred_region
    _
  $region21: #{vae_forward.3} parent=0 // pred_fallthru
    _
  // Predicated region
  $region22: #{vae_forward.3} parent=0 // pred_check
    _
  $region23: #{vae_forward.3} parent=0 // pred_check_branch
    %26 = sbr.rel (0) target = $region25
  $region24: #{vae_forward.3} parent=0 // pred_region
    _
  $region25: #{vae_forward.3} parent=0 // pred_fallthru
    _
  // Predicated region
  $region26: #{vae_forward.3} parent=0 // pred_check
    _
  $region27: #{vae_forward.3} parent=0 // pred_check_branch
    %28 = sbr.rel (0) target = $region29
  $region28: #{vae_forward.3} parent=0 // pred_region
    _
  $region29: #{vae_forward.3} parent=0 // pred_fallthru
    _
  // Predicated region
  $region30: #{vae_forward.3} parent=0 // pred_check
    _
  $region31: #{vae_forward.3} parent=0 // pred_check_branch
    %30 = sbr.rel (0) target = $region33
  $region32: #{vae_forward.3} parent=0 // pred_region
    _
  $region33: #{vae_forward.3} parent=0 // pred_fallthru
    _
  // Predicated region
  $region34: #{vae_forward.3} parent=0 // pred_check
    _
  $region35: #{vae_forward.3} parent=0 // pred_check_branch
    %32 = sbr.rel (0) target = $region37
  $region36: #{vae_forward.3} parent=0 // pred_region
    _
  $region37: #{vae_forward.3} parent=0 // pred_fallthru
    _
  // Predicated region
  $region38: #{vae_forward.3} parent=0 // pred_check
    _
  $region39: #{vae_forward.3} parent=0 // pred_check_branch
    %34 = sbr.rel (0) target = $region41
  $region40: #{vae_forward.3} parent=0 // pred_region
    _
  $region41: #{vae_forward.3} parent=0 // pred_fallthru
    _
  %v36 = vld [vmem:[%s0] sm:$0xf]
  %v37 = vld [vmem:[%s0 + $0x4] sm:$0xf]
  %v38 = vld [vmem:[%s0 + $0x8] sm:$0xf]
  %v39 = vld [vmem:[%s0 + $0xc] sm:$0xf]
  %v40 = vld [vmem:[%s0 + $0x10] sm:$0xf]
  %v41 = vld [vmem:[%s0 + $0x14] sm:$0xf]
  %v42 = vld [vmem:[%s0 + $0x18] sm:$0xf]
  %v43 = vld [vmem:[%s0 + $0x1c] sm:$0xf]
  %v44 = vld [vmem:[%s0 + $0x20] sm:$0xf]
  %v45 = vld [vmem:[%s0 + $0x24] sm:$0xf]
  %v46 = vld [vmem:[%s0 + $0x28] sm:$0xf]
  %v47 = vld [vmem:[%s0 + $0x2c] sm:$0xf]
  %v48 = vld [vmem:[%s0 + $0x30] sm:$0xf]
  %v49 = vld [vmem:[%s0 + $0x34] sm:$0xf]
  %v50 = vld [vmem:[%s0 + $0x38] sm:$0xf]
  %v51 = vld [vmem:[%s0 + $0x3c] sm:$0xf]
  %v52 = vld [vmem:[%s1] sm:$0xf]
  %v53 = vld [vmem:[%s1 + $0x4] sm:$0xf]
  %v54 = vld [vmem:[%s2] sm:$0x1]
  %v56 = vlaneseq
  %v57 = vshrl.u32 %v56, 7
  %v58 = vsub.s32 0, %v57
  %v59 = vrot.slane %v54, %v58
  %v77 = vunpack.c.l.b16 %v36
  %v78 = vunpack.c.l.b16 %v37
  %v79 = vunpack.c.l.b16 %v38
  %v80 = vunpack.c.l.b16 %v39
  %v81 = vunpack.c.l.b16 %v40
  %v82 = vunpack.c.l.b16 %v41
  %v83 = vunpack.c.l.b16 %v42
  %v84 = vunpack.c.l.b16 %v43
  %v85 = vunpack.c.l.b16 %v44
  %v86 = vunpack.c.l.b16 %v45
  %v87 = vunpack.c.l.b16 %v46
  %v88 = vunpack.c.l.b16 %v47
  %v89 = vunpack.c.l.b16 %v48
  %v90 = vunpack.c.l.b16 %v49
  %v91 = vunpack.c.l.b16 %v50
  %v92 = vunpack.c.l.b16 %v51
  %v93 = vpack.c.b16 %v78, %v77
  %v94 = vpack.c.b16 %v80, %v79
  %v95 = vpack.c.b16 %v82, %v81
  %v96 = vpack.c.b16 %v84, %v83
  %v97 = vpack.c.b16 %v86, %v85
  %v98 = vpack.c.b16 %v88, %v87
  %v99 = vpack.c.b16 %v90, %v89
  %v100 = vpack.c.b16 %v92, %v91
  %v103 = vunpack.c.l.b16 %v52
  %v104 = vunpack.c.l.b16 %v53
  %v105 = vpack.c.b16 %v104, %v103
  %vm107 = vcmask 130048
  %v109 = vsel %vm107, %v93, 0
  %v112 = vsel %vm107, %v94, 0
  %v115 = vsel %vm107, %v95, 0
  %v118 = vsel %vm107, %v96, 0
  %v121 = vsel %vm107, %v97, 0
  %v124 = vsel %vm107, %v98, 0
  %v127 = vsel %vm107, %v99, 0
  %v130 = vsel %vm107, %v100, 0
  %132 = vmatprep.subr.bf16.mxu0 0
  %133 = vmatpush1.bf16.msra.mxu0 %v105
  %134 = vmatprep.subr.bf16.mxu0 0
  %135 = vmatpush1.bf16.msra.mxu0 0
  %136 = vmatprep.subr.bf16.mxu0 0
  %137 = vmatpush1.bf16.msra.mxu0 0
  %138 = vmatprep.subr.bf16.mxu0 0
  %139 = vmatpush1.bf16.msra.mxu0 0
  %140 = vmatprep.subr.bf16.mxu0 0
  %141 = vmatpush1.bf16.msra.mxu0 0
  %142 = vmatprep.subr.bf16.mxu0 0
  %143 = vmatpush1.bf16.msra.mxu0 0
  %144 = vmatprep.subr.bf16.mxu0 0
  %145 = vmatpush1.bf16.msra.mxu0 0
  %146 = vmatprep.subr.bf16.mxu0 0
  %147 = vmatpush1.bf16.msra.mxu0 0
  %148 = vmatprep.subr.bf16.mxu0 0
  %149 = vmatpush1.bf16.msra.mxu0 0
  %150 = vmatprep.subr.bf16.mxu0 0
  %151 = vmatpush1.bf16.msra.mxu0 0
  %152 = vmatprep.subr.bf16.mxu0 0
  %153 = vmatpush1.bf16.msra.mxu0 0
  %154 = vmatprep.subr.bf16.mxu0 0
  %155 = vmatpush1.bf16.msra.mxu0 0
  %156 = vmatprep.subr.bf16.mxu0 0
  %157 = vmatpush1.bf16.msra.mxu0 0
  %158 = vmatprep.subr.bf16.mxu0 0
  %159 = vmatpush1.bf16.msra.mxu0 0
  %160 = vmatprep.subr.bf16.mxu0 0
  %161 = vmatpush1.bf16.msra.mxu0 0
  %162 = vmatprep.subr.bf16.mxu0 0
  %163 = vmatpush1.bf16.msra.mxu0 0
  %164 = vmatprep.mubr.bf16.mxu0 0
  %165 = vmatmul.mubr.bf16.gmra.mrb[0].mxu0 %v109
  %v166 = vpop.f32.mrb[0].mxu0
  %v167 = vadd.f32 %v59, %v166
  %v168 = vpop.f32.mrb[0].mxu0
  %v169 = vpop.f32.mrb[0].mxu0
  %v170 = vadd.f32 %v59, %v169
  %v171 = vpop.f32.mrb[0].mxu0
  %172 = vmatprep.mubr.bf16.mxu0 0
  %173 = vmatmul.mubr.bf16.gmra.mrb[0].mxu0 %v112
  %v174 = vpop.f32.mrb[0].mxu0
  %v175 = vadd.f32 %v59, %v174
  %v176 = vpop.f32.mrb[0].mxu0
  %v177 = vpop.f32.mrb[0].mxu0
  %v178 = vadd.f32 %v59, %v177
  %v179 = vpop.f32.mrb[0].mxu0
  %180 = vmatprep.mubr.bf16.mxu0 0
  %181 = vmatmul.mubr.bf16.gmra.mrb[0].mxu0 %v115
  %v182 = vpop.f32.mrb[0].mxu0
  %v183 = vadd.f32 %v59, %v182
  %v184 = vpop.f32.mrb[0].mxu0
  %v185 = vpop.f32.mrb[0].mxu0
  %v186 = vadd.f32 %v59, %v185
  %v187 = vpop.f32.mrb[0].mxu0
  %188 = vmatprep.mubr.bf16.mxu0 0
  %189 = vmatmul.mubr.bf16.gmra.mrb[0].mxu0 %v118
  %v190 = vpop.f32.mrb[0].mxu0
  %v191 = vadd.f32 %v59, %v190
  %v192 = vpop.f32.mrb[0].mxu0
  %v193 = vpop.f32.mrb[0].mxu0
  %v194 = vadd.f32 %v59, %v193
  %v195 = vpop.f32.mrb[0].mxu0
  %196 = vmatprep.mubr.bf16.mxu0 0
  %197 = vmatmul.mubr.bf16.gmra.mrb[0].mxu0 %v121
  %v198 = vpop.f32.mrb[0].mxu0
  %v199 = vadd.f32 %v59, %v198
  %v200 = vpop.f32.mrb[0].mxu0
  %v201 = vpop.f32.mrb[0].mxu0
  %v202 = vadd.f32 %v59, %v201
  %v203 = vpop.f32.mrb[0].mxu0
  %204 = vmatprep.mubr.bf16.mxu0 0
  %205 = vmatmul.mubr.bf16.gmra.mrb[0].mxu0 %v124
  %v206 = vpop.f32.mrb[0].mxu0
  %v207 = vadd.f32 %v59, %v206
  %v208 = vpop.f32.mrb[0].mxu0
  %v209 = vpop.f32.mrb[0].mxu0
  %v210 = vadd.f32 %v59, %v209
  %v211 = vpop.f32.mrb[0].mxu0
  %212 = vmatprep.mubr.bf16.mxu0 0
  %213 = vmatmul.mubr.bf16.gmra.mrb[0].mxu0 %v127
  %v214 = vpop.f32.mrb[0].mxu0
  %v215 = vadd.f32 %v59, %v214
  %v216 = vpop.f32.mrb[0].mxu0
  %v217 = vpop.f32.mrb[0].mxu0
  %v218 = vadd.f32 %v59, %v217
  %v219 = vpop.f32.mrb[0].mxu0
  %220 = vmatprep.mubr.bf16.mxu0 0
  %221 = vmatmul.mubr.bf16.gmra.mrb[0].mxu0 %v130
  %v222 = vpop.f32.mrb[0].mxu0
  %v223 = vadd.f32 %v59, %v222
  %v224 = vpop.f32.mrb[0].mxu0
  %v225 = vpop.f32.mrb[0].mxu0
  %v226 = vadd.f32 %v59, %v225
  %v227 = vpop.f32.mrb[0].mxu0
  %228 = vdwg.mxu0
  %v229 = vld [vmem:[%s3] sm:$0x1]
  %v230 = vld [vmem:[%s4] sm:$0x1]
  %vm231 = vcmask 261120
  %v232 = vsel %vm231, %v167, 0.0
  %v233 = vsel %vm231, %v170, 0.0
  %v234 = vadd.f32 %v232, %v233
  %v235 = vsel %vm231, %v175, 0.0
  %v236 = vadd.f32 %v234, %v235
  %v237 = vsel %vm231, %v178, 0.0
  %v238 = vadd.f32 %v236, %v237
  %v239 = vsel %vm231, %v183, 0.0
  %v240 = vadd.f32 %v238, %v239
  %v241 = vsel %vm231, %v186, 0.0
  %v242 = vadd.f32 %v240, %v241
  %v243 = vsel %vm231, %v191, 0.0
  %v244 = vadd.f32 %v242, %v243
  %v245 = vsel %vm231, %v194, 0.0
  %v246 = vadd.f32 %v244, %v245
  %v247 = vsel %vm231, %v199, 0.0
  %v248 = vadd.f32 %v246, %v247
  %v249 = vsel %vm231, %v202, 0.0
  %v250 = vadd.f32 %v248, %v249
  %v251 = vsel %vm231, %v207, 0.0
  %v252 = vadd.f32 %v250, %v251
  %v253 = vsel %vm231, %v210, 0.0
  %v254 = vadd.f32 %v252, %v253
  %v255 = vsel %vm231, %v215, 0.0
  %v256 = vadd.f32 %v254, %v255
  %v257 = vsel %vm231, %v218, 0.0
  %v258 = vadd.f32 %v256, %v257
  %v259 = vsel %vm231, %v223, 0.0
  %v260 = vadd.f32 %v258, %v259
  %v261 = vsel %vm231, %v226, 0.0
  %v262 = vadd.f32 %v260, %v261
  %v263 = vrot.slane %v262, 4
  %v264 = vadd.f32 %v262, %v263
  %v265 = vrot.slane %v264, 2
  %v266 = vadd.f32 %v264, %v265
  %v267 = vrot.slane %v266, 1
  %v268 = vadd.f32 %v266, %v267
  %v269 = vmul.f32 %v268, 0.0078125
  %v270 = vsub.f32 %v167, %v269
  %v271 = vsub.f32 %v170, %v269
  %v272 = vsub.f32 %v175, %v269
  %v273 = vsub.f32 %v178, %v269
  %v274 = vsub.f32 %v183, %v269
  %v275 = vsub.f32 %v186, %v269
  %v276 = vsub.f32 %v191, %v269
  %v277 = vsub.f32 %v194, %v269
  %v278 = vsub.f32 %v199, %v269
  %v279 = vsub.f32 %v202, %v269
  %v280 = vsub.f32 %v207, %v269
  %v281 = vsub.f32 %v210, %v269
  %v282 = vsub.f32 %v215, %v269
  %v283 = vsub.f32 %v218, %v269
  %v284 = vsub.f32 %v223, %v269
  %v285 = vsub.f32 %v226, %v269
  %v286 = vmul.f32 %v270, %v270
  %v287 = vmul.f32 %v271, %v271
  %v288 = vmul.f32 %v272, %v272
  %v289 = vmul.f32 %v273, %v273
  %v290 = vmul.f32 %v274, %v274
  %v291 = vmul.f32 %v275, %v275
  %v292 = vmul.f32 %v276, %v276
  %v293 = vmul.f32 %v277, %v277
  %v294 = vmul.f32 %v278, %v278
  %v295 = vmul.f32 %v279, %v279
  %v296 = vmul.f32 %v280, %v280
  %v297 = vmul.f32 %v281, %v281
  %v298 = vmul.f32 %v282, %v282
  %v299 = vmul.f32 %v283, %v283
  %v300 = vmul.f32 %v284, %v284
  %v301 = vmul.f32 %v285, %v285
  %v302 = vsel %vm231, %v286, 0.0
  %v303 = vsel %vm231, %v287, 0.0
  %v304 = vadd.f32 %v302, %v303
  %v305 = vsel %vm231, %v288, 0.0
  %v306 = vadd.f32 %v304, %v305
  %v307 = vsel %vm231, %v289, 0.0
  %v308 = vadd.f32 %v306, %v307
  %v309 = vsel %vm231, %v290, 0.0
  %v310 = vadd.f32 %v308, %v309
  %v311 = vsel %vm231, %v291, 0.0
  %v312 = vadd.f32 %v310, %v311
  %v313 = vsel %vm231, %v292, 0.0
  %v314 = vadd.f32 %v312, %v313
  %v315 = vsel %vm231, %v293, 0.0
  %v316 = vadd.f32 %v314, %v315
  %v317 = vsel %vm231, %v294, 0.0
  %v318 = vadd.f32 %v316, %v317
  %v319 = vsel %vm231, %v295, 0.0
  %v320 = vadd.f32 %v318, %v319
  %v321 = vsel %vm231, %v296, 0.0
  %v322 = vadd.f32 %v320, %v321
  %v323 = vsel %vm231, %v297, 0.0
  %v324 = vadd.f32 %v322, %v323
  %v325 = vsel %vm231, %v298, 0.0
  %v326 = vadd.f32 %v324, %v325
  %v327 = vsel %vm231, %v299, 0.0
  %v328 = vadd.f32 %v326, %v327
  %v329 = vsel %vm231, %v300, 0.0
  %v330 = vadd.f32 %v328, %v329
  %v331 = vsel %vm231, %v301, 0.0
  %v332 = vadd.f32 %v330, %v331
  %v333 = vrot.slane %v332, 4
  %v334 = vadd.f32 %v332, %v333
  %v335 = vrot.slane %v334, 2
  %v336 = vadd.f32 %v334, %v335
  %v337 = vrot.slane %v336, 1
  %v338 = vadd.f32 %v336, %v337
  %v339 = vmul.f32 %v338, 0.0078125
  %v340 = vadd.f32 %v339, 1e-05
  %v341 = vrsqrt.pop %v340
  %v342 = vmul.f32 %v270, %v341
  %v343 = vmul.f32 %v271, %v341
  %v344 = vmul.f32 %v272, %v341
  %v345 = vmul.f32 %v273, %v341
  %v346 = vmul.f32 %v274, %v341
  %v347 = vmul.f32 %v275, %v341
  %v348 = vmul.f32 %v276, %v341
  %v349 = vmul.f32 %v277, %v341
  %v350 = vmul.f32 %v278, %v341
  %v351 = vmul.f32 %v279, %v341
  %v352 = vmul.f32 %v280, %v341
  %v353 = vmul.f32 %v281, %v341
  %v354 = vmul.f32 %v282, %v341
  %v355 = vmul.f32 %v283, %v341
  %v356 = vmul.f32 %v284, %v341
  %v357 = vmul.f32 %v285, %v341
  %v359 = vlaneseq
  %v360 = vshrl.u32 %v359, 7
  %v361 = vsub.s32 0, %v360
  %v362 = vrot.slane %v229, %v361
  %v364 = vmul.f32 %v342, %v362
  %v365 = vmul.f32 %v343, %v362
  %v366 = vmul.f32 %v344, %v362
  %v367 = vmul.f32 %v345, %v362
  %v368 = vmul.f32 %v346, %v362
  %v369 = vmul.f32 %v347, %v362
  %v370 = vmul.f32 %v348, %v362
  %v371 = vmul.f32 %v349, %v362
  %v372 = vmul.f32 %v350, %v362
  %v373 = vmul.f32 %v351, %v362
  %v374 = vmul.f32 %v352, %v362
  %v375 = vmul.f32 %v353, %v362
  %v376 = vmul.f32 %v354, %v362
  %v377 = vmul.f32 %v355, %v362
  %v378 = vmul.f32 %v356, %v362
  %v379 = vmul.f32 %v357, %v362
  %v381 = vlaneseq
  %v382 = vshrl.u32 %v381, 7
  %v383 = vsub.s32 0, %v382
  %v384 = vrot.slane %v230, %v383
  %v386 = vadd.f32 %v364, %v384
  %v387 = vadd.f32 %v365, %v384
  %v388 = vadd.f32 %v366, %v384
  %v389 = vadd.f32 %v367, %v384
  %v390 = vadd.f32 %v368, %v384
  %v391 = vadd.f32 %v369, %v384
  %v392 = vadd.f32 %v370, %v384
  %v393 = vadd.f32 %v371, %v384
  %v394 = vadd.f32 %v372, %v384
  %v395 = vadd.f32 %v373, %v384
  %v396 = vadd.f32 %v374, %v384
  %v397 = vadd.f32 %v375, %v384
  %v398 = vadd.f32 %v376, %v384
  %v399 = vadd.f32 %v377, %v384
  %v400 = vadd.f32 %v378, %v384
  %v401 = vadd.f32 %v379, %v384
  %v402 = vmax.f32 %v386, 0.0
  %v403 = vmax.f32 %v387, 0.0
  %v404 = vmax.f32 %v388, 0.0
  %v405 = vmax.f32 %v389, 0.0
  %v406 = vmax.f32 %v390, 0.0
  %v407 = vmax.f32 %v391, 0.0
  %v408 = vmax.f32 %v392, 0.0
  %v409 = vmax.f32 %v393, 0.0
  %v410 = vmax.f32 %v394, 0.0
  %v411 = vmax.f32 %v395, 0.0
  %v412 = vmax.f32 %v396, 0.0
  %v413 = vmax.f32 %v397, 0.0
  %v414 = vmax.f32 %v398, 0.0
  %v415 = vmax.f32 %v399, 0.0
  %v416 = vmax.f32 %v400, 0.0
  %v417 = vmax.f32 %v401, 0.0
  %v418 = vpack.c.bf16 %v403, %v402
  %v419 = vpack.c.bf16 %v405, %v404
  %v420 = vpack.c.bf16 %v407, %v406
  %v421 = vpack.c.bf16 %v409, %v408
  %v422 = vpack.c.bf16 %v411, %v410
  %v423 = vpack.c.bf16 %v413, %v412
  %v424 = vpack.c.bf16 %v415, %v414
  %v425 = vpack.c.bf16 %v417, %v416
  %v426 = vld [vmem:[%s5] sm:$0xf]
  %v427 = vld [vmem:[%s5 + $0x4] sm:$0xf]
  %v428 = vld [vmem:[%s5 + $0x8] sm:$0xf]
  %v429 = vld [vmem:[%s5 + $0xc] sm:$0xf]
  %v434 = vunpack.c.l.b16 %v426
  %v435 = vunpack.c.l.b16 %v427
  %v436 = vunpack.c.l.b16 %v428
  %v437 = vunpack.c.l.b16 %v429
  %v438 = vpack.c.b16 %v435, %v434
  %v439 = vpack.c.b16 %v437, %v436
  %442 = vmatprep.subr.bf16.mxu0 0
  %443 = vmatpush1.bf16.msra.mxu0 %v418
  %444 = vmatprep.subr.bf16.mxu0 0
  %445 = vmatpush1.bf16.msra.mxu0 %v419
  %446 = vmatprep.subr.bf16.mxu0 0
  %447 = vmatpush1.bf16.msra.mxu0 %v420
  %448 = vmatprep.subr.bf16.mxu0 0
  %449 = vmatpush1.bf16.msra.mxu0 %v421
  %450 = vmatprep.subr.bf16.mxu0 0
  %451 = vmatpush1.bf16.msra.mxu0 %v422
  %452 = vmatprep.subr.bf16.mxu0 0
  %453 = vmatpush1.bf16.msra.mxu0 %v423
  %454 = vmatprep.subr.bf16.mxu0 0
  %455 = vmatpush1.bf16.msra.mxu0 %v424
  %456 = vmatprep.subr.bf16.mxu0 0
  %457 = vmatpush1.bf16.msra.mxu0 %v425
  %458 = vmatprep.subr.bf16.mxu0 0
  %459 = vmatpush1.bf16.msra.mxu0 0
  %460 = vmatprep.subr.bf16.mxu0 0
  %461 = vmatpush1.bf16.msra.mxu0 0
  %462 = vmatprep.subr.bf16.mxu0 0
  %463 = vmatpush1.bf16.msra.mxu0 0
  %464 = vmatprep.subr.bf16.mxu0 0
  %465 = vmatpush1.bf16.msra.mxu0 0
  %466 = vmatprep.subr.bf16.mxu0 0
  %467 = vmatpush1.bf16.msra.mxu0 0
  %468 = vmatprep.subr.bf16.mxu0 0
  %469 = vmatpush1.bf16.msra.mxu0 0
  %470 = vmatprep.subr.bf16.mxu0 0
  %471 = vmatpush1.bf16.msra.mxu0 0
  %472 = vmatprep.subr.bf16.mxu0 0
  %473 = vmatpush1.bf16.msra.mxu0 0
  %474 = vmatprep.mubr.bf16.mxu0 0
  %475 = vmatmul.mubr.bf16.gmra.mrb[0].mxu0 %v438
  %v476 = vpop.f32.mrb[0].mxu0
  %v477 = vadd.f32 0.0, %v476
  %v478 = vpop.f32.mrb[0].mxu0
  %v479 = vpop.f32.mrb[0].mxu0
  %v480 = vadd.f32 0.0, %v479
  %v481 = vpop.f32.mrb[0].mxu0
  %482 = vmatprep.mubr.bf16.mxu0 0
  %483 = vmatmul.mubr.bf16.gmra.mrb[0].mxu0 %v439
  %v484 = vpop.f32.mrb[0].mxu0
  %v485 = vadd.f32 0.0, %v484
  %v486 = vpop.f32.mrb[0].mxu0
  %v487 = vpop.f32.mrb[0].mxu0
  %v488 = vadd.f32 0.0, %v487
  %v489 = vpop.f32.mrb[0].mxu0
  %490 = vdwg.mxu0
  %v491 = vpack.c.bf16 %v480, %v477
  %v492 = vpack.c.bf16 %v488, %v485
  %v493 = vld [vmem:[%s6] sm:$0xf]
  %v494 = vld [vmem:[%s6 + $0x4] sm:$0xf]
  %v495 = vld [vmem:[%s6 + $0x8] sm:$0xf]
  %v496 = vld [vmem:[%s6 + $0xc] sm:$0xf]
  %s497 = scalar_lea.vmem %s5, 16
  %v498 = vld [vmem:[%s497] sm:$0xf]
  %v499 = vld [vmem:[%s497 + $0x4] sm:$0xf]
  %v500 = vld [vmem:[%s497 + $0x8] sm:$0xf]
  %v501 = vld [vmem:[%s497 + $0xc] sm:$0xf]
  %v506 = vunpack.c.l.b16 %v498
  %v507 = vunpack.c.l.b16 %v499
  %v508 = vunpack.c.l.b16 %v500
  %v509 = vunpack.c.l.b16 %v501
  %v510 = vpack.c.b16 %v507, %v506
  %v511 = vpack.c.b16 %v509, %v508
  %514 = vmatprep.subr.bf16.mxu0 0
  %515 = vmatpush1.bf16.msra.mxu0 %v418
  %516 = vmatprep.subr.bf16.mxu0 0
  %517 = vmatpush1.bf16.msra.mxu0 %v419
  %518 = vmatprep.subr.bf16.mxu0 0
  %519 = vmatpush1.bf16.msra.mxu0 %v420
  %520 = vmatprep.subr.bf16.mxu0 0
  %521 = vmatpush1.bf16.msra.mxu0 %v421
  %522 = vmatprep.subr.bf16.mxu0 0
  %523 = vmatpush1.bf16.msra.mxu0 %v422
  %524 = vmatprep.subr.bf16.mxu0 0
  %525 = vmatpush1.bf16.msra.mxu0 %v423
  %526 = vmatprep.subr.bf16.mxu0 0
  %527 = vmatpush1.bf16.msra.mxu0 %v424
  %528 = vmatprep.subr.bf16.mxu0 0
  %529 = vmatpush1.bf16.msra.mxu0 %v425
  %530 = vmatprep.subr.bf16.mxu0 0
  %531 = vmatpush1.bf16.msra.mxu0 0
  %532 = vmatprep.subr.bf16.mxu0 0
  %533 = vmatpush1.bf16.msra.mxu0 0
  %534 = vmatprep.subr.bf16.mxu0 0
  %535 = vmatpush1.bf16.msra.mxu0 0
  %536 = vmatprep.subr.bf16.mxu0 0
  %537 = vmatpush1.bf16.msra.mxu0 0
  %538 = vmatprep.subr.bf16.mxu0 0
  %539 = vmatpush1.bf16.msra.mxu0 0
  %540 = vmatprep.subr.bf16.mxu0 0
  %541 = vmatpush1.bf16.msra.mxu0 0
  %542 = vmatprep.subr.bf16.mxu0 0
  %543 = vmatpush1.bf16.msra.mxu0 0
  %544 = vmatprep.subr.bf16.mxu0 0
  %545 = vmatpush1.bf16.msra.mxu0 0
  %546 = vmatprep.mubr.bf16.mxu0 0
  %547 = vmatmul.mubr.bf16.gmra.mrb[0].mxu0 %v510
  %v548 = vpop.f32.mrb[0].mxu0
  %v549 = vadd.f32 0.0, %v548
  %v550 = vpop.f32.mrb[0].mxu0
  %v551 = vpop.f32.mrb[0].mxu0
  %v552 = vadd.f32 0.0, %v551
  %v553 = vpop.f32.mrb[0].mxu0
  %554 = vmatprep.mubr.bf16.mxu0 0
  %555 = vmatmul.mubr.bf16.gmra.mrb[0].mxu0 %v511
  %v556 = vpop.f32.mrb[0].mxu0
  %v557 = vadd.f32 0.0, %v556
  %v558 = vpop.f32.mrb[0].mxu0
  %v559 = vpop.f32.mrb[0].mxu0
  %v560 = vadd.f32 0.0, %v559
  %v561 = vpop.f32.mrb[0].mxu0
  %562 = vdwg.mxu0
  %v563 = vpack.c.bf16 %v552, %v549
  %v564 = vpack.c.bf16 %v560, %v557
  %s565 = scalar_lea.vmem %s6, 16
  %v566 = vld [vmem:[%s565] sm:$0xf]
  %v567 = vld [vmem:[%s565 + $0x4] sm:$0xf]
  %v568 = vld [vmem:[%s565 + $0x8] sm:$0xf]
  %v569 = vld [vmem:[%s565 + $0xc] sm:$0xf]
  %v574 = vunpack.c.l.b16 %v566
  %v575 = vunpack.c.l.b16 %v567
  %v576 = vunpack.c.l.b16 %v568
  %v577 = vunpack.c.l.b16 %v569
  %v578 = vpack.c.b16 %v575, %v574
  %v579 = vpack.c.b16 %v577, %v576
  %v583 = vsel %vm231, %v563, 0
  %v586 = vsel %vm231, %v564, 0
  %588 = vmatprep.subr.bf16.mxu0 0
  %589 = vmatpush1.bf16.msra.mxu0 %v578
  %590 = vmatprep.subr.bf16.mxu0 0
  %591 = vmatpush1.bf16.msra.mxu0 %v579
  %592 = vmatprep.subr.bf16.mxu0 0
  %593 = vmatpush1.bf16.msra.mxu0 0
  %594 = vmatprep.subr.bf16.mxu0 0
  %595 = vmatpush1.bf16.msra.mxu0 0
  %596 = vmatprep.subr.bf16.mxu0 0
  %597 = vmatpush1.bf16.msra.mxu0 0
  %598 = vmatprep.subr.bf16.mxu0 0
  %599 = vmatpush1.bf16.msra.mxu0 0
  %600 = vmatprep.subr.bf16.mxu0 0
  %601 = vmatpush1.bf16.msra.mxu0 0
  %602 = vmatprep.subr.bf16.mxu0 0
  %603 = vmatpush1.bf16.msra.mxu0 0
  %604 = vmatprep.subr.bf16.mxu0 0
  %605 = vmatpush1.bf16.msra.mxu0 0
  %606 = vmatprep.subr.bf16.mxu0 0
  %607 = vmatpush1.bf16.msra.mxu0 0
  %608 = vmatprep.subr.bf16.mxu0 0
  %609 = vmatpush1.bf16.msra.mxu0 0
  %610 = vmatprep.subr.bf16.mxu0 0
  %611 = vmatpush1.bf16.msra.mxu0 0
  %612 = vmatprep.subr.bf16.mxu0 0
  %613 = vmatpush1.bf16.msra.mxu0 0
  %614 = vmatprep.subr.bf16.mxu0 0
  %615 = vmatpush1.bf16.msra.mxu0 0
  %616 = vmatprep.subr.bf16.mxu0 0
  %617 = vmatpush1.bf16.msra.mxu0 0
  %618 = vmatprep.subr.bf16.mxu0 0
  %619 = vmatpush1.bf16.msra.mxu0 0
  %620 = vmatprep.mubr.bf16.mxu0 0
  %621 = vmatmul.mubr.bf16.gmra.mrb[0].mxu0 %v583
  %v622 = vpop.f32.mrb[0].mxu0
  %v623 = vadd.f32 0.0, %v622
  %v624 = vpop.f32.mrb[0].mxu0
  %v625 = vpop.f32.mrb[0].mxu0
  %v626 = vadd.f32 0.0, %v625
  %v627 = vpop.f32.mrb[0].mxu0
  %628 = vmatprep.mubr.bf16.mxu0 0
  %629 = vmatmul.mubr.bf16.gmra.mrb[0].mxu0 %v586
  %v630 = vpop.f32.mrb[0].mxu0
  %v631 = vadd.f32 0.0, %v630
  %v632 = vpop.f32.mrb[0].mxu0
  %v633 = vpop.f32.mrb[0].mxu0
  %v634 = vadd.f32 0.0, %v633
  %v635 = vpop.f32.mrb[0].mxu0
  %636 = vdwg.mxu0
  %v641 = vunpack.c.l.b16 %v493
  %v642 = vunpack.c.l.b16 %v494
  %v643 = vunpack.c.l.b16 %v495
  %v644 = vunpack.c.l.b16 %v496
  %v645 = vpack.c.b16 %v642, %v641
  %v646 = vpack.c.b16 %v644, %v643
  %v650 = vsel %vm231, %v491, 0
  %v653 = vsel %vm231, %v492, 0
  %655 = vmatprep.subr.bf16.mxu0 0
  %656 = vmatpush1.bf16.msra.mxu0 %v645
  %657 = vmatprep.subr.bf16.mxu0 0
  %658 = vmatpush1.bf16.msra.mxu0 %v646
  %659 = vmatprep.subr.bf16.mxu0 0
  %660 = vmatpush1.bf16.msra.mxu0 0
  %661 = vmatprep.subr.bf16.mxu0 0
  %662 = vmatpush1.bf16.msra.mxu0 0
  %663 = vmatprep.subr.bf16.mxu0 0
  %664 = vmatpush1.bf16.msra.mxu0 0
  %665 = vmatprep.subr.bf16.mxu0 0
  %666 = vmatpush1.bf16.msra.mxu0 0
  %667 = vmatprep.subr.bf16.mxu0 0
  %668 = vmatpush1.bf16.msra.mxu0 0
  %669 = vmatprep.subr.bf16.mxu0 0
  %670 = vmatpush1.bf16.msra.mxu0 0
  %671 = vmatprep.subr.bf16.mxu0 0
  %672 = vmatpush1.bf16.msra.mxu0 0
  %673 = vmatprep.subr.bf16.mxu0 0
  %674 = vmatpush1.bf16.msra.mxu0 0
  %675 = vmatprep.subr.bf16.mxu0 0
  %676 = vmatpush1.bf16.msra.mxu0 0
  %677 = vmatprep.subr.bf16.mxu0 0
  %678 = vmatpush1.bf16.msra.mxu0 0
  %679 = vmatprep.subr.bf16.mxu0 0
  %680 = vmatpush1.bf16.msra.mxu0 0
  %681 = vmatprep.subr.bf16.mxu0 0
  %682 = vmatpush1.bf16.msra.mxu0 0
  %683 = vmatprep.subr.bf16.mxu0 0
  %684 = vmatpush1.bf16.msra.mxu0 0
  %685 = vmatprep.subr.bf16.mxu0 0
  %686 = vmatpush1.bf16.msra.mxu0 0
  %687 = vmatprep.mubr.bf16.mxu0 0
  %688 = vmatmul.mubr.bf16.gmra.mrb[0].mxu0 %v650
  %v689 = vpop.f32.mrb[0].mxu0
  %v690 = vadd.f32 %v623, %v689
  %v691 = vpop.f32.mrb[0].mxu0
  %v692 = vpop.f32.mrb[0].mxu0
  %v693 = vadd.f32 %v626, %v692
  %v694 = vpop.f32.mrb[0].mxu0
  %695 = vmatprep.mubr.bf16.mxu0 0
  %696 = vmatmul.mubr.bf16.gmra.mrb[0].mxu0 %v653
  %v697 = vpop.f32.mrb[0].mxu0
  %v698 = vadd.f32 %v631, %v697
  %v699 = vpop.f32.mrb[0].mxu0
  %v700 = vpop.f32.mrb[0].mxu0
  %v701 = vadd.f32 %v634, %v700
  %v702 = vpop.f32.mrb[0].mxu0
  %703 = vdwg.mxu0
  %s704 = scalar_lea.vmem %s5, 32
  %v705 = vld [vmem:[%s704] sm:$0xf]
  %v706 = vld [vmem:[%s704 + $0x4] sm:$0xf]
  %v707 = vld [vmem:[%s704 + $0x8] sm:$0xf]
  %v708 = vld [vmem:[%s704 + $0xc] sm:$0xf]
  %v713 = vunpack.c.l.b16 %v705
  %v714 = vunpack.c.l.b16 %v706
  %v715 = vunpack.c.l.b16 %v707
  %v716 = vunpack.c.l.b16 %v708
  %v717 = vpack.c.b16 %v714, %v713
  %v718 = vpack.c.b16 %v716, %v715
  %721 = vmatprep.subr.bf16.mxu0 0
  %722 = vmatpush1.bf16.msra.mxu0 %v418
  %723 = vmatprep.subr.bf16.mxu0 0
  %724 = vmatpush1.bf16.msra.mxu0 %v419
  %725 = vmatprep.subr.bf16.mxu0 0
  %726 = vmatpush1.bf16.msra.mxu0 %v420
  %727 = vmatprep.subr.bf16.mxu0 0
  %728 = vmatpush1.bf16.msra.mxu0 %v421
  %729 = vmatprep.subr.bf16.mxu0 0
  %730 = vmatpush1.bf16.msra.mxu0 %v422
  %731 = vmatprep.subr.bf16.mxu0 0
  %732 = vmatpush1.bf16.msra.mxu0 %v423
  %733 = vmatprep.subr.bf16.mxu0 0
  %734 = vmatpush1.bf16.msra.mxu0 %v424
  %735 = vmatprep.subr.bf16.mxu0 0
  %736 = vmatpush1.bf16.msra.mxu0 %v425
  %737 = vmatprep.subr.bf16.mxu0 0
  %738 = vmatpush1.bf16.msra.mxu0 0
  %739 = vmatprep.subr.bf16.mxu0 0
  %740 = vmatpush1.bf16.msra.mxu0 0
  %741 = vmatprep.subr.bf16.mxu0 0
  %742 = vmatpush1.bf16.msra.mxu0 0
  %743 = vmatprep.subr.bf16.mxu0 0
  %744 = vmatpush1.bf16.msra.mxu0 0
  %745 = vmatprep.subr.bf16.mxu0 0
  %746 = vmatpush1.bf16.msra.mxu0 0
  %747 = vmatprep.subr.bf16.mxu0 0
  %748 = vmatpush1.bf16.msra.mxu0 0
  %749 = vmatprep.subr.bf16.mxu0 0
  %750 = vmatpush1.bf16.msra.mxu0 0
  %751 = vmatprep.subr.bf16.mxu0 0
  %752 = vmatpush1.bf16.msra.mxu0 0
  %753 = vmatprep.mubr.bf16.mxu0 0
  %754 = vmatmul.mubr.bf16.gmra.mrb[0].mxu0 %v717
  %v755 = vpop.f32.mrb[0].mxu0
  %v756 = vadd.f32 0.0, %v755
  %v757 = vpop.f32.mrb[0].mxu0
  %v758 = vpop.f32.mrb[0].mxu0
  %v759 = vadd.f32 0.0, %v758
  %v760 = vpop.f32.mrb[0].mxu0
  %761 = vmatprep.mubr.bf16.mxu0 0
  %762 = vmatmul.mubr.bf16.gmra.mrb[0].mxu0 %v718
  %v763 = vpop.f32.mrb[0].mxu0
  %v764 = vadd.f32 0.0, %v763
  %v765 = vpop.f32.mrb[0].mxu0
  %v766 = vpop.f32.mrb[0].mxu0
  %v767 = vadd.f32 0.0, %v766
  %v768 = vpop.f32.mrb[0].mxu0
  %769 = vdwg.mxu0
  %v770 = vpack.c.bf16 %v759, %v756
  %v771 = vpack.c.bf16 %v767, %v764
  %s772 = scalar_lea.vmem %s6, 32
  %v773 = vld [vmem:[%s772] sm:$0xf]
  %v774 = vld [vmem:[%s772 + $0x4] sm:$0xf]
  %v775 = vld [vmem:[%s772 + $0x8] sm:$0xf]
  %v776 = vld [vmem:[%s772 + $0xc] sm:$0xf]
  %v781 = vunpack.c.l.b16 %v773
  %v782 = vunpack.c.l.b16 %v774
  %v783 = vunpack.c.l.b16 %v775
  %v784 = vunpack.c.l.b16 %v776
  %v785 = vpack.c.b16 %v782, %v781
  %v786 = vpack.c.b16 %v784, %v783
  %v790 = vsel %vm231, %v770, 0
  %v793 = vsel %vm231, %v771, 0
  %795 = vmatprep.subr.bf16.mxu0 0
  %796 = vmatpush1.bf16.msra.mxu0 %v785
  %797 = vmatprep.subr.bf16.mxu0 0
  %798 = vmatpush1.bf16.msra.mxu0 %v786
  %799 = vmatprep.subr.bf16.mxu0 0
  %800 = vmatpush1.bf16.msra.mxu0 0
  %801 = vmatprep.subr.bf16.mxu0 0
  %802 = vmatpush1.bf16.msra.mxu0 0
  %803 = vmatprep.subr.bf16.mxu0 0
  %804 = vmatpush1.bf16.msra.mxu0 0
  %805 = vmatprep.subr.bf16.mxu0 0
  %806 = vmatpush1.bf16.msra.mxu0 0
  %807 = vmatprep.subr.bf16.mxu0 0
  %808 = vmatpush1.bf16.msra.mxu0 0
  %809 = vmatprep.subr.bf16.mxu0 0
  %810 = vmatpush1.bf16.msra.mxu0 0
  %811 = vmatprep.subr.bf16.mxu0 0
  %812 = vmatpush1.bf16.msra.mxu0 0
  %813 = vmatprep.subr.bf16.mxu0 0
  %814 = vmatpush1.bf16.msra.mxu0 0
  %815 = vmatprep.subr.bf16.mxu0 0
  %816 = vmatpush1.bf16.msra.mxu0 0
  %817 = vmatprep.subr.bf16.mxu0 0
  %818 = vmatpush1.bf16.msra.mxu0 0
  %819 = vmatprep.subr.bf16.mxu0 0
  %820 = vmatpush1.bf16.msra.mxu0 0
  %821 = vmatprep.subr.bf16.mxu0 0
  %822 = vmatpush1.bf16.msra.mxu0 0
  %823 = vmatprep.subr.bf16.mxu0 0
  %824 = vmatpush1.bf16.msra.mxu0 0
  %825 = vmatprep.subr.bf16.mxu0 0
  %826 = vmatpush1.bf16.msra.mxu0 0
  %827 = vmatprep.mubr.bf16.mxu0 0
  %828 = vmatmul.mubr.bf16.gmra.mrb[0].mxu0 %v790
  %v829 = vpop.f32.mrb[0].mxu0
  %v830 = vadd.f32 0.0, %v829
  %v831 = vpop.f32.mrb[0].mxu0
  %v832 = vpop.f32.mrb[0].mxu0
  %v833 = vadd.f32 0.0, %v832
  %v834 = vpop.f32.mrb[0].mxu0
  %835 = vmatprep.mubr.bf16.mxu0 0
  %836 = vmatmul.mubr.bf16.gmra.mrb[0].mxu0 %v793
  %v837 = vpop.f32.mrb[0].mxu0
  %v838 = vadd.f32 0.0, %v837
  %v839 = vpop.f32.mrb[0].mxu0
  %v840 = vpop.f32.mrb[0].mxu0
  %v841 = vadd.f32 0.0, %v840
  %v842 = vpop.f32.mrb[0].mxu0
  %843 = vdwg.mxu0
  %v844 = vadd.f32 %v690, %v830
  %v845 = vadd.f32 %v693, %v833
  %v846 = vadd.f32 %v698, %v838
  %v847 = vadd.f32 %v701, %v841
  %s848 = scalar_lea.vmem %s5, 48
  %v849 = vld [vmem:[%s848] sm:$0xf]
  %v850 = vld [vmem:[%s848 + $0x4] sm:$0xf]
  %v851 = vld [vmem:[%s848 + $0x8] sm:$0xf]
  %v852 = vld [vmem:[%s848 + $0xc] sm:$0xf]
  %v857 = vunpack.c.l.b16 %v849
  %v858 = vunpack.c.l.b16 %v850
  %v859 = vunpack.c.l.b16 %v851
  %v860 = vunpack.c.l.b16 %v852
  %v861 = vpack.c.b16 %v858, %v857
  %v862 = vpack.c.b16 %v860, %v859
  %865 = vmatprep.subr.bf16.mxu0 0
  %866 = vmatpush1.bf16.msra.mxu0 %v418
  %867 = vmatprep.subr.bf16.mxu0 0
  %868 = vmatpush1.bf16.msra.mxu0 %v419
  %869 = vmatprep.subr.bf16.mxu0 0
  %870 = vmatpush1.bf16.msra.mxu0 %v420
  %871 = vmatprep.subr.bf16.mxu0 0
  %872 = vmatpush1.bf16.msra.mxu0 %v421
  %873 = vmatprep.subr.bf16.mxu0 0
  %874 = vmatpush1.bf16.msra.mxu0 %v422
  %875 = vmatprep.subr.bf16.mxu0 0
  %876 = vmatpush1.bf16.msra.mxu0 %v423
  %877 = vmatprep.subr.bf16.mxu0 0
  %878 = vmatpush1.bf16.msra.mxu0 %v424
  %879 = vmatprep.subr.bf16.mxu0 0
  %880 = vmatpush1.bf16.msra.mxu0 %v425
  %881 = vmatprep.subr.bf16.mxu0 0
  %882 = vmatpush1.bf16.msra.mxu0 0
  %883 = vmatprep.subr.bf16.mxu0 0
  %884 = vmatpush1.bf16.msra.mxu0 0
  %885 = vmatprep.subr.bf16.mxu0 0
  %886 = vmatpush1.bf16.msra.mxu0 0
  %887 = vmatprep.subr.bf16.mxu0 0
  %888 = vmatpush1.bf16.msra.mxu0 0
  %889 = vmatprep.subr.bf16.mxu0 0
  %890 = vmatpush1.bf16.msra.mxu0 0
  %891 = vmatprep.subr.bf16.mxu0 0
  %892 = vmatpush1.bf16.msra.mxu0 0
  %893 = vmatprep.subr.bf16.mxu0 0
  %894 = vmatpush1.bf16.msra.mxu0 0
  %895 = vmatprep.subr.bf16.mxu0 0
  %896 = vmatpush1.bf16.msra.mxu0 0
  %897 = vmatprep.mubr.bf16.mxu0 0
  %898 = vmatmul.mubr.bf16.gmra.mrb[0].mxu0 %v861
  %v899 = vpop.f32.mrb[0].mxu0
  %v900 = vadd.f32 0.0, %v899
  %v901 = vpop.f32.mrb[0].mxu0
  %v902 = vpop.f32.mrb[0].mxu0
  %v903 = vadd.f32 0.0, %v902
  %v904 = vpop.f32.mrb[0].mxu0
  %905 = vmatprep.mubr.bf16.mxu0 0
  %906 = vmatmul.mubr.bf16.gmra.mrb[0].mxu0 %v862
  %v907 = vpop.f32.mrb[0].mxu0
  %v908 = vadd.f32 0.0, %v907
  %v909 = vpop.f32.mrb[0].mxu0
  %v910 = vpop.f32.mrb[0].mxu0
  %v911 = vadd.f32 0.0, %v910
  %v912 = vpop.f32.mrb[0].mxu0
  %913 = vdwg.mxu0
  %v914 = vpack.c.bf16 %v903, %v900
  %v915 = vpack.c.bf16 %v911, %v908
  %s916 = scalar_lea.vmem %s6, 48
  %v917 = vld [vmem:[%s916] sm:$0xf]
  %v918 = vld [vmem:[%s916 + $0x4] sm:$0xf]
  %v919 = vld [vmem:[%s916 + $0x8] sm:$0xf]
  %v920 = vld [vmem:[%s916 + $0xc] sm:$0xf]
  %v925 = vunpack.c.l.b16 %v917
  %v926 = vunpack.c.l.b16 %v918
  %v927 = vunpack.c.l.b16 %v919
  %v928 = vunpack.c.l.b16 %v920
  %v929 = vpack.c.b16 %v926, %v925
  %v930 = vpack.c.b16 %v928, %v927
  %v934 = vsel %vm231, %v914, 0
  %v937 = vsel %vm231, %v915, 0
  %939 = vmatprep.subr.bf16.mxu0 0
  %940 = vmatpush1.bf16.msra.mxu0 %v929
  %941 = vmatprep.subr.bf16.mxu0 0
  %942 = vmatpush1.bf16.msra.mxu0 %v930
  %943 = vmatprep.subr.bf16.mxu0 0
  %944 = vmatpush1.bf16.msra.mxu0 0
  %945 = vmatprep.subr.bf16.mxu0 0
  %946 = vmatpush1.bf16.msra.mxu0 0
  %947 = vmatprep.subr.bf16.mxu0 0
  %948 = vmatpush1.bf16.msra.mxu0 0
  %949 = vmatprep.subr.bf16.mxu0 0
  %950 = vmatpush1.bf16.msra.mxu0 0
  %951 = vmatprep.subr.bf16.mxu0 0
  %952 = vmatpush1.bf16.msra.mxu0 0
  %953 = vmatprep.subr.bf16.mxu0 0
  %954 = vmatpush1.bf16.msra.mxu0 0
  %955 = vmatprep.subr.bf16.mxu0 0
  %956 = vmatpush1.bf16.msra.mxu0 0
  %957 = vmatprep.subr.bf16.mxu0 0
  %958 = vmatpush1.bf16.msra.mxu0 0
  %959 = vmatprep.subr.bf16.mxu0 0
  %960 = vmatpush1.bf16.msra.mxu0 0
  %961 = vmatprep.subr.bf16.mxu0 0
  %962 = vmatpush1.bf16.msra.mxu0 0
  %963 = vmatprep.subr.bf16.mxu0 0
  %964 = vmatpush1.bf16.msra.mxu0 0
  %965 = vmatprep.subr.bf16.mxu0 0
  %966 = vmatpush1.bf16.msra.mxu0 0
  %967 = vmatprep.subr.bf16.mxu0 0
  %968 = vmatpush1.bf16.msra.mxu0 0
  %969 = vmatprep.subr.bf16.mxu0 0
  %970 = vmatpush1.bf16.msra.mxu0 0
  %971 = vmatprep.mubr.bf16.mxu0 0
  %972 = vmatmul.mubr.bf16.gmra.mrb[0].mxu0 %v934
  %v973 = vpop.f32.mrb[0].mxu0
  %v974 = vadd.f32 0.0, %v973
  %v975 = vpop.f32.mrb[0].mxu0
  %v976 = vpop.f32.mrb[0].mxu0
  %v977 = vadd.f32 0.0, %v976
  %v978 = vpop.f32.mrb[0].mxu0
  %979 = vmatprep.mubr.bf16.mxu0 0
  %980 = vmatmul.mubr.bf16.gmra.mrb[0].mxu0 %v937
  %v981 = vpop.f32.mrb[0].mxu0
  %v982 = vadd.f32 0.0, %v981
  %v983 = vpop.f32.mrb[0].mxu0
  %v984 = vpop.f32.mrb[0].mxu0
  %v985 = vadd.f32 0.0, %v984
  %v986 = vpop.f32.mrb[0].mxu0
  %987 = vdwg.mxu0
  %v988 = vadd.f32 %v844, %v974
  %v989 = vadd.f32 %v845, %v977
  %v990 = vadd.f32 %v846, %v982
  %v991 = vadd.f32 %v847, %v985
  %s992 = scalar_lea.vmem %s5, 64
  %v993 = vld [vmem:[%s992] sm:$0xf]
  %v994 = vld [vmem:[%s992 + $0x4] sm:$0xf]
  %v995 = vld [vmem:[%s992 + $0x8] sm:$0xf]
  %v996 = vld [vmem:[%s992 + $0xc] sm:$0xf]
  %v1001 = vunpack.c.l.b16 %v993
  %v1002 = vunpack.c.l.b16 %v994
  %v1003 = vunpack.c.l.b16 %v995
  %v1004 = vunpack.c.l.b16 %v996
  %v1005 = vpack.c.b16 %v1002, %v1001
  %v1006 = vpack.c.b16 %v1004, %v1003
  %1009 = vmatprep.subr.bf16.mxu0 0
  %1010 = vmatpush1.bf16.msra.mxu0 %v418
  %1011 = vmatprep.subr.bf16.mxu0 0
  %1012 = vmatpush1.bf16.msra.mxu0 %v419
  %1013 = vmatprep.subr.bf16.mxu0 0
  %1014 = vmatpush1.bf16.msra.mxu0 %v420
  %1015 = vmatprep.subr.bf16.mxu0 0
  %1016 = vmatpush1.bf16.msra.mxu0 %v421
  %1017 = vmatprep.subr.bf16.mxu0 0
  %1018 = vmatpush1.bf16.msra.mxu0 %v422
  %1019 = vmatprep.subr.bf16.mxu0 0
  %1020 = vmatpush1.bf16.msra.mxu0 %v423
  %1021 = vmatprep.subr.bf16.mxu0 0
  %1022 = vmatpush1.bf16.msra.mxu0 %v424
  %1023 = vmatprep.subr.bf16.mxu0 0
  %1024 = vmatpush1.bf16.msra.mxu0 %v425
  %1025 = vmatprep.subr.bf16.mxu0 0
  %1026 = vmatpush1.bf16.msra.mxu0 0
  %1027 = vmatprep.subr.bf16.mxu0 0
  %1028 = vmatpush1.bf16.msra.mxu0 0
  %1029 = vmatprep.subr.bf16.mxu0 0
  %1030 = vmatpush1.bf16.msra.mxu0 0
  %1031 = vmatprep.subr.bf16.mxu0 0
  %1032 = vmatpush1.bf16.msra.mxu0 0
  %1033 = vmatprep.subr.bf16.mxu0 0
  %1034 = vmatpush1.bf16.msra.mxu0 0
  %1035 = vmatprep.subr.bf16.mxu0 0
  %1036 = vmatpush1.bf16.msra.mxu0 0
  %1037 = vmatprep.subr.bf16.mxu0 0
  %1038 = vmatpush1.bf16.msra.mxu0 0
  %1039 = vmatprep.subr.bf16.mxu0 0
  %1040 = vmatpush1.bf16.msra.mxu0 0
  %1041 = vmatprep.mubr.bf16.mxu0 0
  %1042 = vmatmul.mubr.bf16.gmra.mrb[0].mxu0 %v1005
  %v1043 = vpop.f32.mrb[0].mxu0
  %v1044 = vadd.f32 0.0, %v1043
  %v1045 = vpop.f32.mrb[0].mxu0
  %v1046 = vpop.f32.mrb[0].mxu0
  %v1047 = vadd.f32 0.0, %v1046
  %v1048 = vpop.f32.mrb[0].mxu0
  %1049 = vmatprep.mubr.bf16.mxu0 0
  %1050 = vmatmul.mubr.bf16.gmra.mrb[0].mxu0 %v1006
  %v1051 = vpop.f32.mrb[0].mxu0
  %v1052 = vadd.f32 0.0, %v1051
  %v1053 = vpop.f32.mrb[0].mxu0
  %v1054 = vpop.f32.mrb[0].mxu0
  %v1055 = vadd.f32 0.0, %v1054
  %v1056 = vpop.f32.mrb[0].mxu0
  %1057 = vdwg.mxu0
  %v1058 = vpack.c.bf16 %v1047, %v1044
  %v1059 = vpack.c.bf16 %v1055, %v1052
  %s1060 = scalar_lea.vmem %s6, 64
  %v1061 = vld [vmem:[%s1060] sm:$0xf]
  %v1062 = vld [vmem:[%s1060 + $0x4] sm:$0xf]
  %v1063 = vld [vmem:[%s1060 + $0x8] sm:$0xf]
  %v1064 = vld [vmem:[%s1060 + $0xc] sm:$0xf]
  %v1069 = vunpack.c.l.b16 %v1061
  %v1070 = vunpack.c.l.b16 %v1062
  %v1071 = vunpack.c.l.b16 %v1063
  %v1072 = vunpack.c.l.b16 %v1064
  %v1073 = vpack.c.b16 %v1070, %v1069
  %v1074 = vpack.c.b16 %v1072, %v1071
  %v1078 = vsel %vm231, %v1058, 0
  %v1081 = vsel %vm231, %v1059, 0
  %1083 = vmatprep.subr.bf16.mxu0 0
  %1084 = vmatpush1.bf16.msra.mxu0 %v1073
  %1085 = vmatprep.subr.bf16.mxu0 0
  %1086 = vmatpush1.bf16.msra.mxu0 %v1074
  %1087 = vmatprep.subr.bf16.mxu0 0
  %1088 = vmatpush1.bf16.msra.mxu0 0
  %1089 = vmatprep.subr.bf16.mxu0 0
  %1090 = vmatpush1.bf16.msra.mxu0 0
  %1091 = vmatprep.subr.bf16.mxu0 0
  %1092 = vmatpush1.bf16.msra.mxu0 0
  %1093 = vmatprep.subr.bf16.mxu0 0
  %1094 = vmatpush1.bf16.msra.mxu0 0
  %1095 = vmatprep.subr.bf16.mxu0 0
  %1096 = vmatpush1.bf16.msra.mxu0 0
  %1097 = vmatprep.subr.bf16.mxu0 0
  %1098 = vmatpush1.bf16.msra.mxu0 0
  %1099 = vmatprep.subr.bf16.mxu0 0
  %1100 = vmatpush1.bf16.msra.mxu0 0
  %1101 = vmatprep.subr.bf16.mxu0 0
  %1102 = vmatpush1.bf16.msra.mxu0 0
  %1103 = vmatprep.subr.bf16.mxu0 0
  %1104 = vmatpush1.bf16.msra.mxu0 0
  %1105 = vmatprep.subr.bf16.mxu0 0
  %1106 = vmatpush1.bf16.msra.mxu0 0
  %1107 = vmatprep.subr.bf16.mxu0 0
  %1108 = vmatpush1.bf16.msra.mxu0 0
  %1109 = vmatprep.subr.bf16.mxu0 0
  %1110 = vmatpush1.bf16.msra.mxu0 0
  %1111 = vmatprep.subr.bf16.mxu0 0
  %1112 = vmatpush1.bf16.msra.mxu0 0
  %1113 = vmatprep.subr.bf16.mxu0 0
  %1114 = vmatpush1.bf16.msra.mxu0 0
  %1115 = vmatprep.mubr.bf16.mxu0 0
  %1116 = vmatmul.mubr.bf16.gmra.mrb[0].mxu0 %v1078
  %v1117 = vpop.f32.mrb[0].mxu0
  %v1118 = vadd.f32 0.0, %v1117
  %v1119 = vpop.f32.mrb[0].mxu0
  %v1120 = vpop.f32.mrb[0].mxu0
  %v1121 = vadd.f32 0.0, %v1120
  %v1122 = vpop.f32.mrb[0].mxu0
  %1123 = vmatprep.mubr.bf16.mxu0 0
  %1124 = vmatmul.mubr.bf16.gmra.mrb[0].mxu0 %v1081
  %v1125 = vpop.f32.mrb[0].mxu0
  %v1126 = vadd.f32 0.0, %v1125
  %v1127 = vpop.f32.mrb[0].mxu0
  %v1128 = vpop.f32.mrb[0].mxu0
  %v1129 = vadd.f32 0.0, %v1128
  %v1130 = vpop.f32.mrb[0].mxu0
  %1131 = vdwg.mxu0
  %v1132 = vadd.f32 %v988, %v1118
  %v1133 = vadd.f32 %v989, %v1121
  %v1134 = vadd.f32 %v990, %v1126
  %v1135 = vadd.f32 %v991, %v1129
  %s1136 = scalar_lea.vmem %s5, 80
  %v1137 = vld [vmem:[%s1136] sm:$0xf]
  %v1138 = vld [vmem:[%s1136 + $0x4] sm:$0xf]
  %v1139 = vld [vmem:[%s1136 + $0x8] sm:$0xf]
  %v1140 = vld [vmem:[%s1136 + $0xc] sm:$0xf]
  %v1145 = vunpack.c.l.b16 %v1137
  %v1146 = vunpack.c.l.b16 %v1138
  %v1147 = vunpack.c.l.b16 %v1139
  %v1148 = vunpack.c.l.b16 %v1140
  %v1149 = vpack.c.b16 %v1146, %v1145
  %v1150 = vpack.c.b16 %v1148, %v1147
  %1153 = vmatprep.subr.bf16.mxu0 0
  %1154 = vmatpush1.bf16.msra.mxu0 %v418
  %1155 = vmatprep.subr.bf16.mxu0 0
  %1156 = vmatpush1.bf16.msra.mxu0 %v419
  %1157 = vmatprep.subr.bf16.mxu0 0
  %1158 = vmatpush1.bf16.msra.mxu0 %v420
  %1159 = vmatprep.subr.bf16.mxu0 0
  %1160 = vmatpush1.bf16.msra.mxu0 %v421
  %1161 = vmatprep.subr.bf16.mxu0 0
  %1162 = vmatpush1.bf16.msra.mxu0 %v422
  %1163 = vmatprep.subr.bf16.mxu0 0
  %1164 = vmatpush1.bf16.msra.mxu0 %v423
  %1165 = vmatprep.subr.bf16.mxu0 0
  %1166 = vmatpush1.bf16.msra.mxu0 %v424
  %1167 = vmatprep.subr.bf16.mxu0 0
  %1168 = vmatpush1.bf16.msra.mxu0 %v425
  %1169 = vmatprep.subr.bf16.mxu0 0
  %1170 = vmatpush1.bf16.msra.mxu0 0
  %1171 = vmatprep.subr.bf16.mxu0 0
  %1172 = vmatpush1.bf16.msra.mxu0 0
  %1173 = vmatprep.subr.bf16.mxu0 0
  %1174 = vmatpush1.bf16.msra.mxu0 0
  %1175 = vmatprep.subr.bf16.mxu0 0
  %1176 = vmatpush1.bf16.msra.mxu0 0
  %1177 = vmatprep.subr.bf16.mxu0 0
  %1178 = vmatpush1.bf16.msra.mxu0 0
  %1179 = vmatprep.subr.bf16.mxu0 0
  %1180 = vmatpush1.bf16.msra.mxu0 0
  %1181 = vmatprep.subr.bf16.mxu0 0
  %1182 = vmatpush1.bf16.msra.mxu0 0
  %1183 = vmatprep.subr.bf16.mxu0 0
  %1184 = vmatpush1.bf16.msra.mxu0 0
  %1185 = vmatprep.mubr.bf16.mxu0 0
  %1186 = vmatmul.mubr.bf16.gmra.mrb[0].mxu0 %v1149
  %v1187 = vpop.f32.mrb[0].mxu0
  %v1188 = vadd.f32 0.0, %v1187
  %v1189 = vpop.f32.mrb[0].mxu0
  %v1190 = vpop.f32.mrb[0].mxu0
  %v1191 = vadd.f32 0.0, %v1190
  %v1192 = vpop.f32.mrb[0].mxu0
  %1193 = vmatprep.mubr.bf16.mxu0 0
  %1194 = vmatmul.mubr.bf16.gmra.mrb[0].mxu0 %v1150
  %v1195 = vpop.f32.mrb[0].mxu0
  %v1196 = vadd.f32 0.0, %v1195
  %v1197 = vpop.f32.mrb[0].mxu0
  %v1198 = vpop.f32.mrb[0].mxu0
  %v1199 = vadd.f32 0.0, %v1198
  %v1200 = vpop.f32.mrb[0].mxu0
  %1201 = vdwg.mxu0
  %v1202 = vpack.c.bf16 %v1191, %v1188
  %v1203 = vpack.c.bf16 %v1199, %v1196
  %s1204 = scalar_lea.vmem %s6, 80
  %v1205 = vld [vmem:[%s1204] sm:$0xf]
  %v1206 = vld [vmem:[%s1204 + $0x4] sm:$0xf]
  %v1207 = vld [vmem:[%s1204 + $0x8] sm:$0xf]
  %v1208 = vld [vmem:[%s1204 + $0xc] sm:$0xf]
  %v1213 = vunpack.c.l.b16 %v1205
  %v1214 = vunpack.c.l.b16 %v1206
  %v1215 = vunpack.c.l.b16 %v1207
  %v1216 = vunpack.c.l.b16 %v1208
  %v1217 = vpack.c.b16 %v1214, %v1213
  %v1218 = vpack.c.b16 %v1216, %v1215
  %v1222 = vsel %vm231, %v1202, 0
  %v1225 = vsel %vm231, %v1203, 0
  %1227 = vmatprep.subr.bf16.mxu0 0
  %1228 = vmatpush1.bf16.msra.mxu0 %v1217
  %1229 = vmatprep.subr.bf16.mxu0 0
  %1230 = vmatpush1.bf16.msra.mxu0 %v1218
  %1231 = vmatprep.subr.bf16.mxu0 0
  %1232 = vmatpush1.bf16.msra.mxu0 0
  %1233 = vmatprep.subr.bf16.mxu0 0
  %1234 = vmatpush1.bf16.msra.mxu0 0
  %1235 = vmatprep.subr.bf16.mxu0 0
  %1236 = vmatpush1.bf16.msra.mxu0 0
  %1237 = vmatprep.subr.bf16.mxu0 0
  %1238 = vmatpush1.bf16.msra.mxu0 0
  %1239 = vmatprep.subr.bf16.mxu0 0
  %1240 = vmatpush1.bf16.msra.mxu0 0
  %1241 = vmatprep.subr.bf16.mxu0 0
  %1242 = vmatpush1.bf16.msra.mxu0 0
  %1243 = vmatprep.subr.bf16.mxu0 0
  %1244 = vmatpush1.bf16.msra.mxu0 0
  %1245 = vmatprep.subr.bf16.mxu0 0
  %1246 = vmatpush1.bf16.msra.mxu0 0
  %1247 = vmatprep.subr.bf16.mxu0 0
  %1248 = vmatpush1.bf16.msra.mxu0 0
  %1249 = vmatprep.subr.bf16.mxu0 0
  %1250 = vmatpush1.bf16.msra.mxu0 0
  %1251 = vmatprep.subr.bf16.mxu0 0
  %1252 = vmatpush1.bf16.msra.mxu0 0
  %1253 = vmatprep.subr.bf16.mxu0 0
  %1254 = vmatpush1.bf16.msra.mxu0 0
  %1255 = vmatprep.subr.bf16.mxu0 0
  %1256 = vmatpush1.bf16.msra.mxu0 0
  %1257 = vmatprep.subr.bf16.mxu0 0
  %1258 = vmatpush1.bf16.msra.mxu0 0
  %1259 = vmatprep.mubr.bf16.mxu0 0
  %1260 = vmatmul.mubr.bf16.gmra.mrb[0].mxu0 %v1222
  %v1261 = vpop.f32.mrb[0].mxu0
  %v1262 = vadd.f32 0.0, %v1261
  %v1263 = vpop.f32.mrb[0].mxu0
  %v1264 = vpop.f32.mrb[0].mxu0
  %v1265 = vadd.f32 0.0, %v1264
  %v1266 = vpop.f32.mrb[0].mxu0
  %1267 = vmatprep.mubr.bf16.mxu0 0
  %1268 = vmatmul.mubr.bf16.gmra.mrb[0].mxu0 %v1225
  %v1269 = vpop.f32.mrb[0].mxu0
  %v1270 = vadd.f32 0.0, %v1269
  %v1271 = vpop.f32.mrb[0].mxu0
  %v1272 = vpop.f32.mrb[0].mxu0
  %v1273 = vadd.f32 0.0, %v1272
  %v1274 = vpop.f32.mrb[0].mxu0
  %1275 = vdwg.mxu0
  %v1276 = vadd.f32 %v1132, %v1262
  %v1277 = vadd.f32 %v1133, %v1265
  %v1278 = vadd.f32 %v1134, %v1270
  %v1279 = vadd.f32 %v1135, %v1273
  %s1280 = scalar_lea.vmem %s5, 96
  %v1281 = vld [vmem:[%s1280] sm:$0xf]
  %v1282 = vld [vmem:[%s1280 + $0x4] sm:$0xf]
  %v1283 = vld [vmem:[%s1280 + $0x8] sm:$0xf]
  %v1284 = vld [vmem:[%s1280 + $0xc] sm:$0xf]
  %v1289 = vunpack.c.l.b16 %v1281
  %v1290 = vunpack.c.l.b16 %v1282
  %v1291 = vunpack.c.l.b16 %v1283
  %v1292 = vunpack.c.l.b16 %v1284
  %v1293 = vpack.c.b16 %v1290, %v1289
  %v1294 = vpack.c.b16 %v1292, %v1291
  %1297 = vmatprep.subr.bf16.mxu0 0
  %1298 = vmatpush1.bf16.msra.mxu0 %v418
  %1299 = vmatprep.subr.bf16.mxu0 0
  %1300 = vmatpush1.bf16.msra.mxu0 %v419
  %1301 = vmatprep.subr.bf16.mxu0 0
  %1302 = vmatpush1.bf16.msra.mxu0 %v420
  %1303 = vmatprep.subr.bf16.mxu0 0
  %1304 = vmatpush1.bf16.msra.mxu0 %v421
  %1305 = vmatprep.subr.bf16.mxu0 0
  %1306 = vmatpush1.bf16.msra.mxu0 %v422
  %1307 = vmatprep.subr.bf16.mxu0 0
  %1308 = vmatpush1.bf16.msra.mxu0 %v423
  %1309 = vmatprep.subr.bf16.mxu0 0
  %1310 = vmatpush1.bf16.msra.mxu0 %v424
  %1311 = vmatprep.subr.bf16.mxu0 0
  %1312 = vmatpush1.bf16.msra.mxu0 %v425
  %1313 = vmatprep.subr.bf16.mxu0 0
  %1314 = vmatpush1.bf16.msra.mxu0 0
  %1315 = vmatprep.subr.bf16.mxu0 0
  %1316 = vmatpush1.bf16.msra.mxu0 0
  %1317 = vmatprep.subr.bf16.mxu0 0
  %1318 = vmatpush1.bf16.msra.mxu0 0
  %1319 = vmatprep.subr.bf16.mxu0 0
  %1320 = vmatpush1.bf16.msra.mxu0 0
  %1321 = vmatprep.subr.bf16.mxu0 0
  %1322 = vmatpush1.bf16.msra.mxu0 0
  %1323 = vmatprep.subr.bf16.mxu0 0
  %1324 = vmatpush1.bf16.msra.mxu0 0
  %1325 = vmatprep.subr.bf16.mxu0 0
  %1326 = vmatpush1.bf16.msra.mxu0 0
  %1327 = vmatprep.subr.bf16.mxu0 0
  %1328 = vmatpush1.bf16.msra.mxu0 0
  %1329 = vmatprep.mubr.bf16.mxu0 0
  %1330 = vmatmul.mubr.bf16.gmra.mrb[0].mxu0 %v1293
  %v1331 = vpop.f32.mrb[0].mxu0
  %v1332 = vadd.f32 0.0, %v1331
  %v1333 = vpop.f32.mrb[0].mxu0
  %v1334 = vpop.f32.mrb[0].mxu0
  %v1335 = vadd.f32 0.0, %v1334
  %v1336 = vpop.f32.mrb[0].mxu0
  %1337 = vmatprep.mubr.bf16.mxu0 0
  %1338 = vmatmul.mubr.bf16.gmra.mrb[0].mxu0 %v1294
  %v1339 = vpop.f32.mrb[0].mxu0
  %v1340 = vadd.f32 0.0, %v1339
  %v1341 = vpop.f32.mrb[0].mxu0
  %v1342 = vpop.f32.mrb[0].mxu0
  %v1343 = vadd.f32 0.0, %v1342
  %v1344 = vpop.f32.mrb[0].mxu0
  %1345 = vdwg.mxu0
  %v1346 = vpack.c.bf16 %v1335, %v1332
  %v1347 = vpack.c.bf16 %v1343, %v1340
  %s1348 = scalar_lea.vmem %s6, 96
  %v1349 = vld [vmem:[%s1348] sm:$0xf]
  %v1350 = vld [vmem:[%s1348 + $0x4] sm:$0xf]
  %v1351 = vld [vmem:[%s1348 + $0x8] sm:$0xf]
  %v1352 = vld [vmem:[%s1348 + $0xc] sm:$0xf]
  %v1357 = vunpack.c.l.b16 %v1349
  %v1358 = vunpack.c.l.b16 %v1350
  %v1359 = vunpack.c.l.b16 %v1351
  %v1360 = vunpack.c.l.b16 %v1352
  %v1361 = vpack.c.b16 %v1358, %v1357
  %v1362 = vpack.c.b16 %v1360, %v1359
  %v1366 = vsel %vm231, %v1346, 0
  %v1369 = vsel %vm231, %v1347, 0
  %1371 = vmatprep.subr.bf16.mxu0 0
  %1372 = vmatpush1.bf16.msra.mxu0 %v1361
  %1373 = vmatprep.subr.bf16.mxu0 0
  %1374 = vmatpush1.bf16.msra.mxu0 %v1362
  %1375 = vmatprep.subr.bf16.mxu0 0
  %1376 = vmatpush1.bf16.msra.mxu0 0
  %1377 = vmatprep.subr.bf16.mxu0 0
  %1378 = vmatpush1.bf16.msra.mxu0 0
  %1379 = vmatprep.subr.bf16.mxu0 0
  %1380 = vmatpush1.bf16.msra.mxu0 0
  %1381 = vmatprep.subr.bf16.mxu0 0
  %1382 = vmatpush1.bf16.msra.mxu0 0
  %1383 = vmatprep.subr.bf16.mxu0 0
  %1384 = vmatpush1.bf16.msra.mxu0 0
  %1385 = vmatprep.subr.bf16.mxu0 0
  %1386 = vmatpush1.bf16.msra.mxu0 0
  %1387 = vmatprep.subr.bf16.mxu0 0
  %1388 = vmatpush1.bf16.msra.mxu0 0
  %1389 = vmatprep.subr.bf16.mxu0 0
  %1390 = vmatpush1.bf16.msra.mxu0 0
  %1391 = vmatprep.subr.bf16.mxu0 0
  %1392 = vmatpush1.bf16.msra.mxu0 0
  %1393 = vmatprep.subr.bf16.mxu0 0
  %1394 = vmatpush1.bf16.msra.mxu0 0
  %1395 = vmatprep.subr.bf16.mxu0 0
  %1396 = vmatpush1.bf16.msra.mxu0 0
  %1397 = vmatprep.subr.bf16.mxu0 0
  %1398 = vmatpush1.bf16.msra.mxu0 0
  %1399 = vmatprep.subr.bf16.mxu0 0
  %1400 = vmatpush1.bf16.msra.mxu0 0
  %1401 = vmatprep.subr.bf16.mxu0 0
  %1402 = vmatpush1.bf16.msra.mxu0 0
  %1403 = vmatprep.mubr.bf16.mxu0 0
  %1404 = vmatmul.mubr.bf16.gmra.mrb[0].mxu0 %v1366
  %v1405 = vpop.f32.mrb[0].mxu0
  %v1406 = vadd.f32 0.0, %v1405
  %v1407 = vpop.f32.mrb[0].mxu0
  %v1408 = vpop.f32.mrb[0].mxu0
  %v1409 = vadd.f32 0.0, %v1408
  %v1410 = vpop.f32.mrb[0].mxu0
  %1411 = vmatprep.mubr.bf16.mxu0 0
  %1412 = vmatmul.mubr.bf16.gmra.mrb[0].mxu0 %v1369
  %v1413 = vpop.f32.mrb[0].mxu0
  %v1414 = vadd.f32 0.0, %v1413
  %v1415 = vpop.f32.mrb[0].mxu0
  %v1416 = vpop.f32.mrb[0].mxu0
  %v1417 = vadd.f32 0.0, %v1416
  %v1418 = vpop.f32.mrb[0].mxu0
  %1419 = vdwg.mxu0
  %v1420 = vadd.f32 %v1276, %v1406
  %v1421 = vadd.f32 %v1277, %v1409
  %v1422 = vadd.f32 %v1278, %v1414
  %v1423 = vadd.f32 %v1279, %v1417
  %s1424 = scalar_lea.vmem %s5, 112
  %v1425 = vld [vmem:[%s1424] sm:$0xf]
  %v1426 = vld [vmem:[%s1424 + $0x4] sm:$0xf]
  %v1427 = vld [vmem:[%s1424 + $0x8] sm:$0xf]
  %v1428 = vld [vmem:[%s1424 + $0xc] sm:$0xf]
  %v1433 = vunpack.c.l.b16 %v1425
  %v1434 = vunpack.c.l.b16 %v1426
  %v1435 = vunpack.c.l.b16 %v1427
  %v1436 = vunpack.c.l.b16 %v1428
  %v1437 = vpack.c.b16 %v1434, %v1433
  %v1438 = vpack.c.b16 %v1436, %v1435
  %1441 = vmatprep.subr.bf16.mxu0 0
  %1442 = vmatpush1.bf16.msra.mxu0 %v418
  %1443 = vmatprep.subr.bf16.mxu0 0
  %1444 = vmatpush1.bf16.msra.mxu0 %v419
  %1445 = vmatprep.subr.bf16.mxu0 0
  %1446 = vmatpush1.bf16.msra.mxu0 %v420
  %1447 = vmatprep.subr.bf16.mxu0 0
  %1448 = vmatpush1.bf16.msra.mxu0 %v421
  %1449 = vmatprep.subr.bf16.mxu0 0
  %1450 = vmatpush1.bf16.msra.mxu0 %v422
  %1451 = vmatprep.subr.bf16.mxu0 0
  %1452 = vmatpush1.bf16.msra.mxu0 %v423
  %1453 = vmatprep.subr.bf16.mxu0 0
  %1454 = vmatpush1.bf16.msra.mxu0 %v424
  %1455 = vmatprep.subr.bf16.mxu0 0
  %1456 = vmatpush1.bf16.msra.mxu0 %v425
  %1457 = vmatprep.subr.bf16.mxu0 0
  %1458 = vmatpush1.bf16.msra.mxu0 0
  %1459 = vmatprep.subr.bf16.mxu0 0
  %1460 = vmatpush1.bf16.msra.mxu0 0
  %1461 = vmatprep.subr.bf16.mxu0 0
  %1462 = vmatpush1.bf16.msra.mxu0 0
  %1463 = vmatprep.subr.bf16.mxu0 0
  %1464 = vmatpush1.bf16.msra.mxu0 0
  %1465 = vmatprep.subr.bf16.mxu0 0
  %1466 = vmatpush1.bf16.msra.mxu0 0
  %1467 = vmatprep.subr.bf16.mxu0 0
  %1468 = vmatpush1.bf16.msra.mxu0 0
  %1469 = vmatprep.subr.bf16.mxu0 0
  %1470 = vmatpush1.bf16.msra.mxu0 0
  %1471 = vmatprep.subr.bf16.mxu0 0
  %1472 = vmatpush1.bf16.msra.mxu0 0
  %1473 = vmatprep.mubr.bf16.mxu0 0
  %1474 = vmatmul.mubr.bf16.gmra.mrb[0].mxu0 %v1437
  %v1475 = vpop.f32.mrb[0].mxu0
  %v1476 = vadd.f32 0.0, %v1475
  %v1477 = vpop.f32.mrb[0].mxu0
  %v1478 = vpop.f32.mrb[0].mxu0
  %v1479 = vadd.f32 0.0, %v1478
  %v1480 = vpop.f32.mrb[0].mxu0
  %1481 = vmatprep.mubr.bf16.mxu0 0
  %1482 = vmatmul.mubr.bf16.gmra.mrb[0].mxu0 %v1438
  %v1483 = vpop.f32.mrb[0].mxu0
  %v1484 = vadd.f32 0.0, %v1483
  %v1485 = vpop.f32.mrb[0].mxu0
  %v1486 = vpop.f32.mrb[0].mxu0
  %v1487 = vadd.f32 0.0, %v1486
  %v1488 = vpop.f32.mrb[0].mxu0
  %1489 = vdwg.mxu0
  %v1490 = vpack.c.bf16 %v1479, %v1476
  %v1491 = vpack.c.bf16 %v1487, %v1484
  %s1492 = scalar_lea.vmem %s6, 112
  %v1493 = vld [vmem:[%s1492] sm:$0xf]
  %v1494 = vld [vmem:[%s1492 + $0x4] sm:$0xf]
  %v1495 = vld [vmem:[%s1492 + $0x8] sm:$0xf]
  %v1496 = vld [vmem:[%s1492 + $0xc] sm:$0xf]
  %v1501 = vunpack.c.l.b16 %v1493
  %v1502 = vunpack.c.l.b16 %v1494
  %v1503 = vunpack.c.l.b16 %v1495
  %v1504 = vunpack.c.l.b16 %v1496
  %v1505 = vpack.c.b16 %v1502, %v1501
  %v1506 = vpack.c.b16 %v1504, %v1503
  %v1510 = vsel %vm231, %v1490, 0
  %v1513 = vsel %vm231, %v1491, 0
  %1515 = vmatprep.subr.bf16.mxu0 0
  %1516 = vmatpush1.bf16.msra.mxu0 %v1505
  %1517 = vmatprep.subr.bf16.mxu0 0
  %1518 = vmatpush1.bf16.msra.mxu0 %v1506
  %1519 = vmatprep.subr.bf16.mxu0 0
  %1520 = vmatpush1.bf16.msra.mxu0 0
  %1521 = vmatprep.subr.bf16.mxu0 0
  %1522 = vmatpush1.bf16.msra.mxu0 0
  %1523 = vmatprep.subr.bf16.mxu0 0
  %1524 = vmatpush1.bf16.msra.mxu0 0
  %1525 = vmatprep.subr.bf16.mxu0 0
  %1526 = vmatpush1.bf16.msra.mxu0 0
  %1527 = vmatprep.subr.bf16.mxu0 0
  %1528 = vmatpush1.bf16.msra.mxu0 0
  %1529 = vmatprep.subr.bf16.mxu0 0
  %1530 = vmatpush1.bf16.msra.mxu0 0
  %1531 = vmatprep.subr.bf16.mxu0 0
  %1532 = vmatpush1.bf16.msra.mxu0 0
  %1533 = vmatprep.subr.bf16.mxu0 0
  %1534 = vmatpush1.bf16.msra.mxu0 0
  %1535 = vmatprep.subr.bf16.mxu0 0
  %1536 = vmatpush1.bf16.msra.mxu0 0
  %1537 = vmatprep.subr.bf16.mxu0 0
  %1538 = vmatpush1.bf16.msra.mxu0 0
  %1539 = vmatprep.subr.bf16.mxu0 0
  %1540 = vmatpush1.bf16.msra.mxu0 0
  %1541 = vmatprep.subr.bf16.mxu0 0
  %1542 = vmatpush1.bf16.msra.mxu0 0
  %1543 = vmatprep.subr.bf16.mxu0 0
  %1544 = vmatpush1.bf16.msra.mxu0 0
  %1545 = vmatprep.subr.bf16.mxu0 0
  %1546 = vmatpush1.bf16.msra.mxu0 0
  %1547 = vmatprep.mubr.bf16.mxu0 0
  %1548 = vmatmul.mubr.bf16.gmra.mrb[0].mxu0 %v1510
  %v1549 = vpop.f32.mrb[0].mxu0
  %v1550 = vadd.f32 0.0, %v1549
  %v1551 = vpop.f32.mrb[0].mxu0
  %v1552 = vpop.f32.mrb[0].mxu0
  %v1553 = vadd.f32 0.0, %v1552
  %v1554 = vpop.f32.mrb[0].mxu0
  %1555 = vmatprep.mubr.bf16.mxu0 0
  %1556 = vmatmul.mubr.bf16.gmra.mrb[0].mxu0 %v1513
  %v1557 = vpop.f32.mrb[0].mxu0
  %v1558 = vadd.f32 0.0, %v1557
  %v1559 = vpop.f32.mrb[0].mxu0
  %v1560 = vpop.f32.mrb[0].mxu0
  %v1561 = vadd.f32 0.0, %v1560
  %v1562 = vpop.f32.mrb[0].mxu0
  %1563 = vdwg.mxu0
  %v1564 = vadd.f32 %v1420, %v1550
  %v1565 = vadd.f32 %v1421, %v1553
  %v1566 = vadd.f32 %v1422, %v1558
  %v1567 = vadd.f32 %v1423, %v1561
  %s1568 = scalar_lea.vmem %s5, 128
  %v1569 = vld [vmem:[%s1568] sm:$0xf]
  %v1570 = vld [vmem:[%s1568 + $0x4] sm:$0xf]
  %v1571 = vld [vmem:[%s1568 + $0x8] sm:$0xf]
  %v1572 = vld [vmem:[%s1568 + $0xc] sm:$0xf]
  %v1577 = vunpack.c.l.b16 %v1569
  %v1578 = vunpack.c.l.b16 %v1570
  %v1579 = vunpack.c.l.b16 %v1571
  %v1580 = vunpack.c.l.b16 %v1572
  %v1581 = vpack.c.b16 %v1578, %v1577
  %v1582 = vpack.c.b16 %v1580, %v1579
  %1585 = vmatprep.subr.bf16.mxu0 0
  %1586 = vmatpush1.bf16.msra.mxu0 %v418
  %1587 = vmatprep.subr.bf16.mxu0 0
  %1588 = vmatpush1.bf16.msra.mxu0 %v419
  %1589 = vmatprep.subr.bf16.mxu0 0
  %1590 = vmatpush1.bf16.msra.mxu0 %v420
  %1591 = vmatprep.subr.bf16.mxu0 0
  %1592 = vmatpush1.bf16.msra.mxu0 %v421
  %1593 = vmatprep.subr.bf16.mxu0 0
  %1594 = vmatpush1.bf16.msra.mxu0 %v422
  %1595 = vmatprep.subr.bf16.mxu0 0
  %1596 = vmatpush1.bf16.msra.mxu0 %v423
  %1597 = vmatprep.subr.bf16.mxu0 0
  %1598 = vmatpush1.bf16.msra.mxu0 %v424
  %1599 = vmatprep.subr.bf16.mxu0 0
  %1600 = vmatpush1.bf16.msra.mxu0 %v425
  %1601 = vmatprep.subr.bf16.mxu0 0
  %1602 = vmatpush1.bf16.msra.mxu0 0
  %1603 = vmatprep.subr.bf16.mxu0 0
  %1604 = vmatpush1.bf16.msra.mxu0 0
  %1605 = vmatprep.subr.bf16.mxu0 0
  %1606 = vmatpush1.bf16.msra.mxu0 0
  %1607 = vmatprep.subr.bf16.mxu0 0
  %1608 = vmatpush1.bf16.msra.mxu0 0
  %1609 = vmatprep.subr.bf16.mxu0 0
  %1610 = vmatpush1.bf16.msra.mxu0 0
  %1611 = vmatprep.subr.bf16.mxu0 0
  %1612 = vmatpush1.bf16.msra.mxu0 0
  %1613 = vmatprep.subr.bf16.mxu0 0
  %1614 = vmatpush1.bf16.msra.mxu0 0
  %1615 = vmatprep.subr.bf16.mxu0 0
  %1616 = vmatpush1.bf16.msra.mxu0 0
  %1617 = vmatprep.mubr.bf16.mxu0 0
  %1618 = vmatmul.mubr.bf16.gmra.mrb[0].mxu0 %v1581
  %v1619 = vpop.f32.mrb[0].mxu0
  %v1620 = vadd.f32 0.0, %v1619
  %v1621 = vpop.f32.mrb[0].mxu0
  %v1622 = vpop.f32.mrb[0].mxu0
  %v1623 = vadd.f32 0.0, %v1622
  %v1624 = vpop.f32.mrb[0].mxu0
  %1625 = vmatprep.mubr.bf16.mxu0 0
  %1626 = vmatmul.mubr.bf16.gmra.mrb[0].mxu0 %v1582
  %v1627 = vpop.f32.mrb[0].mxu0
  %v1628 = vadd.f32 0.0, %v1627
  %v1629 = vpop.f32.mrb[0].mxu0
  %v1630 = vpop.f32.mrb[0].mxu0
  %v1631 = vadd.f32 0.0, %v1630
  %v1632 = vpop.f32.mrb[0].mxu0
  %1633 = vdwg.mxu0
  %v1634 = vpack.c.bf16 %v1623, %v1620
  %v1635 = vpack.c.bf16 %v1631, %v1628
  %s1636 = scalar_lea.vmem %s6, 128
  %v1637 = vld [vmem:[%s1636] sm:$0xf]
  %v1638 = vld [vmem:[%s1636 + $0x4] sm:$0xf]
  %v1639 = vld [vmem:[%s1636 + $0x8] sm:$0xf]
  %v1640 = vld [vmem:[%s1636 + $0xc] sm:$0xf]
  %v1645 = vunpack.c.l.b16 %v1637
  %v1646 = vunpack.c.l.b16 %v1638
  %v1647 = vunpack.c.l.b16 %v1639
  %v1648 = vunpack.c.l.b16 %v1640
  %v1649 = vpack.c.b16 %v1646, %v1645
  %v1650 = vpack.c.b16 %v1648, %v1647
  %v1654 = vsel %vm231, %v1634, 0
  %v1657 = vsel %vm231, %v1635, 0
  %1659 = vmatprep.subr.bf16.mxu0 0
  %1660 = vmatpush1.bf16.msra.mxu0 %v1649
  %1661 = vmatprep.subr.bf16.mxu0 0
  %1662 = vmatpush1.bf16.msra.mxu0 %v1650
  %1663 = vmatprep.subr.bf16.mxu0 0
  %1664 = vmatpush1.bf16.msra.mxu0 0
  %1665 = vmatprep.subr.bf16.mxu0 0
  %1666 = vmatpush1.bf16.msra.mxu0 0
  %1667 = vmatprep.subr.bf16.mxu0 0
  %1668 = vmatpush1.bf16.msra.mxu0 0
  %1669 = vmatprep.subr.bf16.mxu0 0
  %1670 = vmatpush1.bf16.msra.mxu0 0
  %1671 = vmatprep.subr.bf16.mxu0 0
  %1672 = vmatpush1.bf16.msra.mxu0 0
  %1673 = vmatprep.subr.bf16.mxu0 0
  %1674 = vmatpush1.bf16.msra.mxu0 0
  %1675 = vmatprep.subr.bf16.mxu0 0
  %1676 = vmatpush1.bf16.msra.mxu0 0
  %1677 = vmatprep.subr.bf16.mxu0 0
  %1678 = vmatpush1.bf16.msra.mxu0 0
  %1679 = vmatprep.subr.bf16.mxu0 0
  %1680 = vmatpush1.bf16.msra.mxu0 0
  %1681 = vmatprep.subr.bf16.mxu0 0
  %1682 = vmatpush1.bf16.msra.mxu0 0
  %1683 = vmatprep.subr.bf16.mxu0 0
  %1684 = vmatpush1.bf16.msra.mxu0 0
  %1685 = vmatprep.subr.bf16.mxu0 0
  %1686 = vmatpush1.bf16.msra.mxu0 0
  %1687 = vmatprep.subr.bf16.mxu0 0
  %1688 = vmatpush1.bf16.msra.mxu0 0
  %1689 = vmatprep.subr.bf16.mxu0 0
  %1690 = vmatpush1.bf16.msra.mxu0 0
  %1691 = vmatprep.mubr.bf16.mxu0 0
  %1692 = vmatmul.mubr.bf16.gmra.mrb[0].mxu0 %v1654
  %v1693 = vpop.f32.mrb[0].mxu0
  %v1694 = vadd.f32 0.0, %v1693
  %v1695 = vpop.f32.mrb[0].mxu0
  %v1696 = vpop.f32.mrb[0].mxu0
  %v1697 = vadd.f32 0.0, %v1696
  %v1698 = vpop.f32.mrb[0].mxu0
  %1699 = vmatprep.mubr.bf16.mxu0 0
  %1700 = vmatmul.mubr.bf16.gmra.mrb[0].mxu0 %v1657
  %v1701 = vpop.f32.mrb[0].mxu0
  %v1702 = vadd.f32 0.0, %v1701
  %v1703 = vpop.f32.mrb[0].mxu0
  %v1704 = vpop.f32.mrb[0].mxu0
  %v1705 = vadd.f32 0.0, %v1704
  %v1706 = vpop.f32.mrb[0].mxu0
  %1707 = vdwg.mxu0
  %v1708 = vadd.f32 %v1564, %v1694
  %v1709 = vadd.f32 %v1565, %v1697
  %v1710 = vadd.f32 %v1566, %v1702
  %v1711 = vadd.f32 %v1567, %v1705
  %s1712 = scalar_lea.vmem %s5, 144
  %v1713 = vld [vmem:[%s1712] sm:$0xf]
  %v1714 = vld [vmem:[%s1712 + $0x4] sm:$0xf]
  %v1715 = vld [vmem:[%s1712 + $0x8] sm:$0xf]
  %v1716 = vld [vmem:[%s1712 + $0xc] sm:$0xf]
  %v1721 = vunpack.c.l.b16 %v1713
  %v1722 = vunpack.c.l.b16 %v1714
  %v1723 = vunpack.c.l.b16 %v1715
  %v1724 = vunpack.c.l.b16 %v1716
  %v1725 = vpack.c.b16 %v1722, %v1721
  %v1726 = vpack.c.b16 %v1724, %v1723
  %1729 = vmatprep.subr.bf16.mxu0 0
  %1730 = vmatpush1.bf16.msra.mxu0 %v418
  %1731 = vmatprep.subr.bf16.mxu0 0
  %1732 = vmatpush1.bf16.msra.mxu0 %v419
  %1733 = vmatprep.subr.bf16.mxu0 0
  %1734 = vmatpush1.bf16.msra.mxu0 %v420
  %1735 = vmatprep.subr.bf16.mxu0 0
  %1736 = vmatpush1.bf16.msra.mxu0 %v421
  %1737 = vmatprep.subr.bf16.mxu0 0
  %1738 = vmatpush1.bf16.msra.mxu0 %v422
  %1739 = vmatprep.subr.bf16.mxu0 0
  %1740 = vmatpush1.bf16.msra.mxu0 %v423
  %1741 = vmatprep.subr.bf16.mxu0 0
  %1742 = vmatpush1.bf16.msra.mxu0 %v424
  %1743 = vmatprep.subr.bf16.mxu0 0
  %1744 = vmatpush1.bf16.msra.mxu0 %v425
  %1745 = vmatprep.subr.bf16.mxu0 0
  %1746 = vmatpush1.bf16.msra.mxu0 0
  %1747 = vmatprep.subr.bf16.mxu0 0
  %1748 = vmatpush1.bf16.msra.mxu0 0
  %1749 = vmatprep.subr.bf16.mxu0 0
  %1750 = vmatpush1.bf16.msra.mxu0 0
  %1751 = vmatprep.subr.bf16.mxu0 0
  %1752 = vmatpush1.bf16.msra.mxu0 0
  %1753 = vmatprep.subr.bf16.mxu0 0
  %1754 = vmatpush1.bf16.msra.mxu0 0
  %1755 = vmatprep.subr.bf16.mxu0 0
  %1756 = vmatpush1.bf16.msra.mxu0 0
  %1757 = vmatprep.subr.bf16.mxu0 0
  %1758 = vmatpush1.bf16.msra.mxu0 0
  %1759 = vmatprep.subr.bf16.mxu0 0
  %1760 = vmatpush1.bf16.msra.mxu0 0
  %1761 = vmatprep.mubr.bf16.mxu0 0
  %1762 = vmatmul.mubr.bf16.gmra.mrb[0].mxu0 %v1725
  %v1763 = vpop.f32.mrb[0].mxu0
  %v1764 = vadd.f32 0.0, %v1763
  %v1765 = vpop.f32.mrb[0].mxu0
  %v1766 = vpop.f32.mrb[0].mxu0
  %v1767 = vadd.f32 0.0, %v1766
  %v1768 = vpop.f32.mrb[0].mxu0
  %1769 = vmatprep.mubr.bf16.mxu0 0
  %1770 = vmatmul.mubr.bf16.gmra.mrb[0].mxu0 %v1726
  %v1771 = vpop.f32.mrb[0].mxu0
  %v1772 = vadd.f32 0.0, %v1771
  %v1773 = vpop.f32.mrb[0].mxu0
  %v1774 = vpop.f32.mrb[0].mxu0
  %v1775 = vadd.f32 0.0, %v1774
  %v1776 = vpop.f32.mrb[0].mxu0
  %1777 = vdwg.mxu0
  %v1778 = vpack.c.bf16 %v1767, %v1764
  %v1779 = vpack.c.bf16 %v1775, %v1772
  %s1780 = scalar_lea.vmem %s6, 144
  %v1781 = vld [vmem:[%s1780] sm:$0xf]
  %v1782 = vld [vmem:[%s1780 + $0x4] sm:$0xf]
  %v1783 = vld [vmem:[%s1780 + $0x8] sm:$0xf]
  %v1784 = vld [vmem:[%s1780 + $0xc] sm:$0xf]
  %v1789 = vunpack.c.l.b16 %v1781
  %v1790 = vunpack.c.l.b16 %v1782
  %v1791 = vunpack.c.l.b16 %v1783
  %v1792 = vunpack.c.l.b16 %v1784
  %v1793 = vpack.c.b16 %v1790, %v1789
  %v1794 = vpack.c.b16 %v1792, %v1791
  %v1798 = vsel %vm231, %v1778, 0
  %v1801 = vsel %vm231, %v1779, 0
  %1803 = vmatprep.subr.bf16.mxu0 0
  %1804 = vmatpush1.bf16.msra.mxu0 %v1793
  %1805 = vmatprep.subr.bf16.mxu0 0
  %1806 = vmatpush1.bf16.msra.mxu0 %v1794
  %1807 = vmatprep.subr.bf16.mxu0 0
  %1808 = vmatpush1.bf16.msra.mxu0 0
  %1809 = vmatprep.subr.bf16.mxu0 0
  %1810 = vmatpush1.bf16.msra.mxu0 0
  %1811 = vmatprep.subr.bf16.mxu0 0
  %1812 = vmatpush1.bf16.msra.mxu0 0
  %1813 = vmatprep.subr.bf16.mxu0 0
  %1814 = vmatpush1.bf16.msra.mxu0 0
  %1815 = vmatprep.subr.bf16.mxu0 0
  %1816 = vmatpush1.bf16.msra.mxu0 0
  %1817 = vmatprep.subr.bf16.mxu0 0
  %1818 = vmatpush1.bf16.msra.mxu0 0
  %1819 = vmatprep.subr.bf16.mxu0 0
  %1820 = vmatpush1.bf16.msra.mxu0 0
  %1821 = vmatprep.subr.bf16.mxu0 0
  %1822 = vmatpush1.bf16.msra.mxu0 0
  %1823 = vmatprep.subr.bf16.mxu0 0
  %1824 = vmatpush1.bf16.msra.mxu0 0
  %1825 = vmatprep.subr.bf16.mxu0 0
  %1826 = vmatpush1.bf16.msra.mxu0 0
  %1827 = vmatprep.subr.bf16.mxu0 0
  %1828 = vmatpush1.bf16.msra.mxu0 0
  %1829 = vmatprep.subr.bf16.mxu0 0
  %1830 = vmatpush1.bf16.msra.mxu0 0
  %1831 = vmatprep.subr.bf16.mxu0 0
  %1832 = vmatpush1.bf16.msra.mxu0 0
  %1833 = vmatprep.subr.bf16.mxu0 0
  %1834 = vmatpush1.bf16.msra.mxu0 0
  %1835 = vmatprep.mubr.bf16.mxu0 0
  %1836 = vmatmul.mubr.bf16.gmra.mrb[0].mxu0 %v1798
  %v1837 = vpop.f32.mrb[0].mxu0
  %v1838 = vadd.f32 0.0, %v1837
  %v1839 = vpop.f32.mrb[0].mxu0
  %v1840 = vpop.f32.mrb[0].mxu0
  %v1841 = vadd.f32 0.0, %v1840
  %v1842 = vpop.f32.mrb[0].mxu0
  %1843 = vmatprep.mubr.bf16.mxu0 0
  %1844 = vmatmul.mubr.bf16.gmra.mrb[0].mxu0 %v1801
  %v1845 = vpop.f32.mrb[0].mxu0
  %v1846 = vadd.f32 0.0, %v1845
  %v1847 = vpop.f32.mrb[0].mxu0
  %v1848 = vpop.f32.mrb[0].mxu0
  %v1849 = vadd.f32 0.0, %v1848
  %v1850 = vpop.f32.mrb[0].mxu0
  %1851 = vdwg.mxu0
  %v1852 = vadd.f32 %v1708, %v1838
  %v1853 = vadd.f32 %v1709, %v1841
  %v1854 = vadd.f32 %v1710, %v1846
  %v1855 = vadd.f32 %v1711, %v1849
  %s1856 = scalar_lea.vmem %s5, 160
  %v1857 = vld [vmem:[%s1856] sm:$0xf]
  %v1858 = vld [vmem:[%s1856 + $0x4] sm:$0xf]
  %v1859 = vld [vmem:[%s1856 + $0x8] sm:$0xf]
  %v1860 = vld [vmem:[%s1856 + $0xc] sm:$0xf]
  %v1865 = vunpack.c.l.b16 %v1857
  %v1866 = vunpack.c.l.b16 %v1858
  %v1867 = vunpack.c.l.b16 %v1859
  %v1868 = vunpack.c.l.b16 %v1860
  %v1869 = vpack.c.b16 %v1866, %v1865
  %v1870 = vpack.c.b16 %v1868, %v1867
  %1873 = vmatprep.subr.bf16.mxu0 0
  %1874 = vmatpush1.bf16.msra.mxu0 %v418
  %1875 = vmatprep.subr.bf16.mxu0 0
  %1876 = vmatpush1.bf16.msra.mxu0 %v419
  %1877 = vmatprep.subr.bf16.mxu0 0
  %1878 = vmatpush1.bf16.msra.mxu0 %v420
  %1879 = vmatprep.subr.bf16.mxu0 0
  %1880 = vmatpush1.bf16.msra.mxu0 %v421
  %1881 = vmatprep.subr.bf16.mxu0 0
  %1882 = vmatpush1.bf16.msra.mxu0 %v422
  %1883 = vmatprep.subr.bf16.mxu0 0
  %1884 = vmatpush1.bf16.msra.mxu0 %v423
  %1885 = vmatprep.subr.bf16.mxu0 0
  %1886 = vmatpush1.bf16.msra.mxu0 %v424
  %1887 = vmatprep.subr.bf16.mxu0 0
  %1888 = vmatpush1.bf16.msra.mxu0 %v425
  %1889 = vmatprep.subr.bf16.mxu0 0
  %1890 = vmatpush1.bf16.msra.mxu0 0
  %1891 = vmatprep.subr.bf16.mxu0 0
  %1892 = vmatpush1.bf16.msra.mxu0 0
  %1893 = vmatprep.subr.bf16.mxu0 0
  %1894 = vmatpush1.bf16.msra.mxu0 0
  %1895 = vmatprep.subr.bf16.mxu0 0
  %1896 = vmatpush1.bf16.msra.mxu0 0
  %1897 = vmatprep.subr.bf16.mxu0 0
  %1898 = vmatpush1.bf16.msra.mxu0 0
  %1899 = vmatprep.subr.bf16.mxu0 0
  %1900 = vmatpush1.bf16.msra.mxu0 0
  %1901 = vmatprep.subr.bf16.mxu0 0
  %1902 = vmatpush1.bf16.msra.mxu0 0
  %1903 = vmatprep.subr.bf16.mxu0 0
  %1904 = vmatpush1.bf16.msra.mxu0 0
  %1905 = vmatprep.mubr.bf16.mxu0 0
  %1906 = vmatmul.mubr.bf16.gmra.mrb[0].mxu0 %v1869
  %v1907 = vpop.f32.mrb[0].mxu0
  %v1908 = vadd.f32 0.0, %v1907
  %v1909 = vpop.f32.mrb[0].mxu0
  %v1910 = vpop.f32.mrb[0].mxu0
  %v1911 = vadd.f32 0.0, %v1910
  %v1912 = vpop.f32.mrb[0].mxu0
  %1913 = vmatprep.mubr.bf16.mxu0 0
  %1914 = vmatmul.mubr.bf16.gmra.mrb[0].mxu0 %v1870
  %v1915 = vpop.f32.mrb[0].mxu0
  %v1916 = vadd.f32 0.0, %v1915
  %v1917 = vpop.f32.mrb[0].mxu0
  %v1918 = vpop.f32.mrb[0].mxu0
  %v1919 = vadd.f32 0.0, %v1918
  %v1920 = vpop.f32.mrb[0].mxu0
  %1921 = vdwg.mxu0
  %v1922 = vpack.c.bf16 %v1911, %v1908
  %v1923 = vpack.c.bf16 %v1919, %v1916
  %s1924 = scalar_lea.vmem %s6, 160
  %v1925 = vld [vmem:[%s1924] sm:$0xf]
  %v1926 = vld [vmem:[%s1924 + $0x4] sm:$0xf]
  %v1927 = vld [vmem:[%s1924 + $0x8] sm:$0xf]
  %v1928 = vld [vmem:[%s1924 + $0xc] sm:$0xf]
  %v1933 = vunpack.c.l.b16 %v1925
  %v1934 = vunpack.c.l.b16 %v1926
  %v1935 = vunpack.c.l.b16 %v1927
  %v1936 = vunpack.c.l.b16 %v1928
  %v1937 = vpack.c.b16 %v1934, %v1933
  %v1938 = vpack.c.b16 %v1936, %v1935
  %v1942 = vsel %vm231, %v1922, 0
  %v1945 = vsel %vm231, %v1923, 0
  %1947 = vmatprep.subr.bf16.mxu0 0
  %1948 = vmatpush1.bf16.msra.mxu0 %v1937
  %1949 = vmatprep.subr.bf16.mxu0 0
  %1950 = vmatpush1.bf16.msra.mxu0 %v1938
  %1951 = vmatprep.subr.bf16.mxu0 0
  %1952 = vmatpush1.bf16.msra.mxu0 0
  %1953 = vmatprep.subr.bf16.mxu0 0
  %1954 = vmatpush1.bf16.msra.mxu0 0
  %1955 = vmatprep.subr.bf16.mxu0 0
  %1956 = vmatpush1.bf16.msra.mxu0 0
  %1957 = vmatprep.subr.bf16.mxu0 0
  %1958 = vmatpush1.bf16.msra.mxu0 0
  %1959 = vmatprep.subr.bf16.mxu0 0
  %1960 = vmatpush1.bf16.msra.mxu0 0
  %1961 = vmatprep.subr.bf16.mxu0 0
  %1962 = vmatpush1.bf16.msra.mxu0 0
  %1963 = vmatprep.subr.bf16.mxu0 0
  %1964 = vmatpush1.bf16.msra.mxu0 0
  %1965 = vmatprep.subr.bf16.mxu0 0
  %1966 = vmatpush1.bf16.msra.mxu0 0
  %1967 = vmatprep.subr.bf16.mxu0 0
  %1968 = vmatpush1.bf16.msra.mxu0 0
  %1969 = vmatprep.subr.bf16.mxu0 0
  %1970 = vmatpush1.bf16.msra.mxu0 0
  %1971 = vmatprep.subr.bf16.mxu0 0
  %1972 = vmatpush1.bf16.msra.mxu0 0
  %1973 = vmatprep.subr.bf16.mxu0 0
  %1974 = vmatpush1.bf16.msra.mxu0 0
  %1975 = vmatprep.subr.bf16.mxu0 0
  %1976 = vmatpush1.bf16.msra.mxu0 0
  %1977 = vmatprep.subr.bf16.mxu0 0
  %1978 = vmatpush1.bf16.msra.mxu0 0
  %1979 = vmatprep.mubr.bf16.mxu0 0
  %1980 = vmatmul.mubr.bf16.gmra.mrb[0].mxu0 %v1942
  %v1981 = vpop.f32.mrb[0].mxu0
  %v1982 = vadd.f32 0.0, %v1981
  %v1983 = vpop.f32.mrb[0].mxu0
  %v1984 = vpop.f32.mrb[0].mxu0
  %v1985 = vadd.f32 0.0, %v1984
  %v1986 = vpop.f32.mrb[0].mxu0
  %1987 = vmatprep.mubr.bf16.mxu0 0
  %1988 = vmatmul.mubr.bf16.gmra.mrb[0].mxu0 %v1945
  %v1989 = vpop.f32.mrb[0].mxu0
  %v1990 = vadd.f32 0.0, %v1989
  %v1991 = vpop.f32.mrb[0].mxu0
  %v1992 = vpop.f32.mrb[0].mxu0
  %v1993 = vadd.f32 0.0, %v1992
  %v1994 = vpop.f32.mrb[0].mxu0
  %1995 = vdwg.mxu0
  %v1996 = vadd.f32 %v1852, %v1982
  %v1997 = vadd.f32 %v1853, %v1985
  %v1998 = vadd.f32 %v1854, %v1990
  %v1999 = vadd.f32 %v1855, %v1993
  %s2000 = scalar_lea.vmem %s5, 176
  %v2001 = vld [vmem:[%s2000] sm:$0xf]
  %v2002 = vld [vmem:[%s2000 + $0x4] sm:$0xf]
  %v2003 = vld [vmem:[%s2000 + $0x8] sm:$0xf]
  %v2004 = vld [vmem:[%s2000 + $0xc] sm:$0xf]
  %v2009 = vunpack.c.l.b16 %v2001
  %v2010 = vunpack.c.l.b16 %v2002
  %v2011 = vunpack.c.l.b16 %v2003
  %v2012 = vunpack.c.l.b16 %v2004
  %v2013 = vpack.c.b16 %v2010, %v2009
  %v2014 = vpack.c.b16 %v2012, %v2011
  %2017 = vmatprep.subr.bf16.mxu0 0
  %2018 = vmatpush1.bf16.msra.mxu0 %v418
  %2019 = vmatprep.subr.bf16.mxu0 0
  %2020 = vmatpush1.bf16.msra.mxu0 %v419
  %2021 = vmatprep.subr.bf16.mxu0 0
  %2022 = vmatpush1.bf16.msra.mxu0 %v420
  %2023 = vmatprep.subr.bf16.mxu0 0
  %2024 = vmatpush1.bf16.msra.mxu0 %v421
  %2025 = vmatprep.subr.bf16.mxu0 0
  %2026 = vmatpush1.bf16.msra.mxu0 %v422
  %2027 = vmatprep.subr.bf16.mxu0 0
  %2028 = vmatpush1.bf16.msra.mxu0 %v423
  %2029 = vmatprep.subr.bf16.mxu0 0
  %2030 = vmatpush1.bf16.msra.mxu0 %v424
  %2031 = vmatprep.subr.bf16.mxu0 0
  %2032 = vmatpush1.bf16.msra.mxu0 %v425
  %2033 = vmatprep.subr.bf16.mxu0 0
  %2034 = vmatpush1.bf16.msra.mxu0 0
  %2035 = vmatprep.subr.bf16.mxu0 0
  %2036 = vmatpush1.bf16.msra.mxu0 0
  %2037 = vmatprep.subr.bf16.mxu0 0
  %2038 = vmatpush1.bf16.msra.mxu0 0
  %2039 = vmatprep.subr.bf16.mxu0 0
  %2040 = vmatpush1.bf16.msra.mxu0 0
  %2041 = vmatprep.subr.bf16.mxu0 0
  %2042 = vmatpush1.bf16.msra.mxu0 0
  %2043 = vmatprep.subr.bf16.mxu0 0
  %2044 = vmatpush1.bf16.msra.mxu0 0
  %2045 = vmatprep.subr.bf16.mxu0 0
  %2046 = vmatpush1.bf16.msra.mxu0 0
  %2047 = vmatprep.subr.bf16.mxu0 0
  %2048 = vmatpush1.bf16.msra.mxu0 0
  %2049 = vmatprep.mubr.bf16.mxu0 0
  %2050 = vmatmul.mubr.bf16.gmra.mrb[0].mxu0 %v2013
  %v2051 = vpop.f32.mrb[0].mxu0
  %v2052 = vadd.f32 0.0, %v2051
  %v2053 = vpop.f32.mrb[0].mxu0
  %v2054 = vpop.f32.mrb[0].mxu0
  %v2055 = vadd.f32 0.0, %v2054
  %v2056 = vpop.f32.mrb[0].mxu0
  %2057 = vmatprep.mubr.bf16.mxu0 0
  %2058 = vmatmul.mubr.bf16.gmra.mrb[0].mxu0 %v2014
  %v2059 = vpop.f32.mrb[0].mxu0
  %v2060 = vadd.f32 0.0, %v2059
  %v2061 = vpop.f32.mrb[0].mxu0
  %v2062 = vpop.f32.mrb[0].mxu0
  %v2063 = vadd.f32 0.0, %v2062
  %v2064 = vpop.f32.mrb[0].mxu0
  %2065 = vdwg.mxu0
  %v2066 = vpack.c.bf16 %v2055, %v2052
  %v2067 = vpack.c.bf16 %v2063, %v2060
  %s2068 = scalar_lea.vmem %s6, 176
  %v2069 = vld [vmem:[%s2068] sm:$0xf]
  %v2070 = vld [vmem:[%s2068 + $0x4] sm:$0xf]
  %v2071 = vld [vmem:[%s2068 + $0x8] sm:$0xf]
  %v2072 = vld [vmem:[%s2068 + $0xc] sm:$0xf]
  %v2077 = vunpack.c.l.b16 %v2069
  %v2078 = vunpack.c.l.b16 %v2070
  %v2079 = vunpack.c.l.b16 %v2071
  %v2080 = vunpack.c.l.b16 %v2072
  %v2081 = vpack.c.b16 %v2078, %v2077
  %v2082 = vpack.c.b16 %v2080, %v2079
  %v2086 = vsel %vm231, %v2066, 0
  %v2089 = vsel %vm231, %v2067, 0
  %2091 = vmatprep.subr.bf16.mxu0 0
  %2092 = vmatpush1.bf16.msra.mxu0 %v2081
  %2093 = vmatprep.subr.bf16.mxu0 0
  %2094 = vmatpush1.bf16.msra.mxu0 %v2082
  %2095 = vmatprep.subr.bf16.mxu0 0
  %2096 = vmatpush1.bf16.msra.mxu0 0
  %2097 = vmatprep.subr.bf16.mxu0 0
  %2098 = vmatpush1.bf16.msra.mxu0 0
  %2099 = vmatprep.subr.bf16.mxu0 0
  %2100 = vmatpush1.bf16.msra.mxu0 0
  %2101 = vmatprep.subr.bf16.mxu0 0
  %2102 = vmatpush1.bf16.msra.mxu0 0
  %2103 = vmatprep.subr.bf16.mxu0 0
  %2104 = vmatpush1.bf16.msra.mxu0 0
  %2105 = vmatprep.subr.bf16.mxu0 0
  %2106 = vmatpush1.bf16.msra.mxu0 0
  %2107 = vmatprep.subr.bf16.mxu0 0
  %2108 = vmatpush1.bf16.msra.mxu0 0
  %2109 = vmatprep.subr.bf16.mxu0 0
  %2110 = vmatpush1.bf16.msra.mxu0 0
  %2111 = vmatprep.subr.bf16.mxu0 0
  %2112 = vmatpush1.bf16.msra.mxu0 0
  %2113 = vmatprep.subr.bf16.mxu0 0
  %2114 = vmatpush1.bf16.msra.mxu0 0
  %2115 = vmatprep.subr.bf16.mxu0 0
  %2116 = vmatpush1.bf16.msra.mxu0 0
  %2117 = vmatprep.subr.bf16.mxu0 0
  %2118 = vmatpush1.bf16.msra.mxu0 0
  %2119 = vmatprep.subr.bf16.mxu0 0
  %2120 = vmatpush1.bf16.msra.mxu0 0
  %2121 = vmatprep.subr.bf16.mxu0 0
  %2122 = vmatpush1.bf16.msra.mxu0 0
  %2123 = vmatprep.mubr.bf16.mxu0 0
  %2124 = vmatmul.mubr.bf16.gmra.mrb[0].mxu0 %v2086
  %v2125 = vpop.f32.mrb[0].mxu0
  %v2126 = vadd.f32 0.0, %v2125
  %v2127 = vpop.f32.mrb[0].mxu0
  %v2128 = vpop.f32.mrb[0].mxu0
  %v2129 = vadd.f32 0.0, %v2128
  %v2130 = vpop.f32.mrb[0].mxu0
  %2131 = vmatprep.mubr.bf16.mxu0 0
  %2132 = vmatmul.mubr.bf16.gmra.mrb[0].mxu0 %v2089
  %v2133 = vpop.f32.mrb[0].mxu0
  %v2134 = vadd.f32 0.0, %v2133
  %v2135 = vpop.f32.mrb[0].mxu0
  %v2136 = vpop.f32.mrb[0].mxu0
  %v2137 = vadd.f32 0.0, %v2136
  %v2138 = vpop.f32.mrb[0].mxu0
  %2139 = vdwg.mxu0
  %v2140 = vadd.f32 %v1996, %v2126
  %v2141 = vadd.f32 %v1997, %v2129
  %v2142 = vadd.f32 %v1998, %v2134
  %v2143 = vadd.f32 %v1999, %v2137
  %s2144 = scalar_lea.vmem %s5, 192
  %v2145 = vld [vmem:[%s2144] sm:$0xf]
  %v2146 = vld [vmem:[%s2144 + $0x4] sm:$0xf]
  %v2147 = vld [vmem:[%s2144 + $0x8] sm:$0xf]
  %v2148 = vld [vmem:[%s2144 + $0xc] sm:$0xf]
  %v2153 = vunpack.c.l.b16 %v2145
  %v2154 = vunpack.c.l.b16 %v2146
  %v2155 = vunpack.c.l.b16 %v2147
  %v2156 = vunpack.c.l.b16 %v2148
  %v2157 = vpack.c.b16 %v2154, %v2153
  %v2158 = vpack.c.b16 %v2156, %v2155
  %2161 = vmatprep.subr.bf16.mxu0 0
  %2162 = vmatpush1.bf16.msra.mxu0 %v418
  %2163 = vmatprep.subr.bf16.mxu0 0
  %2164 = vmatpush1.bf16.msra.mxu0 %v419
  %2165 = vmatprep.subr.bf16.mxu0 0
  %2166 = vmatpush1.bf16.msra.mxu0 %v420
  %2167 = vmatprep.subr.bf16.mxu0 0
  %2168 = vmatpush1.bf16.msra.mxu0 %v421
  %2169 = vmatprep.subr.bf16.mxu0 0
  %2170 = vmatpush1.bf16.msra.mxu0 %v422
  %2171 = vmatprep.subr.bf16.mxu0 0
  %2172 = vmatpush1.bf16.msra.mxu0 %v423
  %2173 = vmatprep.subr.bf16.mxu0 0
  %2174 = vmatpush1.bf16.msra.mxu0 %v424
  %2175 = vmatprep.subr.bf16.mxu0 0
  %2176 = vmatpush1.bf16.msra.mxu0 %v425
  %2177 = vmatprep.subr.bf16.mxu0 0
  %2178 = vmatpush1.bf16.msra.mxu0 0
  %2179 = vmatprep.subr.bf16.mxu0 0
  %2180 = vmatpush1.bf16.msra.mxu0 0
  %2181 = vmatprep.subr.bf16.mxu0 0
  %2182 = vmatpush1.bf16.msra.mxu0 0
  %2183 = vmatprep.subr.bf16.mxu0 0
  %2184 = vmatpush1.bf16.msra.mxu0 0
  %2185 = vmatprep.subr.bf16.mxu0 0
  %2186 = vmatpush1.bf16.msra.mxu0 0
  %2187 = vmatprep.subr.bf16.mxu0 0
  %2188 = vmatpush1.bf16.msra.mxu0 0
  %2189 = vmatprep.subr.bf16.mxu0 0
  %2190 = vmatpush1.bf16.msra.mxu0 0
  %2191 = vmatprep.subr.bf16.mxu0 0
  %2192 = vmatpush1.bf16.msra.mxu0 0
  %2193 = vmatprep.mubr.bf16.mxu0 0
  %2194 = vmatmul.mubr.bf16.gmra.mrb[0].mxu0 %v2157
  %v2195 = vpop.f32.mrb[0].mxu0
  %v2196 = vadd.f32 0.0, %v2195
  %v2197 = vpop.f32.mrb[0].mxu0
  %v2198 = vpop.f32.mrb[0].mxu0
  %v2199 = vadd.f32 0.0, %v2198
  %v2200 = vpop.f32.mrb[0].mxu0
  %2201 = vmatprep.mubr.bf16.mxu0 0
  %2202 = vmatmul.mubr.bf16.gmra.mrb[0].mxu0 %v2158
  %v2203 = vpop.f32.mrb[0].mxu0
  %v2204 = vadd.f32 0.0, %v2203
  %v2205 = vpop.f32.mrb[0].mxu0
  %v2206 = vpop.f32.mrb[0].mxu0
  %v2207 = vadd.f32 0.0, %v2206
  %v2208 = vpop.f32.mrb[0].mxu0
  %2209 = vdwg.mxu0
  %v2210 = vpack.c.bf16 %v2199, %v2196
  %v2211 = vpack.c.bf16 %v2207, %v2204
  %s2212 = scalar_lea.vmem %s6, 192
  %v2213 = vld [vmem:[%s2212] sm:$0xf]
  %v2214 = vld [vmem:[%s2212 + $0x4] sm:$0xf]
  %v2215 = vld [vmem:[%s2212 + $0x8] sm:$0xf]
  %v2216 = vld [vmem:[%s2212 + $0xc] sm:$0xf]
  %v2221 = vunpack.c.l.b16 %v2213
  %v2222 = vunpack.c.l.b16 %v2214
  %v2223 = vunpack.c.l.b16 %v2215
  %v2224 = vunpack.c.l.b16 %v2216
  %v2225 = vpack.c.b16 %v2222, %v2221
  %v2226 = vpack.c.b16 %v2224, %v2223
  %v2230 = vsel %vm231, %v2210, 0
  %v2233 = vsel %vm231, %v2211, 0
  %2235 = vmatprep.subr.bf16.mxu0 0
  %2236 = vmatpush1.bf16.msra.mxu0 %v2225
  %2237 = vmatprep.subr.bf16.mxu0 0
  %2238 = vmatpush1.bf16.msra.mxu0 %v2226
  %2239 = vmatprep.subr.bf16.mxu0 0
  %2240 = vmatpush1.bf16.msra.mxu0 0
  %2241 = vmatprep.subr.bf16.mxu0 0
  %2242 = vmatpush1.bf16.msra.mxu0 0
  %2243 = vmatprep.subr.bf16.mxu0 0
  %2244 = vmatpush1.bf16.msra.mxu0 0
  %2245 = vmatprep.subr.bf16.mxu0 0
  %2246 = vmatpush1.bf16.msra.mxu0 0
  %2247 = vmatprep.subr.bf16.mxu0 0
  %2248 = vmatpush1.bf16.msra.mxu0 0
  %2249 = vmatprep.subr.bf16.mxu0 0
  %2250 = vmatpush1.bf16.msra.mxu0 0
  %2251 = vmatprep.subr.bf16.mxu0 0
  %2252 = vmatpush1.bf16.msra.mxu0 0
  %2253 = vmatprep.subr.bf16.mxu0 0
  %2254 = vmatpush1.bf16.msra.mxu0 0
  %2255 = vmatprep.subr.bf16.mxu0 0
  %2256 = vmatpush1.bf16.msra.mxu0 0
  %2257 = vmatprep.subr.bf16.mxu0 0
  %2258 = vmatpush1.bf16.msra.mxu0 0
  %2259 = vmatprep.subr.bf16.mxu0 0
  %2260 = vmatpush1.bf16.msra.mxu0 0
  %2261 = vmatprep.subr.bf16.mxu0 0
  %2262 = vmatpush1.bf16.msra.mxu0 0
  %2263 = vmatprep.subr.bf16.mxu0 0
  %2264 = vmatpush1.bf16.msra.mxu0 0
  %2265 = vmatprep.subr.bf16.mxu0 0
  %2266 = vmatpush1.bf16.msra.mxu0 0
  %2267 = vmatprep.mubr.bf16.mxu0 0
  %2268 = vmatmul.mubr.bf16.gmra.mrb[0].mxu0 %v2230
  %v2269 = vpop.f32.mrb[0].mxu0
  %v2270 = vadd.f32 0.0, %v2269
  %v2271 = vpop.f32.mrb[0].mxu0
  %v2272 = vpop.f32.mrb[0].mxu0
  %v2273 = vadd.f32 0.0, %v2272
  %v2274 = vpop.f32.mrb[0].mxu0
  %2275 = vmatprep.mubr.bf16.mxu0 0
  %2276 = vmatmul.mubr.bf16.gmra.mrb[0].mxu0 %v2233
  %v2277 = vpop.f32.mrb[0].mxu0
  %v2278 = vadd.f32 0.0, %v2277
  %v2279 = vpop.f32.mrb[0].mxu0
  %v2280 = vpop.f32.mrb[0].mxu0
  %v2281 = vadd.f32 0.0, %v2280
  %v2282 = vpop.f32.mrb[0].mxu0
  %2283 = vdwg.mxu0
  %v2284 = vadd.f32 %v2140, %v2270
  %v2285 = vadd.f32 %v2141, %v2273
  %v2286 = vadd.f32 %v2142, %v2278
  %v2287 = vadd.f32 %v2143, %v2281
  %s2288 = scalar_lea.vmem %s5, 208
  %v2289 = vld [vmem:[%s2288] sm:$0xf]
  %v2290 = vld [vmem:[%s2288 + $0x4] sm:$0xf]
  %v2291 = vld [vmem:[%s2288 + $0x8] sm:$0xf]
  %v2292 = vld [vmem:[%s2288 + $0xc] sm:$0xf]
  %v2297 = vunpack.c.l.b16 %v2289
  %v2298 = vunpack.c.l.b16 %v2290
  %v2299 = vunpack.c.l.b16 %v2291
  %v2300 = vunpack.c.l.b16 %v2292
  %v2301 = vpack.c.b16 %v2298, %v2297
  %v2302 = vpack.c.b16 %v2300, %v2299
  %2305 = vmatprep.subr.bf16.mxu0 0
  %2306 = vmatpush1.bf16.msra.mxu0 %v418
  %2307 = vmatprep.subr.bf16.mxu0 0
  %2308 = vmatpush1.bf16.msra.mxu0 %v419
  %2309 = vmatprep.subr.bf16.mxu0 0
  %2310 = vmatpush1.bf16.msra.mxu0 %v420
  %2311 = vmatprep.subr.bf16.mxu0 0
  %2312 = vmatpush1.bf16.msra.mxu0 %v421
  %2313 = vmatprep.subr.bf16.mxu0 0
  %2314 = vmatpush1.bf16.msra.mxu0 %v422
  %2315 = vmatprep.subr.bf16.mxu0 0
  %2316 = vmatpush1.bf16.msra.mxu0 %v423
  %2317 = vmatprep.subr.bf16.mxu0 0
  %2318 = vmatpush1.bf16.msra.mxu0 %v424
  %2319 = vmatprep.subr.bf16.mxu0 0
  %2320 = vmatpush1.bf16.msra.mxu0 %v425
  %2321 = vmatprep.subr.bf16.mxu0 0
  %2322 = vmatpush1.bf16.msra.mxu0 0
  %2323 = vmatprep.subr.bf16.mxu0 0
  %2324 = vmatpush1.bf16.msra.mxu0 0
  %2325 = vmatprep.subr.bf16.mxu0 0
  %2326 = vmatpush1.bf16.msra.mxu0 0
  %2327 = vmatprep.subr.bf16.mxu0 0
  %2328 = vmatpush1.bf16.msra.mxu0 0
  %2329 = vmatprep.subr.bf16.mxu0 0
  %2330 = vmatpush1.bf16.msra.mxu0 0
  %2331 = vmatprep.subr.bf16.mxu0 0
  %2332 = vmatpush1.bf16.msra.mxu0 0
  %2333 = vmatprep.subr.bf16.mxu0 0
  %2334 = vmatpush1.bf16.msra.mxu0 0
  %2335 = vmatprep.subr.bf16.mxu0 0
  %2336 = vmatpush1.bf16.msra.mxu0 0
  %2337 = vmatprep.mubr.bf16.mxu0 0
  %2338 = vmatmul.mubr.bf16.gmra.mrb[0].mxu0 %v2301
  %v2339 = vpop.f32.mrb[0].mxu0
  %v2340 = vadd.f32 0.0, %v2339
  %v2341 = vpop.f32.mrb[0].mxu0
  %v2342 = vpop.f32.mrb[0].mxu0
  %v2343 = vadd.f32 0.0, %v2342
  %v2344 = vpop.f32.mrb[0].mxu0
  %2345 = vmatprep.mubr.bf16.mxu0 0
  %2346 = vmatmul.mubr.bf16.gmra.mrb[0].mxu0 %v2302
  %v2347 = vpop.f32.mrb[0].mxu0
  %v2348 = vadd.f32 0.0, %v2347
  %v2349 = vpop.f32.mrb[0].mxu0
  %v2350 = vpop.f32.mrb[0].mxu0
  %v2351 = vadd.f32 0.0, %v2350
  %v2352 = vpop.f32.mrb[0].mxu0
  %2353 = vdwg.mxu0
  %v2354 = vpack.c.bf16 %v2343, %v2340
  %v2355 = vpack.c.bf16 %v2351, %v2348
  %s2356 = scalar_lea.vmem %s6, 208
  %v2357 = vld [vmem:[%s2356] sm:$0xf]
  %v2358 = vld [vmem:[%s2356 + $0x4] sm:$0xf]
  %v2359 = vld [vmem:[%s2356 + $0x8] sm:$0xf]
  %v2360 = vld [vmem:[%s2356 + $0xc] sm:$0xf]
  %v2365 = vunpack.c.l.b16 %v2357
  %v2366 = vunpack.c.l.b16 %v2358
  %v2367 = vunpack.c.l.b16 %v2359
  %v2368 = vunpack.c.l.b16 %v2360
  %v2369 = vpack.c.b16 %v2366, %v2365
  %v2370 = vpack.c.b16 %v2368, %v2367
  %v2374 = vsel %vm231, %v2354, 0
  %v2377 = vsel %vm231, %v2355, 0
  %2379 = vmatprep.subr.bf16.mxu0 0
  %2380 = vmatpush1.bf16.msra.mxu0 %v2369
  %2381 = vmatprep.subr.bf16.mxu0 0
  %2382 = vmatpush1.bf16.msra.mxu0 %v2370
  %2383 = vmatprep.subr.bf16.mxu0 0
  %2384 = vmatpush1.bf16.msra.mxu0 0
  %2385 = vmatprep.subr.bf16.mxu0 0
  %2386 = vmatpush1.bf16.msra.mxu0 0
  %2387 = vmatprep.subr.bf16.mxu0 0
  %2388 = vmatpush1.bf16.msra.mxu0 0
  %2389 = vmatprep.subr.bf16.mxu0 0
  %2390 = vmatpush1.bf16.msra.mxu0 0
  %2391 = vmatprep.subr.bf16.mxu0 0
  %2392 = vmatpush1.bf16.msra.mxu0 0
  %2393 = vmatprep.subr.bf16.mxu0 0
  %2394 = vmatpush1.bf16.msra.mxu0 0
  %2395 = vmatprep.subr.bf16.mxu0 0
  %2396 = vmatpush1.bf16.msra.mxu0 0
  %2397 = vmatprep.subr.bf16.mxu0 0
  %2398 = vmatpush1.bf16.msra.mxu0 0
  %2399 = vmatprep.subr.bf16.mxu0 0
  %2400 = vmatpush1.bf16.msra.mxu0 0
  %2401 = vmatprep.subr.bf16.mxu0 0
  %2402 = vmatpush1.bf16.msra.mxu0 0
  %2403 = vmatprep.subr.bf16.mxu0 0
  %2404 = vmatpush1.bf16.msra.mxu0 0
  %2405 = vmatprep.subr.bf16.mxu0 0
  %2406 = vmatpush1.bf16.msra.mxu0 0
  %2407 = vmatprep.subr.bf16.mxu0 0
  %2408 = vmatpush1.bf16.msra.mxu0 0
  %2409 = vmatprep.subr.bf16.mxu0 0
  %2410 = vmatpush1.bf16.msra.mxu0 0
  %2411 = vmatprep.mubr.bf16.mxu0 0
  %2412 = vmatmul.mubr.bf16.gmra.mrb[0].mxu0 %v2374
  %v2413 = vpop.f32.mrb[0].mxu0
  %v2414 = vadd.f32 0.0, %v2413
  %v2415 = vpop.f32.mrb[0].mxu0
  %v2416 = vpop.f32.mrb[0].mxu0
  %v2417 = vadd.f32 0.0, %v2416
  %v2418 = vpop.f32.mrb[0].mxu0
  %2419 = vmatprep.mubr.bf16.mxu0 0
  %2420 = vmatmul.mubr.bf16.gmra.mrb[0].mxu0 %v2377
  %v2421 = vpop.f32.mrb[0].mxu0
  %v2422 = vadd.f32 0.0, %v2421
  %v2423 = vpop.f32.mrb[0].mxu0
  %v2424 = vpop.f32.mrb[0].mxu0
  %v2425 = vadd.f32 0.0, %v2424
  %v2426 = vpop.f32.mrb[0].mxu0
  %2427 = vdwg.mxu0
  %v2428 = vadd.f32 %v2284, %v2414
  %v2429 = vadd.f32 %v2285, %v2417
  %v2430 = vadd.f32 %v2286, %v2422
  %v2431 = vadd.f32 %v2287, %v2425
  %s2432 = scalar_lea.vmem %s5, 224
  %v2433 = vld [vmem:[%s2432] sm:$0xf]
  %v2434 = vld [vmem:[%s2432 + $0x4] sm:$0xf]
  %v2435 = vld [vmem:[%s2432 + $0x8] sm:$0xf]
  %v2436 = vld [vmem:[%s2432 + $0xc] sm:$0xf]
  %v2441 = vunpack.c.l.b16 %v2433
  %v2442 = vunpack.c.l.b16 %v2434
  %v2443 = vunpack.c.l.b16 %v2435
  %v2444 = vunpack.c.l.b16 %v2436
  %v2445 = vpack.c.b16 %v2442, %v2441
  %v2446 = vpack.c.b16 %v2444, %v2443
  %2449 = vmatprep.subr.bf16.mxu0 0
  %2450 = vmatpush1.bf16.msra.mxu0 %v418
  %2451 = vmatprep.subr.bf16.mxu0 0
  %2452 = vmatpush1.bf16.msra.mxu0 %v419
  %2453 = vmatprep.subr.bf16.mxu0 0
  %2454 = vmatpush1.bf16.msra.mxu0 %v420
  %2455 = vmatprep.subr.bf16.mxu0 0
  %2456 = vmatpush1.bf16.msra.mxu0 %v421
  %2457 = vmatprep.subr.bf16.mxu0 0
  %2458 = vmatpush1.bf16.msra.mxu0 %v422
  %2459 = vmatprep.subr.bf16.mxu0 0
  %2460 = vmatpush1.bf16.msra.mxu0 %v423
  %2461 = vmatprep.subr.bf16.mxu0 0
  %2462 = vmatpush1.bf16.msra.mxu0 %v424
  %2463 = vmatprep.subr.bf16.mxu0 0
  %2464 = vmatpush1.bf16.msra.mxu0 %v425
  %2465 = vmatprep.subr.bf16.mxu0 0
  %2466 = vmatpush1.bf16.msra.mxu0 0
  %2467 = vmatprep.subr.bf16.mxu0 0
  %2468 = vmatpush1.bf16.msra.mxu0 0
  %2469 = vmatprep.subr.bf16.mxu0 0
  %2470 = vmatpush1.bf16.msra.mxu0 0
  %2471 = vmatprep.subr.bf16.mxu0 0
  %2472 = vmatpush1.bf16.msra.mxu0 0
  %2473 = vmatprep.subr.bf16.mxu0 0
  %2474 = vmatpush1.bf16.msra.mxu0 0
  %2475 = vmatprep.subr.bf16.mxu0 0
  %2476 = vmatpush1.bf16.msra.mxu0 0
  %2477 = vmatprep.subr.bf16.mxu0 0
  %2478 = vmatpush1.bf16.msra.mxu0 0
  %2479 = vmatprep.subr.bf16.mxu0 0
  %2480 = vmatpush1.bf16.msra.mxu0 0
  %2481 = vmatprep.mubr.bf16.mxu0 0
  %2482 = vmatmul.mubr.bf16.gmra.mrb[0].mxu0 %v2445
  %v2483 = vpop.f32.mrb[0].mxu0
  %v2484 = vadd.f32 0.0, %v2483
  %v2485 = vpop.f32.mrb[0].mxu0
  %v2486 = vpop.f32.mrb[0].mxu0
  %v2487 = vadd.f32 0.0, %v2486
  %v2488 = vpop.f32.mrb[0].mxu0
  %2489 = vmatprep.mubr.bf16.mxu0 0
  %2490 = vmatmul.mubr.bf16.gmra.mrb[0].mxu0 %v2446
  %v2491 = vpop.f32.mrb[0].mxu0
  %v2492 = vadd.f32 0.0, %v2491
  %v2493 = vpop.f32.mrb[0].mxu0
  %v2494 = vpop.f32.mrb[0].mxu0
  %v2495 = vadd.f32 0.0, %v2494
  %v2496 = vpop.f32.mrb[0].mxu0
  %2497 = vdwg.mxu0
  %v2498 = vpack.c.bf16 %v2487, %v2484
  %v2499 = vpack.c.bf16 %v2495, %v2492
  %s2500 = scalar_lea.vmem %s6, 224
  %v2501 = vld [vmem:[%s2500] sm:$0xf]
  %v2502 = vld [vmem:[%s2500 + $0x4] sm:$0xf]
  %v2503 = vld [vmem:[%s2500 + $0x8] sm:$0xf]
  %v2504 = vld [vmem:[%s2500 + $0xc] sm:$0xf]
  %v2509 = vunpack.c.l.b16 %v2501
  %v2510 = vunpack.c.l.b16 %v2502
  %v2511 = vunpack.c.l.b16 %v2503
  %v2512 = vunpack.c.l.b16 %v2504
  %v2513 = vpack.c.b16 %v2510, %v2509
  %v2514 = vpack.c.b16 %v2512, %v2511
  %v2518 = vsel %vm231, %v2498, 0
  %v2521 = vsel %vm231, %v2499, 0
  %2523 = vmatprep.subr.bf16.mxu0 0
  %2524 = vmatpush1.bf16.msra.mxu0 %v2513
  %2525 = vmatprep.subr.bf16.mxu0 0
  %2526 = vmatpush1.bf16.msra.mxu0 %v2514
  %2527 = vmatprep.subr.bf16.mxu0 0
  %2528 = vmatpush1.bf16.msra.mxu0 0
  %2529 = vmatprep.subr.bf16.mxu0 0
  %2530 = vmatpush1.bf16.msra.mxu0 0
  %2531 = vmatprep.subr.bf16.mxu0 0
  %2532 = vmatpush1.bf16.msra.mxu0 0
  %2533 = vmatprep.subr.bf16.mxu0 0
  %2534 = vmatpush1.bf16.msra.mxu0 0
  %2535 = vmatprep.subr.bf16.mxu0 0
  %2536 = vmatpush1.bf16.msra.mxu0 0
  %2537 = vmatprep.subr.bf16.mxu0 0
  %2538 = vmatpush1.bf16.msra.mxu0 0
  %2539 = vmatprep.subr.bf16.mxu0 0
  %2540 = vmatpush1.bf16.msra.mxu0 0
  %2541 = vmatprep.subr.bf16.mxu0 0
  %2542 = vmatpush1.bf16.msra.mxu0 0
  %2543 = vmatprep.subr.bf16.mxu0 0
  %2544 = vmatpush1.bf16.msra.mxu0 0
  %2545 = vmatprep.subr.bf16.mxu0 0
  %2546 = vmatpush1.bf16.msra.mxu0 0
  %2547 = vmatprep.subr.bf16.mxu0 0
  %2548 = vmatpush1.bf16.msra.mxu0 0
  %2549 = vmatprep.subr.bf16.mxu0 0
  %2550 = vmatpush1.bf16.msra.mxu0 0
  %2551 = vmatprep.subr.bf16.mxu0 0
  %2552 = vmatpush1.bf16.msra.mxu0 0
  %2553 = vmatprep.subr.bf16.mxu0 0
  %2554 = vmatpush1.bf16.msra.mxu0 0
  %2555 = vmatprep.mubr.bf16.mxu0 0
  %2556 = vmatmul.mubr.bf16.gmra.mrb[0].mxu0 %v2518
  %v2557 = vpop.f32.mrb[0].mxu0
  %v2558 = vadd.f32 0.0, %v2557
  %v2559 = vpop.f32.mrb[0].mxu0
  %v2560 = vpop.f32.mrb[0].mxu0
  %v2561 = vadd.f32 0.0, %v2560
  %v2562 = vpop.f32.mrb[0].mxu0
  %2563 = vmatprep.mubr.bf16.mxu0 0
  %2564 = vmatmul.mubr.bf16.gmra.mrb[0].mxu0 %v2521
  %v2565 = vpop.f32.mrb[0].mxu0
  %v2566 = vadd.f32 0.0, %v2565
  %v2567 = vpop.f32.mrb[0].mxu0
  %v2568 = vpop.f32.mrb[0].mxu0
  %v2569 = vadd.f32 0.0, %v2568
  %v2570 = vpop.f32.mrb[0].mxu0
  %2571 = vdwg.mxu0
  %v2572 = vadd.f32 %v2428, %v2558
  %v2573 = vadd.f32 %v2429, %v2561
  %v2574 = vadd.f32 %v2430, %v2566
  %v2575 = vadd.f32 %v2431, %v2569
  %s2576 = scalar_lea.vmem %s5, 240
  %v2577 = vld [vmem:[%s2576] sm:$0xf]
  %v2578 = vld [vmem:[%s2576 + $0x4] sm:$0xf]
  %v2579 = vld [vmem:[%s2576 + $0x8] sm:$0xf]
  %v2580 = vld [vmem:[%s2576 + $0xc] sm:$0xf]
  %v2585 = vunpack.c.l.b16 %v2577
  %v2586 = vunpack.c.l.b16 %v2578
  %v2587 = vunpack.c.l.b16 %v2579
  %v2588 = vunpack.c.l.b16 %v2580
  %v2589 = vpack.c.b16 %v2586, %v2585
  %v2590 = vpack.c.b16 %v2588, %v2587
  %2593 = vmatprep.subr.bf16.mxu0 0
  %2594 = vmatpush1.bf16.msra.mxu0 %v418
  %2595 = vmatprep.subr.bf16.mxu0 0
  %2596 = vmatpush1.bf16.msra.mxu0 %v419
  %2597 = vmatprep.subr.bf16.mxu0 0
  %2598 = vmatpush1.bf16.msra.mxu0 %v420
  %2599 = vmatprep.subr.bf16.mxu0 0
  %2600 = vmatpush1.bf16.msra.mxu0 %v421
  %2601 = vmatprep.subr.bf16.mxu0 0
  %2602 = vmatpush1.bf16.msra.mxu0 %v422
  %2603 = vmatprep.subr.bf16.mxu0 0
  %2604 = vmatpush1.bf16.msra.mxu0 %v423
  %2605 = vmatprep.subr.bf16.mxu0 0
  %2606 = vmatpush1.bf16.msra.mxu0 %v424
  %2607 = vmatprep.subr.bf16.mxu0 0
  %2608 = vmatpush1.bf16.msra.mxu0 %v425
  %2609 = vmatprep.subr.bf16.mxu0 0
  %2610 = vmatpush1.bf16.msra.mxu0 0
  %2611 = vmatprep.subr.bf16.mxu0 0
  %2612 = vmatpush1.bf16.msra.mxu0 0
  %2613 = vmatprep.subr.bf16.mxu0 0
  %2614 = vmatpush1.bf16.msra.mxu0 0
  %2615 = vmatprep.subr.bf16.mxu0 0
  %2616 = vmatpush1.bf16.msra.mxu0 0
  %2617 = vmatprep.subr.bf16.mxu0 0
  %2618 = vmatpush1.bf16.msra.mxu0 0
  %2619 = vmatprep.subr.bf16.mxu0 0
  %2620 = vmatpush1.bf16.msra.mxu0 0
  %2621 = vmatprep.subr.bf16.mxu0 0
  %2622 = vmatpush1.bf16.msra.mxu0 0
  %2623 = vmatprep.subr.bf16.mxu0 0
  %2624 = vmatpush1.bf16.msra.mxu0 0
  %2625 = vmatprep.mubr.bf16.mxu0 0
  %2626 = vmatmul.mubr.bf16.gmra.mrb[0].mxu0 %v2589
  %v2627 = vpop.f32.mrb[0].mxu0
  %v2628 = vadd.f32 0.0, %v2627
  %v2629 = vpop.f32.mrb[0].mxu0
  %v2630 = vpop.f32.mrb[0].mxu0
  %v2631 = vadd.f32 0.0, %v2630
  %v2632 = vpop.f32.mrb[0].mxu0
  %2633 = vmatprep.mubr.bf16.mxu0 0
  %2634 = vmatmul.mubr.bf16.gmra.mrb[0].mxu0 %v2590
  %v2635 = vpop.f32.mrb[0].mxu0
  %v2636 = vadd.f32 0.0, %v2635
  %v2637 = vpop.f32.mrb[0].mxu0
  %v2638 = vpop.f32.mrb[0].mxu0
  %v2639 = vadd.f32 0.0, %v2638
  %v2640 = vpop.f32.mrb[0].mxu0
  %2641 = vdwg.mxu0
  %v2642 = vpack.c.bf16 %v2631, %v2628
  %v2643 = vpack.c.bf16 %v2639, %v2636
  %s2644 = scalar_lea.vmem %s6, 240
  %v2645 = vld [vmem:[%s2644] sm:$0xf]
  %v2646 = vld [vmem:[%s2644 + $0x4] sm:$0xf]
  %v2647 = vld [vmem:[%s2644 + $0x8] sm:$0xf]
  %v2648 = vld [vmem:[%s2644 + $0xc] sm:$0xf]
  %v2653 = vunpack.c.l.b16 %v2645
  %v2654 = vunpack.c.l.b16 %v2646
  %v2655 = vunpack.c.l.b16 %v2647
  %v2656 = vunpack.c.l.b16 %v2648
  %v2657 = vpack.c.b16 %v2654, %v2653
  %v2658 = vpack.c.b16 %v2656, %v2655
  %v2662 = vsel %vm231, %v2642, 0
  %v2665 = vsel %vm231, %v2643, 0
  %2667 = vmatprep.subr.bf16.mxu0 0
  %2668 = vmatpush1.bf16.msra.mxu0 %v2657
  %2669 = vmatprep.subr.bf16.mxu0 0
  %2670 = vmatpush1.bf16.msra.mxu0 %v2658
  %2671 = vmatprep.subr.bf16.mxu0 0
  %2672 = vmatpush1.bf16.msra.mxu0 0
  %2673 = vmatprep.subr.bf16.mxu0 0
  %2674 = vmatpush1.bf16.msra.mxu0 0
  %2675 = vmatprep.subr.bf16.mxu0 0
  %2676 = vmatpush1.bf16.msra.mxu0 0
  %2677 = vmatprep.subr.bf16.mxu0 0
  %2678 = vmatpush1.bf16.msra.mxu0 0
  %2679 = vmatprep.subr.bf16.mxu0 0
  %2680 = vmatpush1.bf16.msra.mxu0 0
  %2681 = vmatprep.subr.bf16.mxu0 0
  %2682 = vmatpush1.bf16.msra.mxu0 0
  %2683 = vmatprep.subr.bf16.mxu0 0
  %2684 = vmatpush1.bf16.msra.mxu0 0
  %2685 = vmatprep.subr.bf16.mxu0 0
  %2686 = vmatpush1.bf16.msra.mxu0 0
  %2687 = vmatprep.subr.bf16.mxu0 0
  %2688 = vmatpush1.bf16.msra.mxu0 0
  %2689 = vmatprep.subr.bf16.mxu0 0
  %2690 = vmatpush1.bf16.msra.mxu0 0
  %2691 = vmatprep.subr.bf16.mxu0 0
  %2692 = vmatpush1.bf16.msra.mxu0 0
  %2693 = vmatprep.subr.bf16.mxu0 0
  %2694 = vmatpush1.bf16.msra.mxu0 0
  %2695 = vmatprep.subr.bf16.mxu0 0
  %2696 = vmatpush1.bf16.msra.mxu0 0
  %2697 = vmatprep.subr.bf16.mxu0 0
  %2698 = vmatpush1.bf16.msra.mxu0 0
  %2699 = vmatprep.mubr.bf16.mxu0 0
  %2700 = vmatmul.mubr.bf16.gmra.mrb[0].mxu0 %v2662
  %v2701 = vpop.f32.mrb[0].mxu0
  %v2702 = vadd.f32 0.0, %v2701
  %v2703 = vpop.f32.mrb[0].mxu0
  %v2704 = vpop.f32.mrb[0].mxu0
  %v2705 = vadd.f32 0.0, %v2704
  %v2706 = vpop.f32.mrb[0].mxu0
  %2707 = vmatprep.mubr.bf16.mxu0 0
  %2708 = vmatmul.mubr.bf16.gmra.mrb[0].mxu0 %v2665
  %v2709 = vpop.f32.mrb[0].mxu0
  %v2710 = vadd.f32 0.0, %v2709
  %v2711 = vpop.f32.mrb[0].mxu0
  %v2712 = vpop.f32.mrb[0].mxu0
  %v2713 = vadd.f32 0.0, %v2712
  %v2714 = vpop.f32.mrb[0].mxu0
  %2715 = vdwg.mxu0
  %v2716 = vadd.f32 %v2572, %v2702
  %v2717 = vadd.f32 %v2573, %v2705
  %v2718 = vadd.f32 %v2574, %v2710
  %v2719 = vadd.f32 %v2575, %v2713
  %v2720 = vld [vmem:[%s7] sm:$0x1]
  %v2722 = vlaneseq
  %v2723 = vshrl.u32 %v2722, 7
  %v2724 = vsub.s32 0, %v2723
  %v2725 = vrot.slane %v2720, %v2724
  %v2727 = vadd.f32 %v2716, %v2725
  %v2728 = vadd.f32 %v2717, %v2725
  %v2729 = vadd.f32 %v2718, %v2725
  %v2730 = vadd.f32 %v2719, %v2725
  %v2731 = vld [vmem:[%s8] sm:$0x1]
  %v2732 = vld [vmem:[%s9] sm:$0x1]
  %vm2733 = vcmask 523264
  %v2734 = vsel %vm2733, %v2727, 0.0
  %v2735 = vsel %vm2733, %v2728, 0.0
  %v2736 = vadd.f32 %v2734, %v2735
  %v2737 = vsel %vm2733, %v2729, 0.0
  %v2738 = vadd.f32 %v2736, %v2737
  %v2739 = vsel %vm2733, %v2730, 0.0
  %v2740 = vadd.f32 %v2738, %v2739
  %v2741 = vrot.slane %v2740, 4
  %v2742 = vadd.f32 %v2740, %v2741
  %v2743 = vrot.slane %v2742, 2
  %v2744 = vadd.f32 %v2742, %v2743
  %v2745 = vrot.slane %v2744, 1
  %v2746 = vadd.f32 %v2744, %v2745
  %v2747 = vmul.f32 %v2746, 0.03125
  %v2748 = vsub.f32 %v2727, %v2747
  %v2749 = vsub.f32 %v2728, %v2747
  %v2750 = vsub.f32 %v2729, %v2747
  %v2751 = vsub.f32 %v2730, %v2747
  %v2752 = vmul.f32 %v2748, %v2748
  %v2753 = vmul.f32 %v2749, %v2749
  %v2754 = vmul.f32 %v2750, %v2750
  %v2755 = vmul.f32 %v2751, %v2751
  %v2756 = vsel %vm2733, %v2752, 0.0
  %v2757 = vsel %vm2733, %v2753, 0.0
  %v2758 = vadd.f32 %v2756, %v2757
  %v2759 = vsel %vm2733, %v2754, 0.0
  %v2760 = vadd.f32 %v2758, %v2759
  %v2761 = vsel %vm2733, %v2755, 0.0
  %v2762 = vadd.f32 %v2760, %v2761
  %v2763 = vrot.slane %v2762, 4
  %v2764 = vadd.f32 %v2762, %v2763
  %v2765 = vrot.slane %v2764, 2
  %v2766 = vadd.f32 %v2764, %v2765
  %v2767 = vrot.slane %v2766, 1
  %v2768 = vadd.f32 %v2766, %v2767
  %v2769 = vmul.f32 %v2768, 0.03125
  %v2770 = vadd.f32 %v2769, 1e-05
  %v2771 = vrsqrt.pop %v2770
  %v2772 = vmul.f32 %v2748, %v2771
  %v2773 = vmul.f32 %v2749, %v2771
  %v2774 = vmul.f32 %v2750, %v2771
  %v2775 = vmul.f32 %v2751, %v2771
  %v2777 = vlaneseq
  %v2778 = vshrl.u32 %v2777, 7
  %v2779 = vsub.s32 0, %v2778
  %v2780 = vrot.slane %v2731, %v2779
  %v2782 = vmul.f32 %v2772, %v2780
  %v2783 = vmul.f32 %v2773, %v2780
  %v2784 = vmul.f32 %v2774, %v2780
  %v2785 = vmul.f32 %v2775, %v2780
  %v2787 = vlaneseq
  %v2788 = vshrl.u32 %v2787, 7
  %v2789 = vsub.s32 0, %v2788
  %v2790 = vrot.slane %v2732, %v2789
  %v2792 = vadd.f32 %v2782, %v2790
  %v2793 = vadd.f32 %v2783, %v2790
  %v2794 = vadd.f32 %v2784, %v2790
  %v2795 = vadd.f32 %v2785, %v2790
  %v2796 = vmax.f32 %v2792, 0.0
  %v2797 = vmax.f32 %v2793, 0.0
  %v2798 = vmax.f32 %v2794, 0.0
  %v2799 = vmax.f32 %v2795, 0.0
  %v2800 = vpack.c.bf16 %v2797, %v2796
  %v2801 = vpack.c.bf16 %v2799, %v2798
  %v2804 = vunpack.c.l.b16 %v2800
  %v2805 = vunpack.c.h.b16 %v2800
  %v2806 = vunpack.c.l.b16 %v2801
  %v2807 = vunpack.c.h.b16 %v2801
  %v2808 = vpack.c.b16 %v2804, %v2804
  %v2809 = vpack.c.b16 %v2805, %v2805
  %v2810 = vpack.c.b16 %v2806, %v2806
  %v2811 = vpack.c.b16 %v2807, %v2807
  %vm2816 = vcmask 519168
  %2817 = vst.msk [vmem:[%s10] sm:$0xf] %vm2816, %v2808
  %2818 = vst.msk [vmem:[%s10 + $0x4] sm:$0xf] %vm2816, %v2809
  %2819 = vst.msk [vmem:[%s10 + $0x8] sm:$0xf] %vm2816, %v2810
  %2820 = vst.msk [vmem:[%s10 + $0xc] sm:$0xf] %vm2816, %v2811
  // Predicated region
  $region42: #{vae_forward.3} parent=0 // pred_check
    _
  $region43: #{vae_forward.3} parent=0 // pred_check_branch
    %2822 = sbr.rel (0) target = $region45
  $region44: #{vae_forward.3} parent=0 // pred_region
    _
  $region45: #{vae_forward.3} parent=0 // pred_fallthru
    _
  // Predicated region
  $region46: #{vae_forward.3} parent=0 // pred_check
    _
  $region47: #{vae_forward.3} parent=0 // pred_check_branch
    %2824 = sbr.rel (0) target = $region49
  $region48: #{vae_forward.3} parent=0 // pred_region
    _
  $region49: #{vae_forward.3} parent=0 // pred_fallthru
    _

// kernel: vae_forward.5
$region0: #{vae_forward.5}
  #allocation0 [shape = 'u32[]', space=smem, size = 0x4, offset = 0x4, fixed_abs, tag = 'smem constant byte address 0x4 - core index']
  #allocation1 [shape = 'u32[144,128]{1,0:T(1,128)}', space=vmem, size = 0x12000, scoped, tag = 'internal scratch']
  %s0 = inlined_call_operand.vmem [shape: bf16[162,576], index: 0, kind: input, shape index: {}]
  %s1 = inlined_call_operand.vmem [shape: bf16[576,32], index: 1, kind: input, shape index: {}]
  %s2 = inlined_call_operand.vmem [shape: f32[1,32], index: 2, kind: input, shape index: {}]
  %s3 = inlined_call_operand.vmem [shape: f32[1,32], index: 3, kind: input, shape index: {}]
  %s4 = inlined_call_operand.vmem [shape: f32[1,32], index: 4, kind: input, shape index: {}]
  %s5 = inlined_call_operand.vmem [shape: bf16[32,9], index: 5, kind: input, shape index: {}]
  %s6 = inlined_call_operand.vmem [shape: f32[162,9], index: 6, kind: output, shape index: {}]
  %s7 = sld [smem:[#allocation0]]
  $region34: #{vae_forward.5} parent=0
    _
  %s9 = ssub.s32 1, %s7
  %s10 = scalar_select 0, %s9, %s7
  // Predicated region
  $region2: #{vae_forward.5} parent=0 // pred_check
    _
  $region3: #{vae_forward.5} parent=0 // pred_check_branch
    %12 = sbr.rel (0) target = $region5
  $region4: #{vae_forward.5} parent=0 // pred_region
    _
  $region5: #{vae_forward.5} parent=0 // pred_fallthru
    _
  // Predicated region
  $region6: #{vae_forward.5} parent=0 // pred_check
    _
  $region7: #{vae_forward.5} parent=0 // pred_check_branch
    %14 = sbr.rel (0) target = $region9
  $region8: #{vae_forward.5} parent=0 // pred_region
    _
  $region9: #{vae_forward.5} parent=0 // pred_fallthru
    _
  // Predicated region
  $region10: #{vae_forward.5} parent=0 // pred_check
    _
  $region11: #{vae_forward.5} parent=0 // pred_check_branch
    %16 = sbr.rel (0) target = $region13
  $region12: #{vae_forward.5} parent=0 // pred_region
    _
  $region13: #{vae_forward.5} parent=0 // pred_fallthru
    _
  // Predicated region
  $region14: #{vae_forward.5} parent=0 // pred_check
    _
  $region15: #{vae_forward.5} parent=0 // pred_check_branch
    %18 = sbr.rel (0) target = $region17
  $region16: #{vae_forward.5} parent=0 // pred_region
    _
  $region17: #{vae_forward.5} parent=0 // pred_fallthru
    _
  // Predicated region
  $region18: #{vae_forward.5} parent=0 // pred_check
    _
  $region19: #{vae_forward.5} parent=0 // pred_check_branch
    %20 = sbr.rel (0) target = $region21
  $region20: #{vae_forward.5} parent=0 // pred_region
    _
  $region21: #{vae_forward.5} parent=0 // pred_fallthru
    _
  // Predicated region
  $region22: #{vae_forward.5} parent=0 // pred_check
    _
  $region23: #{vae_forward.5} parent=0 // pred_check_branch
    %22 = sbr.rel (0) target = $region25
  $region24: #{vae_forward.5} parent=0 // pred_region
    _
  $region25: #{vae_forward.5} parent=0 // pred_fallthru
    _
  %v24 = vld [vmem:[%s0] sm:$0xff]
  %v25 = vld [vmem:[%s0 + $0x8] sm:$0xff]
  %v26 = vld [vmem:[%s0 + $0x10] sm:$0xf]
  %v27 = vld [vmem:[%s0 + $0x14] sm:$0xff]
  %v28 = vld [vmem:[%s0 + $0x1c] sm:$0xff]
  %v29 = vld [vmem:[%s0 + $0x24] sm:$0xf]
  %v30 = vld [vmem:[%s0 + $0x28] sm:$0xff]
  %v31 = vld [vmem:[%s0 + $0x30] sm:$0xff]
  %v32 = vld [vmem:[%s0 + $0x38] sm:$0xf]
  %v33 = vld [vmem:[%s0 + $0x3c] sm:$0xff]
  %v34 = vld [vmem:[%s0 + $0x44] sm:$0xff]
  %v35 = vld [vmem:[%s0 + $0x4c] sm:$0xf]
  %v36 = vld [vmem:[%s0 + $0x50] sm:$0xff]
  %v37 = vld [vmem:[%s0 + $0x58] sm:$0xff]
  %v38 = vld [vmem:[%s0 + $0x60] sm:$0xf]
  %v39 = vld [vmem:[%s0 + $0x64] sm:$0xff]
  %v40 = vld [vmem:[%s0 + $0x6c] sm:$0xff]
  %v41 = vld [vmem:[%s0 + $0x74] sm:$0xf]
  %v42 = vld [vmem:[%s0 + $0x78] sm:$0xff]
  %v43 = vld [vmem:[%s0 + $0x80] sm:$0xff]
  %v44 = vld [vmem:[%s0 + $0x88] sm:$0xf]
  %v45 = vld [vmem:[%s0 + $0x8c] sm:$0xff]
  %v46 = vld [vmem:[%s0 + $0x94] sm:$0xff]
  %v47 = vld [vmem:[%s0 + $0x9c] sm:$0xf]
  %v48 = vld [vmem:[%s0 + $0xa0] sm:$0xff]
  %v49 = vld [vmem:[%s0 + $0xa8] sm:$0xff]
  %v50 = vld [vmem:[%s0 + $0xb0] sm:$0xf]
  %v51 = vld [vmem:[%s0 + $0xb4] sm:$0xff]
  %v52 = vld [vmem:[%s0 + $0xbc] sm:$0xff]
  %v53 = vld [vmem:[%s0 + $0xc4] sm:$0xf]
  %v54 = vld [vmem:[%s0 + $0xc8] sm:$0xff]
  %v55 = vld [vmem:[%s0 + $0xd0] sm:$0xff]
  %v56 = vld [vmem:[%s0 + $0xd8] sm:$0xf]
  %v57 = vld [vmem:[%s0 + $0xdc] sm:$0xff]
  %v58 = vld [vmem:[%s0 + $0xe4] sm:$0xff]
  %v59 = vld [vmem:[%s0 + $0xec] sm:$0xf]
  %v60 = vld [vmem:[%s0 + $0xf0] sm:$0xff]
  %v61 = vld [vmem:[%s0 + $0xf8] sm:$0xff]
  %v62 = vld [vmem:[%s0 + $0x100] sm:$0xf]
  %v63 = vld [vmem:[%s0 + $0x104] sm:$0xff]
  %v64 = vld [vmem:[%s0 + $0x10c] sm:$0xff]
  %v65 = vld [vmem:[%s0 + $0x114] sm:$0xf]
  %v66 = vld [vmem:[%s0 + $0x118] sm:$0xff]
  %v67 = vld [vmem:[%s0 + $0x120] sm:$0xff]
  %v68 = vld [vmem:[%s0 + $0x128] sm:$0xf]
  %v69 = vld [vmem:[%s0 + $0x12c] sm:$0xff]
  %v70 = vld [vmem:[%s0 + $0x134] sm:$0xff]
  %v71 = vld [vmem:[%s0 + $0x13c] sm:$0xf]
  %v72 = vld [vmem:[%s0 + $0x140] sm:$0xff]
  %v73 = vld [vmem:[%s0 + $0x148] sm:$0xff]
  %v74 = vld [vmem:[%s0 + $0x150] sm:$0xf]
  %v75 = vld [vmem:[%s0 + $0x154] sm:$0xff]
  %v76 = vld [vmem:[%s0 + $0x15c] sm:$0xff]
  %v77 = vld [vmem:[%s0 + $0x164] sm:$0xf]
  %v78 = vld [vmem:[%s0 + $0x168] sm:$0xff]
  %v79 = vld [vmem:[%s0 + $0x170] sm:$0xff]
  %v80 = vld [vmem:[%s0 + $0x178] sm:$0xf]
  %v81 = vld [vmem:[%s0 + $0x17c] sm:$0xff]
  %v82 = vld [vmem:[%s0 + $0x184] sm:$0xff]
  %v83 = vld [vmem:[%s0 + $0x18c] sm:$0xf]
  %v84 = vld [vmem:[%s0 + $0x190] sm:$0x11]
  %v85 = vld [vmem:[%s0 + $0x198] sm:$0x11]
  %v86 = vld [vmem:[%s0 + $0x1a0] sm:$0x1]
  %v87 = vld [vmem:[%s1] sm:$0xf]
  %v88 = vld [vmem:[%s1 + $0x4] sm:$0xf]
  %v89 = vld [vmem:[%s1 + $0x8] sm:$0xf]
  %v90 = vld [vmem:[%s1 + $0xc] sm:$0xf]
  %v91 = vld [vmem:[%s1 + $0x10] sm:$0xf]
  %v92 = vld [vmem:[%s1 + $0x14] sm:$0xf]
  %v93 = vld [vmem:[%s1 + $0x18] sm:$0xf]
  %v94 = vld [vmem:[%s1 + $0x1c] sm:$0xf]
  %v95 = vld [vmem:[%s1 + $0x20] sm:$0xf]
  %v96 = vld [vmem:[%s1 + $0x24] sm:$0xf]
  %v97 = vld [vmem:[%s1 + $0x28] sm:$0xf]
  %v98 = vld [vmem:[%s1 + $0x2c] sm:$0xf]
  %v99 = vld [vmem:[%s1 + $0x30] sm:$0xf]
  %v100 = vld [vmem:[%s1 + $0x34] sm:$0xf]
  %v101 = vld [vmem:[%s1 + $0x38] sm:$0xf]
  %v102 = vld [vmem:[%s1 + $0x3c] sm:$0xf]
  %v103 = vld [vmem:[%s1 + $0x40] sm:$0xf]
  %v104 = vld [vmem:[%s1 + $0x44] sm:$0xf]
  %v105 = vld [vmem:[%s1 + $0x48] sm:$0xf]
  %v106 = vld [vmem:[%s1 + $0x4c] sm:$0xf]
  %v107 = vld [vmem:[%s1 + $0x50] sm:$0xf]
  %v108 = vld [vmem:[%s1 + $0x54] sm:$0xf]
  %v109 = vld [vmem:[%s1 + $0x58] sm:$0xf]
  %v110 = vld [vmem:[%s1 + $0x5c] sm:$0xf]
  %v111 = vld [vmem:[%s1 + $0x60] sm:$0xf]
  %v112 = vld [vmem:[%s1 + $0x64] sm:$0xf]
  %v113 = vld [vmem:[%s1 + $0x68] sm:$0xf]
  %v114 = vld [vmem:[%s1 + $0x6c] sm:$0xf]
  %v115 = vld [vmem:[%s1 + $0x70] sm:$0xf]
  %v116 = vld [vmem:[%s1 + $0x74] sm:$0xf]
  %v117 = vld [vmem:[%s1 + $0x78] sm:$0xf]
  %v118 = vld [vmem:[%s1 + $0x7c] sm:$0xf]
  %v119 = vld [vmem:[%s1 + $0x80] sm:$0xf]
  %v120 = vld [vmem:[%s1 + $0x84] sm:$0xf]
  %v121 = vld [vmem:[%s1 + $0x88] sm:$0xf]
  %v122 = vld [vmem:[%s1 + $0x8c] sm:$0xf]
  %v123 = vld [vmem:[%s1 + $0x90] sm:$0xf]
  %v124 = vld [vmem:[%s1 + $0x94] sm:$0xf]
  %v125 = vld [vmem:[%s1 + $0x98] sm:$0xf]
  %v126 = vld [vmem:[%s1 + $0x9c] sm:$0xf]
  %v127 = vld [vmem:[%s1 + $0xa0] sm:$0xf]
  %v128 = vld [vmem:[%s1 + $0xa4] sm:$0xf]
  %v129 = vld [vmem:[%s1 + $0xa8] sm:$0xf]
  %v130 = vld [vmem:[%s1 + $0xac] sm:$0xf]
  %v131 = vld [vmem:[%s1 + $0xb0] sm:$0xf]
  %v132 = vld [vmem:[%s1 + $0xb4] sm:$0xf]
  %v133 = vld [vmem:[%s1 + $0xb8] sm:$0xf]
  %v134 = vld [vmem:[%s1 + $0xbc] sm:$0xf]
  %v135 = vld [vmem:[%s1 + $0xc0] sm:$0xf]
  %v136 = vld [vmem:[%s1 + $0xc4] sm:$0xf]
  %v137 = vld [vmem:[%s1 + $0xc8] sm:$0xf]
  %v138 = vld [vmem:[%s1 + $0xcc] sm:$0xf]
  %v139 = vld [vmem:[%s1 + $0xd0] sm:$0xf]
  %v140 = vld [vmem:[%s1 + $0xd4] sm:$0xf]
  %v141 = vld [vmem:[%s1 + $0xd8] sm:$0xf]
  %v142 = vld [vmem:[%s1 + $0xdc] sm:$0xf]
  %v143 = vld [vmem:[%s1 + $0xe0] sm:$0xf]
  %v144 = vld [vmem:[%s1 + $0xe4] sm:$0xf]
  %v145 = vld [vmem:[%s1 + $0xe8] sm:$0xf]
  %v146 = vld [vmem:[%s1 + $0xec] sm:$0xf]
  %v147 = vld [vmem:[%s1 + $0xf0] sm:$0xf]
  %v148 = vld [vmem:[%s1 + $0xf4] sm:$0xf]
  %v149 = vld [vmem:[%s1 + $0xf8] sm:$0xf]
  %v150 = vld [vmem:[%s1 + $0xfc] sm:$0xf]
  %v151 = vld [vmem:[%s1 + $0x100] sm:$0xf]
  %v152 = vld [vmem:[%s1 + $0x104] sm:$0xf]
  %v153 = vld [vmem:[%s1 + $0x108] sm:$0xf]
  %v154 = vld [vmem:[%s1 + $0x10c] sm:$0xf]
  %v155 = vld [vmem:[%s1 + $0x110] sm:$0xf]
  %v156 = vld [vmem:[%s1 + $0x114] sm:$0xf]
  %v157 = vld [vmem:[%s1 + $0x118] sm:$0xf]
  %v158 = vld [vmem:[%s1 + $0x11c] sm:$0xf]
  %v159 = vld [vmem:[%s2] sm:$0x1]
  %v161 = vlaneseq
  %v162 = vshrl.u32 %v161, 7
  %v163 = vsub.s32 0, %v162
  %v164 = vrot.slane %v159, %v163
  %v229 = vunpack.c.l.b16 %v24
  %v230 = vunpack.c.h.b16 %v24
  %v231 = vunpack.c.l.b16 %v25
  %v232 = vunpack.c.h.b16 %v25
  %v233 = vunpack.c.l.b16 %v26
  %v234 = vunpack.c.l.b16 %v27
  %v235 = vunpack.c.h.b16 %v27
  %v236 = vunpack.c.l.b16 %v28
  %v237 = vunpack.c.h.b16 %v28
  %v238 = vunpack.c.l.b16 %v29
  %v239 = vunpack.c.l.b16 %v30
  %v240 = vunpack.c.h.b16 %v30
  %v241 = vunpack.c.l.b16 %v31
  %v242 = vunpack.c.h.b16 %v31
  %v243 = vunpack.c.l.b16 %v32
  %v244 = vunpack.c.l.b16 %v33
  %v245 = vunpack.c.h.b16 %v33
  %v246 = vunpack.c.l.b16 %v34
  %v247 = vunpack.c.h.b16 %v34
  %v248 = vunpack.c.l.b16 %v35
  %v249 = vunpack.c.l.b16 %v36
  %v250 = vunpack.c.h.b16 %v36
  %v251 = vunpack.c.l.b16 %v37
  %v252 = vunpack.c.h.b16 %v37
  %v253 = vunpack.c.l.b16 %v38
  %v254 = vunpack.c.l.b16 %v39
  %v255 = vunpack.c.h.b16 %v39
  %v256 = vunpack.c.l.b16 %v40
  %v257 = vunpack.c.h.b16 %v40
  %v258 = vunpack.c.l.b16 %v41
  %v259 = vunpack.c.l.b16 %v42
  %v260 = vunpack.c.h.b16 %v42
  %v261 = vunpack.c.l.b16 %v43
  %v262 = vunpack.c.h.b16 %v43
  %v263 = vunpack.c.l.b16 %v44
  %v264 = vunpack.c.l.b16 %v45
  %v265 = vunpack.c.h.b16 %v45
  %v266 = vunpack.c.l.b16 %v46
  %v267 = vunpack.c.h.b16 %v46
  %v268 = vunpack.c.l.b16 %v47
  %v269 = vunpack.c.l.b16 %v48
  %v270 = vunpack.c.h.b16 %v48
  %v271 = vunpack.c.l.b16 %v49
  %v272 = vunpack.c.h.b16 %v49
  %v273 = vunpack.c.l.b16 %v50
  %v274 = vunpack.c.l.b16 %v51
  %v275 = vunpack.c.h.b16 %v51
  %v276 = vunpack.c.l.b16 %v52
  %v277 = vunpack.c.h.b16 %v52
  %v278 = vunpack.c.l.b16 %v53
  %v279 = vunpack.c.l.b16 %v54
  %v280 = vunpack.c.h.b16 %v54
  %v281 = vunpack.c.l.b16 %v55
  %v282 = vunpack.c.h.b16 %v55
  %v283 = vunpack.c.l.b16 %v56
  %v284 = vunpack.c.l.b16 %v57
  %v285 = vunpack.c.h.b16 %v57
  %v286 = vunpack.c.l.b16 %v58
  %v287 = vunpack.c.h.b16 %v58
  %v288 = vunpack.c.l.b16 %v59
  %v289 = vunpack.c.l.b16 %v60
  %v290 = vunpack.c.h.b16 %v60
  %v291 = vunpack.c.l.b16 %v61
  %v292 = vunpack.c.h.b16 %v61
  %v293 = vunpack.c.l.b16 %v62
  %v294 = vunpack.c.l.b16 %v63
  %v295 = vunpack.c.h.b16 %v63
  %v296 = vunpack.c.l.b16 %v64
  %v297 = vunpack.c.h.b16 %v64
  %v298 = vunpack.c.l.b16 %v65
  %v299 = vunpack.c.l.b16 %v66
  %v300 = vunpack.c.h.b16 %v66
  %v301 = vunpack.c.l.b16 %v67
  %v302 = vunpack.c.h.b16 %v67
  %v303 = vunpack.c.l.b16 %v68
  %v304 = vunpack.c.l.b16 %v69
  %v305 = vunpack.c.h.b16 %v69
  %v306 = vunpack.c.l.b16 %v70
  %v307 = vunpack.c.h.b16 %v70
  %v308 = vunpack.c.l.b16 %v71
  %v309 = vunpack.c.l.b16 %v72
  %v310 = vunpack.c.h.b16 %v72
  %v311 = vunpack.c.l.b16 %v73
  %v312 = vunpack.c.h.b16 %v73
  %v313 = vunpack.c.l.b16 %v74
  %v314 = vunpack.c.l.b16 %v75
  %v315 = vunpack.c.h.b16 %v75
  %v316 = vunpack.c.l.b16 %v76
  %v317 = vunpack.c.h.b16 %v76
  %v318 = vunpack.c.l.b16 %v77
  %v319 = vunpack.c.l.b16 %v78
  %v320 = vunpack.c.h.b16 %v78
  %v321 = vunpack.c.l.b16 %v79
  %v322 = vunpack.c.h.b16 %v79
  %v323 = vunpack.c.l.b16 %v80
  %v324 = vunpack.c.l.b16 %v81
  %v325 = vunpack.c.h.b16 %v81
  %v326 = vunpack.c.l.b16 %v82
  %v327 = vunpack.c.h.b16 %v82
  %v328 = vunpack.c.l.b16 %v83
  %v329 = vunpack.c.l.b16 %v84
  %v330 = vunpack.c.h.b16 %v84
  %v331 = vunpack.c.l.b16 %v85
  %v332 = vunpack.c.h.b16 %v85
  %v333 = vunpack.c.l.b16 %v86
  %v334 = vpack.c.b16 %v234, %v229
  %v335 = vpack.c.b16 %v235, %v230
  %v336 = vpack.c.b16 %v236, %v231
  %v337 = vpack.c.b16 %v237, %v232
  %v338 = vpack.c.b16 %v238, %v233
  %v339 = vpack.c.b16 %v244, %v239
  %v340 = vpack.c.b16 %v245, %v240
  %v341 = vpack.c.b16 %v246, %v241
  %v342 = vpack.c.b16 %v247, %v242
  %v343 = vpack.c.b16 %v248, %v243
  %v344 = vpack.c.b16 %v254, %v249
  %v345 = vpack.c.b16 %v255, %v250
  %v346 = vpack.c.b16 %v256, %v251
  %v347 = vpack.c.b16 %v257, %v252
  %v348 = vpack.c.b16 %v258, %v253
  %v349 = vpack.c.b16 %v264, %v259
  %v350 = vpack.c.b16 %v265, %v260
  %v351 = vpack.c.b16 %v266, %v261
  %v352 = vpack.c.b16 %v267, %v262
  %v353 = vpack.c.b16 %v268, %v263
  %v354 = vpack.c.b16 %v274, %v269
  %v355 = vpack.c.b16 %v275, %v270
  %v356 = vpack.c.b16 %v276, %v271
  %v357 = vpack.c.b16 %v277, %v272
  %v358 = vpack.c.b16 %v278, %v273
  %v359 = vpack.c.b16 %v284, %v279
  %v360 = vpack.c.b16 %v285, %v280
  %v361 = vpack.c.b16 %v286, %v281
  %v362 = vpack.c.b16 %v287, %v282
  %v363 = vpack.c.b16 %v288, %v283
  %v364 = vpack.c.b16 %v294, %v289
  %v365 = vpack.c.b16 %v295, %v290
  %v366 = vpack.c.b16 %v296, %v291
  %v367 = vpack.c.b16 %v297, %v292
  %v368 = vpack.c.b16 %v298, %v293
  %v369 = vpack.c.b16 %v304, %v299
  %v370 = vpack.c.b16 %v305, %v300
  %v371 = vpack.c.b16 %v306, %v301
  %v372 = vpack.c.b16 %v307, %v302
  %v373 = vpack.c.b16 %v308, %v303
  %v374 = vpack.c.b16 %v314, %v309
  %v375 = vpack.c.b16 %v315, %v310
  %v376 = vpack.c.b16 %v316, %v311
  %v377 = vpack.c.b16 %v317, %v312
  %v378 = vpack.c.b16 %v318, %v313
  %v379 = vpack.c.b16 %v324, %v319
  %v380 = vpack.c.b16 %v325, %v320
  %v381 = vpack.c.b16 %v326, %v321
  %v382 = vpack.c.b16 %v327, %v322
  %v383 = vpack.c.b16 %v328, %v323
  %v384 = vpack.c.b16 %v329, %v329
  %v385 = vpack.c.b16 %v330, %v330
  %v386 = vpack.c.b16 %v331, %v331
  %v387 = vpack.c.b16 %v332, %v332
  %v388 = vpack.c.b16 %v333, %v333
  %v505 = vunpack.c.l.b16 %v87
  %v506 = vunpack.c.l.b16 %v88
  %v507 = vunpack.c.l.b16 %v89
  %v508 = vunpack.c.l.b16 %v90
  %v509 = vunpack.c.l.b16 %v91
  %v510 = vunpack.c.l.b16 %v92
  %v511 = vunpack.c.l.b16 %v93
  %v512 = vunpack.c.l.b16 %v94
  %v513 = vunpack.c.l.b16 %v95
  %v514 = vunpack.c.l.b16 %v96
  %v515 = vunpack.c.l.b16 %v97
  %v516 = vunpack.c.l.b16 %v98
  %v517 = vunpack.c.l.b16 %v99
  %v518 = vunpack.c.l.b16 %v100
  %v519 = vunpack.c.l.b16 %v101
  %v520 = vunpack.c.l.b16 %v102
  %v521 = vunpack.c.l.b16 %v103
  %v522 = vunpack.c.l.b16 %v104
  %v523 = vunpack.c.l.b16 %v105
  %v524 = vunpack.c.l.b16 %v106
  %v525 = vunpack.c.l.b16 %v107
  %v526 = vunpack.c.l.b16 %v108
  %v527 = vunpack.c.l.b16 %v109
  %v528 = vunpack.c.l.b16 %v110
  %v529 = vunpack.c.l.b16 %v111
  %v530 = vunpack.c.l.b16 %v112
  %v531 = vunpack.c.l.b16 %v113
  %v532 = vunpack.c.l.b16 %v114
  %v533 = vunpack.c.l.b16 %v115
  %v534 = vunpack.c.l.b16 %v116
  %v535 = vunpack.c.l.b16 %v117
  %v536 = vunpack.c.l.b16 %v118
  %v537 = vunpack.c.l.b16 %v119
  %v538 = vunpack.c.l.b16 %v120
  %v539 = vunpack.c.l.b16 %v121
  %v540 = vunpack.c.l.b16 %v122
  %v541 = vunpack.c.l.b16 %v123
  %v542 = vunpack.c.l.b16 %v124
  %v543 = vunpack.c.l.b16 %v125
  %v544 = vunpack.c.l.b16 %v126
  %v545 = vunpack.c.l.b16 %v127
  %v546 = vunpack.c.l.b16 %v128
  %v547 = vunpack.c.l.b16 %v129
  %v548 = vunpack.c.l.b16 %v130
  %v549 = vunpack.c.l.b16 %v131
  %v550 = vunpack.c.l.b16 %v132
  %v551 = vunpack.c.l.b16 %v133
  %v552 = vunpack.c.l.b16 %v134
  %v553 = vunpack.c.l.b16 %v135
  %v554 = vunpack.c.l.b16 %v136
  %v555 = vunpack.c.l.b16 %v137
  %v556 = vunpack.c.l.b16 %v138
  %v557 = vunpack.c.l.b16 %v139
  %v558 = vunpack.c.l.b16 %v140
  %v559 = vunpack.c.l.b16 %v141
  %v560 = vunpack.c.l.b16 %v142
  %v561 = vunpack.c.l.b16 %v143
  %v562 = vunpack.c.l.b16 %v144
  %v563 = vunpack.c.l.b16 %v145
  %v564 = vunpack.c.l.b16 %v146
  %v565 = vunpack.c.l.b16 %v147
  %v566 = vunpack.c.l.b16 %v148
  %v567 = vunpack.c.l.b16 %v149
  %v568 = vunpack.c.l.b16 %v150
  %v569 = vunpack.c.l.b16 %v151
  %v570 = vunpack.c.l.b16 %v152
  %v571 = vunpack.c.l.b16 %v153
  %v572 = vunpack.c.l.b16 %v154
  %v573 = vunpack.c.l.b16 %v155
  %v574 = vunpack.c.l.b16 %v156
  %v575 = vunpack.c.l.b16 %v157
  %v576 = vunpack.c.l.b16 %v158
  %v577 = vpack.c.b16 %v506, %v505
  %v578 = vpack.c.b16 %v508, %v507
  %v579 = vpack.c.b16 %v510, %v509
  %v580 = vpack.c.b16 %v512, %v511
  %v581 = vpack.c.b16 %v514, %v513
  %v582 = vpack.c.b16 %v516, %v515
  %v583 = vpack.c.b16 %v518, %v517
  %v584 = vpack.c.b16 %v520, %v519
  %v585 = vpack.c.b16 %v522, %v521
  %v586 = vpack.c.b16 %v524, %v523
  %v587 = vpack.c.b16 %v526, %v525
  %v588 = vpack.c.b16 %v528, %v527
  %v589 = vpack.c.b16 %v530, %v529
  %v590 = vpack.c.b16 %v532, %v531
  %v591 = vpack.c.b16 %v534, %v533
  %v592 = vpack.c.b16 %v536, %v535
  %v593 = vpack.c.b16 %v538, %v537
  %v594 = vpack.c.b16 %v540, %v539
  %v595 = vpack.c.b16 %v542, %v541
  %v596 = vpack.c.b16 %v544, %v543
  %v597 = vpack.c.b16 %v546, %v545
  %v598 = vpack.c.b16 %v548, %v547
  %v599 = vpack.c.b16 %v550, %v549
  %v600 = vpack.c.b16 %v552, %v551
  %v601 = vpack.c.b16 %v554, %v553
  %v602 = vpack.c.b16 %v556, %v555
  %v603 = vpack.c.b16 %v558, %v557
  %v604 = vpack.c.b16 %v560, %v559
  %v605 = vpack.c.b16 %v562, %v561
  %v606 = vpack.c.b16 %v564, %v563
  %v607 = vpack.c.b16 %v566, %v565
  %v608 = vpack.c.b16 %v568, %v567
  %v609 = vpack.c.b16 %v570, %v569
  %v610 = vpack.c.b16 %v572, %v571
  %v611 = vpack.c.b16 %v574, %v573
  %v612 = vpack.c.b16 %v576, %v575
  %vm649 = vcmask 523264
  %v651 = vsel %vm649, %v338, 0
  %v654 = vsel %vm649, %v343, 0
  %v657 = vsel %vm649, %v348, 0
  %v660 = vsel %vm649, %v353, 0
  %v663 = vsel %vm649, %v358, 0
  %v666 = vsel %vm649, %v363, 0
  %v669 = vsel %vm649, %v368, 0
  %v672 = vsel %vm649, %v373, 0
  %v675 = vsel %vm649, %v378, 0
  %v678 = vsel %vm649, %v383, 0
  %v681 = vsel %vm649, %v388, 0
  %683 = vmatprep.subr.bf16.mxu0 0
  %684 = vmatpush1.bf16.msra.mxu0 %v577
  %685 = vmatprep.subr.bf16.mxu0 0
  %686 = vmatpush1.bf16.msra.mxu0 %v578
  %687 = vmatprep.subr.bf16.mxu0 0
  %688 = vmatpush1.bf16.msra.mxu0 %v579
  %689 = vmatprep.subr.bf16.mxu0 0
  %690 = vmatpush1.bf16.msra.mxu0 %v580
  %691 = vmatprep.subr.bf16.mxu0 0
  %692 = vmatpush1.bf16.msra.mxu0 %v581
  %693 = vmatprep.subr.bf16.mxu0 0
  %694 = vmatpush1.bf16.msra.mxu0 %v582
  %695 = vmatprep.subr.bf16.mxu0 0
  %696 = vmatpush1.bf16.msra.mxu0 %v583
  %697 = vmatprep.subr.bf16.mxu0 0
  %698 = vmatpush1.bf16.msra.mxu0 %v584
  %699 = vmatprep.subr.bf16.mxu0 0
  %700 = vmatpush1.bf16.msra.mxu0 %v585
  %701 = vmatprep.subr.bf16.mxu0 0
  %702 = vmatpush1.bf16.msra.mxu0 %v586
  %703 = vmatprep.subr.bf16.mxu0 0
  %704 = vmatpush1.bf16.msra.mxu0 %v587
  %705 = vmatprep.subr.bf16.mxu0 0
  %706 = vmatpush1.bf16.msra.mxu0 %v588
  %707 = vmatprep.subr.bf16.mxu0 0
  %708 = vmatpush1.bf16.msra.mxu0 %v589
  %709 = vmatprep.subr.bf16.mxu0 0
  %710 = vmatpush1.bf16.msra.mxu0 %v590
  %711 = vmatprep.subr.bf16.mxu0 0
  %712 = vmatpush1.bf16.msra.mxu0 %v591
  %713 = vmatprep.subr.bf16.mxu0 0
  %714 = vmatpush1.bf16.msra.mxu0 %v592
  %715 = vmatprep.mubr.bf16.mxu0 %v335
  %716 = vmatmul.mubr.bf16.gmra.mrb[0].mxu0 %v334
  %v717 = vpop.f32.mrb[0].mxu0
  %v718 = vadd.f32 %v164, %v717
  %v719 = vpop.f32.mrb[0].mxu0
  %v720 = vpop.f32.mrb[0].mxu0
  %v721 = vadd.f32 %v164, %v720
  %v722 = vpop.f32.mrb[0].mxu0
  %723 = vmatprep.mubr.bf16.mxu0 %v340
  %724 = vmatmul.mubr.bf16.gmra.mrb[0].mxu0 %v339
  %v725 = vpop.f32.mrb[0].mxu0
  %v726 = vadd.f32 %v164, %v725
  %v727 = vpop.f32.mrb[0].mxu0
  %v728 = vpop.f32.mrb[0].mxu0
  %v729 = vadd.f32 %v164, %v728
  %v730 = vpop.f32.mrb[0].mxu0
  %731 = vmatprep.mubr.bf16.mxu0 %v345
  %732 = vmatmul.mubr.bf16.gmra.mrb[0].mxu0 %v344
  %v733 = vpop.f32.mrb[0].mxu0
  %v734 = vadd.f32 %v164, %v733
  %v735 = vpop.f32.mrb[0].mxu0
  %v736 = vpop.f32.mrb[0].mxu0
  %v737 = vadd.f32 %v164, %v736
  %v738 = vpop.f32.mrb[0].mxu0
  %739 = vmatprep.mubr.bf16.mxu0 %v350
  %740 = vmatmul.mubr.bf16.gmra.mrb[0].mxu0 %v349
  %v741 = vpop.f32.mrb[0].mxu0
  %v742 = vadd.f32 %v164, %v741
  %v743 = vpop.f32.mrb[0].mxu0
  %v744 = vpop.f32.mrb[0].mxu0
  %v745 = vadd.f32 %v164, %v744
  %v746 = vpop.f32.mrb[0].mxu0
  %747 = vmatprep.mubr.bf16.mxu0 %v355
  %748 = vmatmul.mubr.bf16.gmra.mrb[0].mxu0 %v354
  %v749 = vpop.f32.mrb[0].mxu0
  %v750 = vadd.f32 %v164, %v749
  %v751 = vpop.f32.mrb[0].mxu0
  %v752 = vpop.f32.mrb[0].mxu0
  %v753 = vadd.f32 %v164, %v752
  %v754 = vpop.f32.mrb[0].mxu0
  %755 = vmatprep.mubr.bf16.mxu0 %v360
  %756 = vmatmul.mubr.bf16.gmra.mrb[0].mxu0 %v359
  %v757 = vpop.f32.mrb[0].mxu0
  %v758 = vadd.f32 %v164, %v757
  %v759 = vpop.f32.mrb[0].mxu0
  %v760 = vpop.f32.mrb[0].mxu0
  %v761 = vadd.f32 %v164, %v760
  %v762 = vpop.f32.mrb[0].mxu0
  %763 = vmatprep.mubr.bf16.mxu0 %v365
  %764 = vmatmul.mubr.bf16.gmra.mrb[0].mxu0 %v364
  %v765 = vpop.f32.mrb[0].mxu0
  %v766 = vadd.f32 %v164, %v765
  %v767 = vpop.f32.mrb[0].mxu0
  %v768 = vpop.f32.mrb[0].mxu0
  %v769 = vadd.f32 %v164, %v768
  %v770 = vpop.f32.mrb[0].mxu0
  %771 = vmatprep.mubr.bf16.mxu0 %v370
  %772 = vmatmul.mubr.bf16.gmra.mrb[0].mxu0 %v369
  %v773 = vpop.f32.mrb[0].mxu0
  %v774 = vadd.f32 %v164, %v773
  %v775 = vpop.f32.mrb[0].mxu0
  %v776 = vpop.f32.mrb[0].mxu0
  %v777 = vadd.f32 %v164, %v776
  %v778 = vpop.f32.mrb[0].mxu0
  %779 = vmatprep.mubr.bf16.mxu0 %v375
  %780 = vmatmul.mubr.bf16.gmra.mrb[0].mxu0 %v374
  %v781 = vpop.f32.mrb[0].mxu0
  %v782 = vadd.f32 %v164, %v781
  %v783 = vpop.f32.mrb[0].mxu0
  %v784 = vpop.f32.mrb[0].mxu0
  %v785 = vadd.f32 %v164, %v784
  %v786 = vpop.f32.mrb[0].mxu0
  %787 = vmatprep.mubr.bf16.mxu0 %v380
  %788 = vmatmul.mubr.bf16.gmra.mrb[0].mxu0 %v379
  %v789 = vpop.f32.mrb[0].mxu0
  %v790 = vadd.f32 %v164, %v789
  %v791 = vpop.f32.mrb[0].mxu0
  %v792 = vpop.f32.mrb[0].mxu0
  %v793 = vadd.f32 %v164, %v792
  %v794 = vpop.f32.mrb[0].mxu0
  %795 = vmatprep.mubr.bf16.mxu0 %v385
  %796 = vmatmul.mubr.bf16.gmra.mrb[0].mxu0 %v384
  %v797 = vpop.f32.mrb[0].mxu0
  %v798 = vadd.f32 %v164, %v797
  %v799 = vpop.f32.mrb[0].mxu0
  %v800 = vpop.f32.mrb[0].mxu0
  %v801 = vpop.f32.mrb[0].mxu0
  %802 = vdwg.mxu0
  %803 = vmatprep.subr.bf16.mxu0 0
  %804 = vmatpush1.bf16.msra.mxu0 %v593
  %805 = vmatprep.subr.bf16.mxu0 0
  %806 = vmatpush1.bf16.msra.mxu0 %v594
  %807 = vmatprep.subr.bf16.mxu0 0
  %808 = vmatpush1.bf16.msra.mxu0 %v595
  %809 = vmatprep.subr.bf16.mxu0 0
  %810 = vmatpush1.bf16.msra.mxu0 %v596
  %811 = vmatprep.subr.bf16.mxu0 0
  %812 = vmatpush1.bf16.msra.mxu0 %v597
  %813 = vmatprep.subr.bf16.mxu0 0
  %814 = vmatpush1.bf16.msra.mxu0 %v598
  %815 = vmatprep.subr.bf16.mxu0 0
  %816 = vmatpush1.bf16.msra.mxu0 %v599
  %817 = vmatprep.subr.bf16.mxu0 0
  %818 = vmatpush1.bf16.msra.mxu0 %v600
  %819 = vmatprep.subr.bf16.mxu0 0
  %820 = vmatpush1.bf16.msra.mxu0 %v601
  %821 = vmatprep.subr.bf16.mxu0 0
  %822 = vmatpush1.bf16.msra.mxu0 %v602
  %823 = vmatprep.subr.bf16.mxu0 0
  %824 = vmatpush1.bf16.msra.mxu0 %v603
  %825 = vmatprep.subr.bf16.mxu0 0
  %826 = vmatpush1.bf16.msra.mxu0 %v604
  %827 = vmatprep.subr.bf16.mxu0 0
  %828 = vmatpush1.bf16.msra.mxu0 %v605
  %829 = vmatprep.subr.bf16.mxu0 0
  %830 = vmatpush1.bf16.msra.mxu0 %v606
  %831 = vmatprep.subr.bf16.mxu0 0
  %832 = vmatpush1.bf16.msra.mxu0 %v607
  %833 = vmatprep.subr.bf16.mxu0 0
  %834 = vmatpush1.bf16.msra.mxu0 %v608
  %835 = vmatprep.mubr.bf16.mxu0 %v337
  %836 = vmatmul.mubr.bf16.gmra.mrb[0].mxu0 %v336
  %v837 = vpop.f32.mrb[0].mxu0
  %v838 = vadd.f32 %v718, %v837
  %v839 = vpop.f32.mrb[0].mxu0
  %v840 = vpop.f32.mrb[0].mxu0
  %v841 = vadd.f32 %v721, %v840
  %v842 = vpop.f32.mrb[0].mxu0
  %843 = vmatprep.mubr.bf16.mxu0 %v342
  %844 = vmatmul.mubr.bf16.gmra.mrb[0].mxu0 %v341
  %v845 = vpop.f32.mrb[0].mxu0
  %v846 = vadd.f32 %v726, %v845
  %v847 = vpop.f32.mrb[0].mxu0
  %v848 = vpop.f32.mrb[0].mxu0
  %v849 = vadd.f32 %v729, %v848
  %v850 = vpop.f32.mrb[0].mxu0
  %851 = vmatprep.mubr.bf16.mxu0 %v347
  %852 = vmatmul.mubr.bf16.gmra.mrb[0].mxu0 %v346
  %v853 = vpop.f32.mrb[0].mxu0
  %v854 = vadd.f32 %v734, %v853
  %v855 = vpop.f32.mrb[0].mxu0
  %v856 = vpop.f32.mrb[0].mxu0
  %v857 = vadd.f32 %v737, %v856
  %v858 = vpop.f32.mrb[0].mxu0
  %859 = vmatprep.mubr.bf16.mxu0 %v352
  %860 = vmatmul.mubr.bf16.gmra.mrb[0].mxu0 %v351
  %v861 = vpop.f32.mrb[0].mxu0
  %v862 = vadd.f32 %v742, %v861
  %v863 = vpop.f32.mrb[0].mxu0
  %v864 = vpop.f32.mrb[0].mxu0
  %v865 = vadd.f32 %v745, %v864
  %v866 = vpop.f32.mrb[0].mxu0
  %867 = vmatprep.mubr.bf16.mxu0 %v357
  %868 = vmatmul.mubr.bf16.gmra.mrb[0].mxu0 %v356
  %v869 = vpop.f32.mrb[0].mxu0
  %v870 = vadd.f32 %v750, %v869
  %v871 = vpop.f32.mrb[0].mxu0
  %v872 = vpop.f32.mrb[0].mxu0
  %v873 = vadd.f32 %v753, %v872
  %v874 = vpop.f32.mrb[0].mxu0
  %875 = vmatprep.mubr.bf16.mxu0 %v362
  %876 = vmatmul.mubr.bf16.gmra.mrb[0].mxu0 %v361
  %v877 = vpop.f32.mrb[0].mxu0
  %v878 = vadd.f32 %v758, %v877
  %v879 = vpop.f32.mrb[0].mxu0
  %v880 = vpop.f32.mrb[0].mxu0
  %v881 = vadd.f32 %v761, %v880
  %v882 = vpop.f32.mrb[0].mxu0
  %883 = vmatprep.mubr.bf16.mxu0 %v367
  %884 = vmatmul.mubr.bf16.gmra.mrb[0].mxu0 %v366
  %v885 = vpop.f32.mrb[0].mxu0
  %v886 = vadd.f32 %v766, %v885
  %v887 = vpop.f32.mrb[0].mxu0
  %v888 = vpop.f32.mrb[0].mxu0
  %v889 = vadd.f32 %v769, %v888
  %v890 = vpop.f32.mrb[0].mxu0
  %891 = vmatprep.mubr.bf16.mxu0 %v372
  %892 = vmatmul.mubr.bf16.gmra.mrb[0].mxu0 %v371
  %v893 = vpop.f32.mrb[0].mxu0
  %v894 = vadd.f32 %v774, %v893
  %v895 = vpop.f32.mrb[0].mxu0
  %v896 = vpop.f32.mrb[0].mxu0
  %v897 = vadd.f32 %v777, %v896
  %v898 = vpop.f32.mrb[0].mxu0
  %899 = vmatprep.mubr.bf16.mxu0 %v377
  %900 = vmatmul.mubr.bf16.gmra.mrb[0].mxu0 %v376
  %v901 = vpop.f32.mrb[0].mxu0
  %v902 = vadd.f32 %v782, %v901
  %v903 = vpop.f32.mrb[0].mxu0
  %v904 = vpop.f32.mrb[0].mxu0
  %v905 = vadd.f32 %v785, %v904
  %v906 = vpop.f32.mrb[0].mxu0
  %907 = vmatprep.mubr.bf16.mxu0 %v382
  %908 = vmatmul.mubr.bf16.gmra.mrb[0].mxu0 %v381
  %v909 = vpop.f32.mrb[0].mxu0
  %v910 = vadd.f32 %v790, %v909
  %v911 = vpop.f32.mrb[0].mxu0
  %v912 = vpop.f32.mrb[0].mxu0
  %v913 = vadd.f32 %v793, %v912
  %v914 = vpop.f32.mrb[0].mxu0
  %915 = vmatprep.mubr.bf16.mxu0 %v387
  %916 = vmatmul.mubr.bf16.gmra.mrb[0].mxu0 %v386
  %v917 = vpop.f32.mrb[0].mxu0
  %v918 = vadd.f32 %v798, %v917
  %v919 = vpop.f32.mrb[0].mxu0
  %v920 = vpop.f32.mrb[0].mxu0
  %v921 = vpop.f32.mrb[0].mxu0
  %922 = vdwg.mxu0
  %923 = vmatprep.subr.bf16.mxu0 0
  %924 = vmatpush1.bf16.msra.mxu0 %v609
  %925 = vmatprep.subr.bf16.mxu0 0
  %926 = vmatpush1.bf16.msra.mxu0 %v610
  %927 = vmatprep.subr.bf16.mxu0 0
  %928 = vmatpush1.bf16.msra.mxu0 %v611
  %929 = vmatprep.subr.bf16.mxu0 0
  %930 = vmatpush1.bf16.msra.mxu0 %v612
  %931 = vmatprep.subr.bf16.mxu0 0
  %932 = vmatpush1.bf16.msra.mxu0 0
  %933 = vmatprep.subr.bf16.mxu0 0
  %934 = vmatpush1.bf16.msra.mxu0 0
  %935 = vmatprep.subr.bf16.mxu0 0
  %936 = vmatpush1.bf16.msra.mxu0 0
  %937 = vmatprep.subr.bf16.mxu0 0
  %938 = vmatpush1.bf16.msra.mxu0 0
  %939 = vmatprep.subr.bf16.mxu0 0
  %940 = vmatpush1.bf16.msra.mxu0 0
  %941 = vmatprep.subr.bf16.mxu0 0
  %942 = vmatpush1.bf16.msra.mxu0 0
  %943 = vmatprep.subr.bf16.mxu0 0
  %944 = vmatpush1.bf16.msra.mxu0 0
  %945 = vmatprep.subr.bf16.mxu0 0
  %946 = vmatpush1.bf16.msra.mxu0 0
  %947 = vmatprep.subr.bf16.mxu0 0
  %948 = vmatpush1.bf16.msra.mxu0 0
  %949 = vmatprep.subr.bf16.mxu0 0
  %950 = vmatpush1.bf16.msra.mxu0 0
  %951 = vmatprep.subr.bf16.mxu0 0
  %952 = vmatpush1.bf16.msra.mxu0 0
  %953 = vmatprep.subr.bf16.mxu0 0
  %954 = vmatpush1.bf16.msra.mxu0 0
  %955 = vmatprep.mubr.bf16.mxu0 0
  %956 = vmatmul.mubr.bf16.gmra.mrb[0].mxu0 %v651
  %v957 = vpop.f32.mrb[0].mxu0
  %v958 = vadd.f32 %v838, %v957
  %v959 = vpop.f32.mrb[0].mxu0
  %v960 = vpop.f32.mrb[0].mxu0
  %v961 = vadd.f32 %v841, %v960
  %v962 = vpop.f32.mrb[0].mxu0
  %963 = vmatprep.mubr.bf16.mxu0 0
  %964 = vmatmul.mubr.bf16.gmra.mrb[0].mxu0 %v654
  %v965 = vpop.f32.mrb[0].mxu0
  %v966 = vadd.f32 %v846, %v965
  %v967 = vpop.f32.mrb[0].mxu0
  %v968 = vpop.f32.mrb[0].mxu0
  %v969 = vadd.f32 %v849, %v968
  %v970 = vpop.f32.mrb[0].mxu0
  %971 = vmatprep.mubr.bf16.mxu0 0
  %972 = vmatmul.mubr.bf16.gmra.mrb[0].mxu0 %v657
  %v973 = vpop.f32.mrb[0].mxu0
  %v974 = vadd.f32 %v854, %v973
  %v975 = vpop.f32.mrb[0].mxu0
  %v976 = vpop.f32.mrb[0].mxu0
  %v977 = vadd.f32 %v857, %v976
  %v978 = vpop.f32.mrb[0].mxu0
  %979 = vmatprep.mubr.bf16.mxu0 0
  %980 = vmatmul.mubr.bf16.gmra.mrb[0].mxu0 %v660
  %v981 = vpop.f32.mrb[0].mxu0
  %v982 = vadd.f32 %v862, %v981
  %v983 = vpop.f32.mrb[0].mxu0
  %v984 = vpop.f32.mrb[0].mxu0
  %v985 = vadd.f32 %v865, %v984
  %v986 = vpop.f32.mrb[0].mxu0
  %987 = vmatprep.mubr.bf16.mxu0 0
  %988 = vmatmul.mubr.bf16.gmra.mrb[0].mxu0 %v663
  %v989 = vpop.f32.mrb[0].mxu0
  %v990 = vadd.f32 %v870, %v989
  %v991 = vpop.f32.mrb[0].mxu0
  %v992 = vpop.f32.mrb[0].mxu0
  %v993 = vadd.f32 %v873, %v992
  %v994 = vpop.f32.mrb[0].mxu0
  %995 = vmatprep.mubr.bf16.mxu0 0
  %996 = vmatmul.mubr.bf16.gmra.mrb[0].mxu0 %v666
  %v997 = vpop.f32.mrb[0].mxu0
  %v998 = vadd.f32 %v878, %v997
  %v999 = vpop.f32.mrb[0].mxu0
  %v1000 = vpop.f32.mrb[0].mxu0
  %v1001 = vadd.f32 %v881, %v1000
  %v1002 = vpop.f32.mrb[0].mxu0
  %1003 = vmatprep.mubr.bf16.mxu0 0
  %1004 = vmatmul.mubr.bf16.gmra.mrb[0].mxu0 %v669
  %v1005 = vpop.f32.mrb[0].mxu0
  %v1006 = vadd.f32 %v886, %v1005
  %v1007 = vpop.f32.mrb[0].mxu0
  %v1008 = vpop.f32.mrb[0].mxu0
  %v1009 = vadd.f32 %v889, %v1008
  %v1010 = vpop.f32.mrb[0].mxu0
  %1011 = vmatprep.mubr.bf16.mxu0 0
  %1012 = vmatmul.mubr.bf16.gmra.mrb[0].mxu0 %v672
  %v1013 = vpop.f32.mrb[0].mxu0
  %v1014 = vadd.f32 %v894, %v1013
  %v1015 = vpop.f32.mrb[0].mxu0
  %v1016 = vpop.f32.mrb[0].mxu0
  %v1017 = vadd.f32 %v897, %v1016
  %v1018 = vpop.f32.mrb[0].mxu0
  %1019 = vmatprep.mubr.bf16.mxu0 0
  %1020 = vmatmul.mubr.bf16.gmra.mrb[0].mxu0 %v675
  %v1021 = vpop.f32.mrb[0].mxu0
  %v1022 = vadd.f32 %v902, %v1021
  %v1023 = vpop.f32.mrb[0].mxu0
  %v1024 = vpop.f32.mrb[0].mxu0
  %v1025 = vadd.f32 %v905, %v1024
  %v1026 = vpop.f32.mrb[0].mxu0
  %1027 = vmatprep.mubr.bf16.mxu0 0
  %1028 = vmatmul.mubr.bf16.gmra.mrb[0].mxu0 %v678
  %v1029 = vpop.f32.mrb[0].mxu0
  %v1030 = vadd.f32 %v910, %v1029
  %v1031 = vpop.f32.mrb[0].mxu0
  %v1032 = vpop.f32.mrb[0].mxu0
  %v1033 = vadd.f32 %v913, %v1032
  %v1034 = vpop.f32.mrb[0].mxu0
  %1035 = vmatprep.mubr.bf16.mxu0 0
  %1036 = vmatmul.mubr.bf16.gmra.mrb[0].mxu0 %v681
  %v1037 = vpop.f32.mrb[0].mxu0
  %v1038 = vadd.f32 %v918, %v1037
  %v1039 = vpop.f32.mrb[0].mxu0
  %v1040 = vpop.f32.mrb[0].mxu0
  %v1041 = vpop.f32.mrb[0].mxu0
  %1042 = vdwg.mxu0
  %v1043 = vld [vmem:[%s3] sm:$0x1]
  %v1044 = vld [vmem:[%s4] sm:$0x1]
  %vm1045 = vcmask 261120
  %v1046 = vsel %vm1045, %v958, 0.0
  %v1047 = vsel %vm1045, %v961, 0.0
  %v1048 = vadd.f32 %v1046, %v1047
  %v1049 = vsel %vm1045, %v966, 0.0
  %v1050 = vadd.f32 %v1048, %v1049
  %v1051 = vsel %vm1045, %v969, 0.0
  %v1052 = vadd.f32 %v1050, %v1051
  %v1053 = vsel %vm1045, %v974, 0.0
  %v1054 = vadd.f32 %v1052, %v1053
  %v1055 = vsel %vm1045, %v977, 0.0
  %v1056 = vadd.f32 %v1054, %v1055
  %v1057 = vsel %vm1045, %v982, 0.0
  %v1058 = vadd.f32 %v1056, %v1057
  %v1059 = vsel %vm1045, %v985, 0.0
  %v1060 = vadd.f32 %v1058, %v1059
  %v1061 = vsel %vm1045, %v990, 0.0
  %v1062 = vadd.f32 %v1060, %v1061
  %v1063 = vsel %vm1045, %v993, 0.0
  %v1064 = vadd.f32 %v1062, %v1063
  %v1065 = vsel %vm1045, %v998, 0.0
  %v1066 = vadd.f32 %v1064, %v1065
  %v1067 = vsel %vm1045, %v1001, 0.0
  %v1068 = vadd.f32 %v1066, %v1067
  %v1069 = vsel %vm1045, %v1006, 0.0
  %v1070 = vadd.f32 %v1068, %v1069
  %v1071 = vsel %vm1045, %v1009, 0.0
  %v1072 = vadd.f32 %v1070, %v1071
  %v1073 = vsel %vm1045, %v1014, 0.0
  %v1074 = vadd.f32 %v1072, %v1073
  %v1075 = vsel %vm1045, %v1017, 0.0
  %v1076 = vadd.f32 %v1074, %v1075
  %v1077 = vsel %vm1045, %v1022, 0.0
  %v1078 = vadd.f32 %v1076, %v1077
  %v1079 = vsel %vm1045, %v1025, 0.0
  %v1080 = vadd.f32 %v1078, %v1079
  %v1081 = vsel %vm1045, %v1030, 0.0
  %v1082 = vadd.f32 %v1080, %v1081
  %v1083 = vsel %vm1045, %v1033, 0.0
  %v1084 = vadd.f32 %v1082, %v1083
  %vm1085 = vcmask 254976
  %v1086 = vsel %vm1085, %v1038, 0.0
  %v1087 = vadd.f32 %v1084, %v1086
  %v1088 = vrot.slane %v1087, 4
  %v1089 = vadd.f32 %v1087, %v1088
  %v1090 = vrot.slane %v1089, 2
  %v1091 = vadd.f32 %v1089, %v1090
  %v1092 = vrot.slane %v1091, 1
  %v1093 = vadd.f32 %v1091, %v1092
  %v1094 = vmul.f32 %v1093, 0.0061728396
  %v1095 = vsub.f32 %v958, %v1094
  %v1096 = vsub.f32 %v961, %v1094
  %v1097 = vsub.f32 %v966, %v1094
  %v1098 = vsub.f32 %v969, %v1094
  %v1099 = vsub.f32 %v974, %v1094
  %v1100 = vsub.f32 %v977, %v1094
  %v1101 = vsub.f32 %v982, %v1094
  %v1102 = vsub.f32 %v985, %v1094
  %v1103 = vsub.f32 %v990, %v1094
  %v1104 = vsub.f32 %v993, %v1094
  %v1105 = vsub.f32 %v998, %v1094
  %v1106 = vsub.f32 %v1001, %v1094
  %v1107 = vsub.f32 %v1006, %v1094
  %v1108 = vsub.f32 %v1009, %v1094
  %v1109 = vsub.f32 %v1014, %v1094
  %v1110 = vsub.f32 %v1017, %v1094
  %v1111 = vsub.f32 %v1022, %v1094
  %v1112 = vsub.f32 %v1025, %v1094
  %v1113 = vsub.f32 %v1030, %v1094
  %v1114 = vsub.f32 %v1033, %v1094
  %v1115 = vsub.f32 %v1038, %v1094
  %v1116 = vmul.f32 %v1095, %v1095
  %v1117 = vmul.f32 %v1096, %v1096
  %v1118 = vmul.f32 %v1097, %v1097
  %v1119 = vmul.f32 %v1098, %v1098
  %v1120 = vmul.f32 %v1099, %v1099
  %v1121 = vmul.f32 %v1100, %v1100
  %v1122 = vmul.f32 %v1101, %v1101
  %v1123 = vmul.f32 %v1102, %v1102
  %v1124 = vmul.f32 %v1103, %v1103
  %v1125 = vmul.f32 %v1104, %v1104
  %v1126 = vmul.f32 %v1105, %v1105
  %v1127 = vmul.f32 %v1106, %v1106
  %v1128 = vmul.f32 %v1107, %v1107
  %v1129 = vmul.f32 %v1108, %v1108
  %v1130 = vmul.f32 %v1109, %v1109
  %v1131 = vmul.f32 %v1110, %v1110
  %v1132 = vmul.f32 %v1111, %v1111
  %v1133 = vmul.f32 %v1112, %v1112
  %v1134 = vmul.f32 %v1113, %v1113
  %v1135 = vmul.f32 %v1114, %v1114
  %v1136 = vmul.f32 %v1115, %v1115
  %v1137 = vsel %vm1045, %v1116, 0.0
  %v1138 = vsel %vm1045, %v1117, 0.0
  %v1139 = vadd.f32 %v1137, %v1138
  %v1140 = vsel %vm1045, %v1118, 0.0
  %v1141 = vadd.f32 %v1139, %v1140
  %v1142 = vsel %vm1045, %v1119, 0.0
  %v1143 = vadd.f32 %v1141, %v1142
  %v1144 = vsel %vm1045, %v1120, 0.0
  %v1145 = vadd.f32 %v1143, %v1144
  %v1146 = vsel %vm1045, %v1121, 0.0
  %v1147 = vadd.f32 %v1145, %v1146
  %v1148 = vsel %vm1045, %v1122, 0.0
  %v1149 = vadd.f32 %v1147, %v1148
  %v1150 = vsel %vm1045, %v1123, 0.0
  %v1151 = vadd.f32 %v1149, %v1150
  %v1152 = vsel %vm1045, %v1124, 0.0
  %v1153 = vadd.f32 %v1151, %v1152
  %v1154 = vsel %vm1045, %v1125, 0.0
  %v1155 = vadd.f32 %v1153, %v1154
  %v1156 = vsel %vm1045, %v1126, 0.0
  %v1157 = vadd.f32 %v1155, %v1156
  %v1158 = vsel %vm1045, %v1127, 0.0
  %v1159 = vadd.f32 %v1157, %v1158
  %v1160 = vsel %vm1045, %v1128, 0.0
  %v1161 = vadd.f32 %v1159, %v1160
  %v1162 = vsel %vm1045, %v1129, 0.0
  %v1163 = vadd.f32 %v1161, %v1162
  %v1164 = vsel %vm1045, %v1130, 0.0
  %v1165 = vadd.f32 %v1163, %v1164
  %v1166 = vsel %vm1045, %v1131, 0.0
  %v1167 = vadd.f32 %v1165, %v1166
  %v1168 = vsel %vm1045, %v1132, 0.0
  %v1169 = vadd.f32 %v1167, %v1168
  %v1170 = vsel %vm1045, %v1133, 0.0
  %v1171 = vadd.f32 %v1169, %v1170
  %v1172 = vsel %vm1045, %v1134, 0.0
  %v1173 = vadd.f32 %v1171, %v1172
  %v1174 = vsel %vm1045, %v1135, 0.0
  %v1175 = vadd.f32 %v1173, %v1174
  %v1176 = vsel %vm1085, %v1136, 0.0
  %v1177 = vadd.f32 %v1175, %v1176
  %v1178 = vrot.slane %v1177, 4
  %v1179 = vadd.f32 %v1177, %v1178
  %v1180 = vrot.slane %v1179, 2
  %v1181 = vadd.f32 %v1179, %v1180
  %v1182 = vrot.slane %v1181, 1
  %v1183 = vadd.f32 %v1181, %v1182
  %v1184 = vmul.f32 %v1183, 0.0061728396
  %v1185 = vadd.f32 %v1184, 1e-05
  %v1186 = vrsqrt.pop %v1185
  %v1187 = vmul.f32 %v1095, %v1186
  %v1188 = vmul.f32 %v1096, %v1186
  %v1189 = vmul.f32 %v1097, %v1186
  %v1190 = vmul.f32 %v1098, %v1186
  %v1191 = vmul.f32 %v1099, %v1186
  %v1192 = vmul.f32 %v1100, %v1186
  %v1193 = vmul.f32 %v1101, %v1186
  %v1194 = vmul.f32 %v1102, %v1186
  %v1195 = vmul.f32 %v1103, %v1186
  %v1196 = vmul.f32 %v1104, %v1186
  %v1197 = vmul.f32 %v1105, %v1186
  %v1198 = vmul.f32 %v1106, %v1186
  %v1199 = vmul.f32 %v1107, %v1186
  %v1200 = vmul.f32 %v1108, %v1186
  %v1201 = vmul.f32 %v1109, %v1186
  %v1202 = vmul.f32 %v1110, %v1186
  %v1203 = vmul.f32 %v1111, %v1186
  %v1204 = vmul.f32 %v1112, %v1186
  %v1205 = vmul.f32 %v1113, %v1186
  %v1206 = vmul.f32 %v1114, %v1186
  %v1207 = vmul.f32 %v1115, %v1186
  %v1209 = vlaneseq
  %v1210 = vshrl.u32 %v1209, 7
  %v1211 = vsub.s32 0, %v1210
  %v1212 = vrot.slane %v1043, %v1211
  %v1214 = vmul.f32 %v1187, %v1212
  %v1215 = vmul.f32 %v1188, %v1212
  %v1216 = vmul.f32 %v1189, %v1212
  %v1217 = vmul.f32 %v1190, %v1212
  %v1218 = vmul.f32 %v1191, %v1212
  %v1219 = vmul.f32 %v1192, %v1212
  %v1220 = vmul.f32 %v1193, %v1212
  %v1221 = vmul.f32 %v1194, %v1212
  %v1222 = vmul.f32 %v1195, %v1212
  %v1223 = vmul.f32 %v1196, %v1212
  %v1224 = vmul.f32 %v1197, %v1212
  %v1225 = vmul.f32 %v1198, %v1212
  %v1226 = vmul.f32 %v1199, %v1212
  %v1227 = vmul.f32 %v1200, %v1212
  %v1228 = vmul.f32 %v1201, %v1212
  %v1229 = vmul.f32 %v1202, %v1212
  %v1230 = vmul.f32 %v1203, %v1212
  %v1231 = vmul.f32 %v1204, %v1212
  %v1232 = vmul.f32 %v1205, %v1212
  %v1233 = vmul.f32 %v1206, %v1212
  %v1234 = vmul.f32 %v1207, %v1212
  %v1236 = vlaneseq
  %v1237 = vshrl.u32 %v1236, 7
  %v1238 = vsub.s32 0, %v1237
  %v1239 = vrot.slane %v1044, %v1238
  %v1241 = vadd.f32 %v1214, %v1239
  %v1242 = vadd.f32 %v1215, %v1239
  %v1243 = vadd.f32 %v1216, %v1239
  %v1244 = vadd.f32 %v1217, %v1239
  %v1245 = vadd.f32 %v1218, %v1239
  %v1246 = vadd.f32 %v1219, %v1239
  %v1247 = vadd.f32 %v1220, %v1239
  %v1248 = vadd.f32 %v1221, %v1239
  %v1249 = vadd.f32 %v1222, %v1239
  %v1250 = vadd.f32 %v1223, %v1239
  %v1251 = vadd.f32 %v1224, %v1239
  %v1252 = vadd.f32 %v1225, %v1239
  %v1253 = vadd.f32 %v1226, %v1239
  %v1254 = vadd.f32 %v1227, %v1239
  %v1255 = vadd.f32 %v1228, %v1239
  %v1256 = vadd.f32 %v1229, %v1239
  %v1257 = vadd.f32 %v1230, %v1239
  %v1258 = vadd.f32 %v1231, %v1239
  %v1259 = vadd.f32 %v1232, %v1239
  %v1260 = vadd.f32 %v1233, %v1239
  %v1261 = vadd.f32 %v1234, %v1239
  %v1262 = vmax.f32 %v1241, 0.0
  %v1263 = vmax.f32 %v1242, 0.0
  %v1264 = vmax.f32 %v1243, 0.0
  %v1265 = vmax.f32 %v1244, 0.0
  %v1266 = vmax.f32 %v1245, 0.0
  %v1267 = vmax.f32 %v1246, 0.0
  %v1268 = vmax.f32 %v1247, 0.0
  %v1269 = vmax.f32 %v1248, 0.0
  %v1270 = vmax.f32 %v1249, 0.0
  %v1271 = vmax.f32 %v1250, 0.0
  %v1272 = vmax.f32 %v1251, 0.0
  %v1273 = vmax.f32 %v1252, 0.0
  %v1274 = vmax.f32 %v1253, 0.0
  %v1275 = vmax.f32 %v1254, 0.0
  %v1276 = vmax.f32 %v1255, 0.0
  %v1277 = vmax.f32 %v1256, 0.0
  %v1278 = vmax.f32 %v1257, 0.0
  %v1279 = vmax.f32 %v1258, 0.0
  %v1280 = vmax.f32 %v1259, 0.0
  %v1281 = vmax.f32 %v1260, 0.0
  %v1282 = vmax.f32 %v1261, 0.0
  %v1283 = vpack.c.bf16 %v1263, %v1262
  %v1284 = vpack.c.bf16 %v1265, %v1264
  %v1285 = vpack.c.bf16 %v1267, %v1266
  %v1286 = vpack.c.bf16 %v1269, %v1268
  %v1287 = vpack.c.bf16 %v1271, %v1270
  %v1288 = vpack.c.bf16 %v1273, %v1272
  %v1289 = vpack.c.bf16 %v1275, %v1274
  %v1290 = vpack.c.bf16 %v1277, %v1276
  %v1291 = vpack.c.bf16 %v1279, %v1278
  %v1292 = vpack.c.bf16 %v1281, %v1280
  %v1293 = vpack.c.bf16 %v1282, %v1282
  %v1294 = vld [vmem:[%s5] sm:$0xf]
  %v1295 = vld [vmem:[%s5 + $0x4] sm:$0xf]
  %v1296 = vld [vmem:[%s5 + $0x8] sm:$0xf]
  %v1297 = vld [vmem:[%s5 + $0xc] sm:$0xf]
  %v1302 = vunpack.c.l.b16 %v1294
  %v1303 = vunpack.c.l.b16 %v1295
  %v1304 = vunpack.c.l.b16 %v1296
  %v1305 = vunpack.c.l.b16 %v1297
  %v1306 = vpack.c.b16 %v1303, %v1302
  %v1307 = vpack.c.b16 %v1305, %v1304
  %v1311 = vsel %vm1045, %v1283, 0
  %v1314 = vsel %vm1045, %v1284, 0
  %v1317 = vsel %vm1045, %v1285, 0
  %v1320 = vsel %vm1045, %v1286, 0
  %v1323 = vsel %vm1045, %v1287, 0
  %v1326 = vsel %vm1045, %v1288, 0
  %v1329 = vsel %vm1045, %v1289, 0
  %v1332 = vsel %vm1045, %v1290, 0
  %v1335 = vsel %vm1045, %v1291, 0
  %v1338 = vsel %vm1045, %v1292, 0
  %v1341 = vsel %vm1045, %v1293, 0
  %1343 = vmatprep.subr.bf16.mxu0 0
  %1344 = vmatpush1.bf16.msra.mxu0 %v1306
  %1345 = vmatprep.subr.bf16.mxu0 0
  %1346 = vmatpush1.bf16.msra.mxu0 %v1307
  %1347 = vmatprep.subr.bf16.mxu0 0
  %1348 = vmatpush1.bf16.msra.mxu0 0
  %1349 = vmatprep.subr.bf16.mxu0 0
  %1350 = vmatpush1.bf16.msra.mxu0 0
  %1351 = vmatprep.subr.bf16.mxu0 0
  %1352 = vmatpush1.bf16.msra.mxu0 0
  %1353 = vmatprep.subr.bf16.mxu0 0
  %1354 = vmatpush1.bf16.msra.mxu0 0
  %1355 = vmatprep.subr.bf16.mxu0 0
  %1356 = vmatpush1.bf16.msra.mxu0 0
  %1357 = vmatprep.subr.bf16.mxu0 0
  %1358 = vmatpush1.bf16.msra.mxu0 0
  %1359 = vmatprep.subr.bf16.mxu0 0
  %1360 = vmatpush1.bf16.msra.mxu0 0
  %1361 = vmatprep.subr.bf16.mxu0 0
  %1362 = vmatpush1.bf16.msra.mxu0 0
  %1363 = vmatprep.subr.bf16.mxu0 0
  %1364 = vmatpush1.bf16.msra.mxu0 0
  %1365 = vmatprep.subr.bf16.mxu0 0
  %1366 = vmatpush1.bf16.msra.mxu0 0
  %1367 = vmatprep.subr.bf16.mxu0 0
  %1368 = vmatpush1.bf16.msra.mxu0 0
  %1369 = vmatprep.subr.bf16.mxu0 0
  %1370 = vmatpush1.bf16.msra.mxu0 0
  %1371 = vmatprep.subr.bf16.mxu0 0
  %1372 = vmatpush1.bf16.msra.mxu0 0
  %1373 = vmatprep.subr.bf16.mxu0 0
  %1374 = vmatpush1.bf16.msra.mxu0 0
  %1375 = vmatprep.mubr.bf16.mxu0 0
  %1376 = vmatmul.mubr.bf16.gmra.mrb[0].mxu0 %v1311
  %v1377 = vpop.f32.mrb[0].mxu0
  %v1378 = vadd.f32 0.0, %v1377
  %v1379 = vpop.f32.mrb[0].mxu0
  %v1380 = vpop.f32.mrb[0].mxu0
  %v1381 = vadd.f32 0.0, %v1380
  %v1382 = vpop.f32.mrb[0].mxu0
  %1383 = vmatprep.mubr.bf16.mxu0 0
  %1384 = vmatmul.mubr.bf16.gmra.mrb[0].mxu0 %v1314
  %v1385 = vpop.f32.mrb[0].mxu0
  %v1386 = vadd.f32 0.0, %v1385
  %v1387 = vpop.f32.mrb[0].mxu0
  %v1388 = vpop.f32.mrb[0].mxu0
  %v1389 = vadd.f32 0.0, %v1388
  %v1390 = vpop.f32.mrb[0].mxu0
  %1391 = vmatprep.mubr.bf16.mxu0 0
  %1392 = vmatmul.mubr.bf16.gmra.mrb[0].mxu0 %v1317
  %v1393 = vpop.f32.mrb[0].mxu0
  %v1394 = vadd.f32 0.0, %v1393
  %v1395 = vpop.f32.mrb[0].mxu0
  %v1396 = vpop.f32.mrb[0].mxu0
  %v1397 = vadd.f32 0.0, %v1396
  %v1398 = vpop.f32.mrb[0].mxu0
  %1399 = vmatprep.mubr.bf16.mxu0 0
  %1400 = vmatmul.mubr.bf16.gmra.mrb[0].mxu0 %v1320
  %v1401 = vpop.f32.mrb[0].mxu0
  %v1402 = vadd.f32 0.0, %v1401
  %v1403 = vpop.f32.mrb[0].mxu0
  %v1404 = vpop.f32.mrb[0].mxu0
  %v1405 = vadd.f32 0.0, %v1404
  %v1406 = vpop.f32.mrb[0].mxu0
  %1407 = vmatprep.mubr.bf16.mxu0 0
  %1408 = vmatmul.mubr.bf16.gmra.mrb[0].mxu0 %v1323
  %v1409 = vpop.f32.mrb[0].mxu0
  %v1410 = vadd.f32 0.0, %v1409
  %v1411 = vpop.f32.mrb[0].mxu0
  %v1412 = vpop.f32.mrb[0].mxu0
  %v1413 = vadd.f32 0.0, %v1412
  %v1414 = vpop.f32.mrb[0].mxu0
  %1415 = vmatprep.mubr.bf16.mxu0 0
  %1416 = vmatmul.mubr.bf16.gmra.mrb[0].mxu0 %v1326
  %v1417 = vpop.f32.mrb[0].mxu0
  %v1418 = vadd.f32 0.0, %v1417
  %v1419 = vpop.f32.mrb[0].mxu0
  %v1420 = vpop.f32.mrb[0].mxu0
  %v1421 = vadd.f32 0.0, %v1420
  %v1422 = vpop.f32.mrb[0].mxu0
  %1423 = vmatprep.mubr.bf16.mxu0 0
  %1424 = vmatmul.mubr.bf16.gmra.mrb[0].mxu0 %v1329
  %v1425 = vpop.f32.mrb[0].mxu0
  %v1426 = vadd.f32 0.0, %v1425
  %v1427 = vpop.f32.mrb[0].mxu0
  %v1428 = vpop.f32.mrb[0].mxu0
  %v1429 = vadd.f32 0.0, %v1428
  %v1430 = vpop.f32.mrb[0].mxu0
  %1431 = vmatprep.mubr.bf16.mxu0 0
  %1432 = vmatmul.mubr.bf16.gmra.mrb[0].mxu0 %v1332
  %v1433 = vpop.f32.mrb[0].mxu0
  %v1434 = vadd.f32 0.0, %v1433
  %v1435 = vpop.f32.mrb[0].mxu0
  %v1436 = vpop.f32.mrb[0].mxu0
  %v1437 = vadd.f32 0.0, %v1436
  %v1438 = vpop.f32.mrb[0].mxu0
  %1439 = vmatprep.mubr.bf16.mxu0 0
  %1440 = vmatmul.mubr.bf16.gmra.mrb[0].mxu0 %v1335
  %v1441 = vpop.f32.mrb[0].mxu0
  %v1442 = vadd.f32 0.0, %v1441
  %v1443 = vpop.f32.mrb[0].mxu0
  %v1444 = vpop.f32.mrb[0].mxu0
  %v1445 = vadd.f32 0.0, %v1444
  %v1446 = vpop.f32.mrb[0].mxu0
  %1447 = vmatprep.mubr.bf16.mxu0 0
  %1448 = vmatmul.mubr.bf16.gmra.mrb[0].mxu0 %v1338
  %v1449 = vpop.f32.mrb[0].mxu0
  %v1450 = vadd.f32 0.0, %v1449
  %v1451 = vpop.f32.mrb[0].mxu0
  %v1452 = vpop.f32.mrb[0].mxu0
  %v1453 = vadd.f32 0.0, %v1452
  %v1454 = vpop.f32.mrb[0].mxu0
  %1455 = vmatprep.mubr.bf16.mxu0 0
  %1456 = vmatmul.mubr.bf16.gmra.mrb[0].mxu0 %v1341
  %v1457 = vpop.f32.mrb[0].mxu0
  %v1458 = vadd.f32 0.0, %v1457
  %v1459 = vpop.f32.mrb[0].mxu0
  %v1460 = vpop.f32.mrb[0].mxu0
  %v1461 = vpop.f32.mrb[0].mxu0
  %1462 = vdwg.mxu0
  %vm1463 = vcmask 72704
  %1464 = vst.msk [vmem:[%s6] sm:$0xff] %vm1463, %v1378
  %1465 = vst.msk [vmem:[%s6 + $0x8] sm:$0xff] %vm1463, %v1381
  %1466 = vst.msk [vmem:[%s6 + $0x10] sm:$0xff] %vm1463, %v1386
  %1467 = vst.msk [vmem:[%s6 + $0x18] sm:$0xff] %vm1463, %v1389
  %1468 = vst.msk [vmem:[%s6 + $0x20] sm:$0xff] %vm1463, %v1394
  %1469 = vst.msk [vmem:[%s6 + $0x28] sm:$0xff] %vm1463, %v1397
  %1470 = vst.msk [vmem:[%s6 + $0x30] sm:$0xff] %vm1463, %v1402
  %1471 = vst.msk [vmem:[%s6 + $0x38] sm:$0xff] %vm1463, %v1405
  %1472 = vst.msk [vmem:[%s6 + $0x40] sm:$0xff] %vm1463, %v1410
  %1473 = vst.msk [vmem:[%s6 + $0x48] sm:$0xff] %vm1463, %v1413
  %1474 = vst.msk [vmem:[%s6 + $0x50] sm:$0xff] %vm1463, %v1418
  %1475 = vst.msk [vmem:[%s6 + $0x58] sm:$0xff] %vm1463, %v1421
  %1476 = vst.msk [vmem:[%s6 + $0x60] sm:$0xff] %vm1463, %v1426
  %1477 = vst.msk [vmem:[%s6 + $0x68] sm:$0xff] %vm1463, %v1429
  %1478 = vst.msk [vmem:[%s6 + $0x70] sm:$0xff] %vm1463, %v1434
  %1479 = vst.msk [vmem:[%s6 + $0x78] sm:$0xff] %vm1463, %v1437
  %1480 = vst.msk [vmem:[%s6 + $0x80] sm:$0xff] %vm1463, %v1442
  %1481 = vst.msk [vmem:[%s6 + $0x88] sm:$0xff] %vm1463, %v1445
  %1482 = vst.msk [vmem:[%s6 + $0x90] sm:$0xff] %vm1463, %v1450
  %1483 = vst.msk [vmem:[%s6 + $0x98] sm:$0xff] %vm1463, %v1453
  %vm1484 = vcmask 66560
  %1485 = vst.msk [vmem:[%s6 + $0xa0] sm:$0x3] %vm1484, %v1458
  // Predicated region
  $region26: #{vae_forward.5} parent=0 // pred_check
    _
  $region27: #{vae_forward.5} parent=0 // pred_check_branch
    %1487 = sbr.rel (0) target = $region29
  $region28: #{vae_forward.5} parent=0 // pred_region
    _
  $region29: #{vae_forward.5} parent=0 // pred_fallthru
    _
  // Predicated region
  $region30: #{vae_forward.5} parent=0 // pred_check
    _
  $region31: #{vae_forward.5} parent=0 // pred_check_branch
    %1489 = sbr.rel (0) target = $region33
  $region32: #{vae_forward.5} parent=0 // pred_region
    _
  $region33: #{vae_forward.5} parent=0 // pred_fallthru
    _

</llo_original>
